<compile_context>
chip_gen: v6e
topology: v6e:2x2x1
jax: 0.10.0
libtpu: 0.0.40
codegen_flags: <defaults>
</compile_context>

<pallas_src>
import jax
import jax.numpy as jnp
from jax.experimental import pallas as pl
from jax.experimental.pallas import tpu as pltpu

# ----------------------------------------------------------------------------
# Small-shape config (consistent with the module's forward)
# ----------------------------------------------------------------------------
BATCH = 2
IN_CH = 3
IMG = 16                                        # input_image_size = (3, 16, 16)
PATCH = (8, 8)                                  # patch_size == patch_stride
GRID_HW = (IMG // PATCH[0], IMG // PATCH[1])    # (2, 2)
NUM_PATCHES = GRID_HW[0] * GRID_HW[1]           # 4
SEQ = NUM_PATCHES + 1                           # 5 (class token + patches)
SEQ_PAD = 8                                     # padded to a full sublane tile
PATCH_FLAT = IN_CH * PATCH[0] * PATCH[1]        # 192
PATCH_EMBED_DIM = 64                            # patch_embed_dim
EMBED_DIM = 32                                  # embed_dim (head output)
NUM_HEADS = 4
HEAD_DIM = PATCH_EMBED_DIM // NUM_HEADS         # 16
NUM_LAYERS = 2
MLP_DIM = 4 * PATCH_EMBED_DIM                   # 256
LN_EPS = 1e-5
DTYPE = jnp.float32


# ----------------------------------------------------------------------------
# Fused Pallas kernel: whole ViT forward for ONE batch element per program
# ----------------------------------------------------------------------------
def _vit_fused_kernel(patches_ref, conv_w_ref, tok_base_ref, ln_pp_ref,
                      w_qkv_ref, b_qkv_ref, w_out_ref, vecs_ref,
                      w_fc1_ref, b_fc1_ref, w_fc2_ref, head_w_ref,
                      out_ref):
    D = PATCH_EMBED_DIM

    def _ln(x, g, b):
        m = jnp.mean(x, axis=-1, keepdims=True)
        v = jnp.mean((x - m) ** 2, axis=-1, keepdims=True)
        return (x - m) * jax.lax.rsqrt(v + LN_EPS) * g + b

    # ---- patch embedding + class token + positional embedding ----
    # patches_ref rows: 0 = zeros (class slot), 1..NUM_PATCHES = flattened
    # patches, NUM_PATCHES+1..SEQ_PAD-1 = zeros (pad). tok_base rows: 0 =
    # cls+pos[0], 1..NUM_PATCHES = pos[1:], rest = 0.
    x = jnp.dot(patches_ref[...], conv_w_ref[...],
                preferred_element_type=jnp.float32) + tok_base_ref[...]

    # patchdropout_pre: Identity (p = 0.0)
    # ---- layernorm_pre ----
    ln_pp = ln_pp_ref[...]                              # [4, D]
    x = _ln(x, ln_pp[0:1, :], ln_pp[1:2, :])

    # additive key-padding mask, hoisted out of the layer loop
    kmask = jnp.where(
        jax.lax.broadcasted_iota(jnp.int32, (SEQ_PAD, SEQ_PAD), 1) < SEQ,
        jnp.float32(0.0), jnp.float32(-1e30))

    # ---- transformer blocks (pre-LN residual attention blocks) ----
    for layer in range(NUM_LAYERS):
        vecs = vecs_ref[layer]                          # [8, D]
        ln1_g, ln1_b = vecs[0:1, :], vecs[1:2, :]
        ln2_g, ln2_b = vecs[2:3, :], vecs[3:4, :]
        b_out, b_fc2 = vecs[4:5, :], vecs[5:6, :]
        b_qkv = b_qkv_ref[layer]                        # [1, 3D]
        b_fc1 = b_fc1_ref[layer]                        # [1, MLP_DIM]

        # --- attention branch ---
        h = _ln(x, ln1_g, ln1_b)
        qkv = jnp.dot(h, w_qkv_ref[layer],
                      preferred_element_type=jnp.float32) + b_qkv   # [S_PAD, 3D]
        heads = []
        for hh in range(NUM_HEADS):
            c = hh * HEAD_DIM
            q = qkv[:, c:c + HEAD_DIM]                  # scale pre-folded into w/b_qkv
            k = qkv[:, D + c:D + c + HEAD_DIM]
            v = qkv[:, 2 * D + c:2 * D + c + HEAD_DIM]
            s = jax.lax.dot_general(q, k, (((1,), (1,)), ((), ())),
                                    preferred_element_type=jnp.float32)  # [S_PAD, S_PAD]
            s = s + kmask
            s = s - jnp.max(s, axis=-1, keepdims=True)
            p = jnp.exp(s)
            p = p / jnp.sum(p, axis=-1, keepdims=True)
            heads.append(jnp.dot(p, v, preferred_element_type=jnp.float32))
        attn = jnp.concatenate(heads, axis=1)           # [S_PAD, D] (value, no scratch)
        x = x + jnp.dot(attn, w_out_ref[layer],
                        preferred_element_type=jnp.float32) + b_out

        # --- MLP branch ---
        h2 = _ln(x, ln2_g, ln2_b)
        # TODO(synk): PyTorch nn.GELU defaults to exact erf; tanh approximation used here.
        m = jax.nn.gelu(jnp.dot(h2, w_fc1_ref[layer],
                                preferred_element_type=jnp.float32) + b_fc1,
                        approximate=True)
        x = x + jnp.dot(m, w_fc2_ref[layer],
                        preferred_element_type=jnp.float32) + b_fc2

    # ---- layernorm_post + head projection of the class token (row 0) ----
    x = _ln(x, ln_pp[2:3, :], ln_pp[3:4, :])
    pooled = jnp.dot(x[0:1, :], head_w_ref[...],
                     preferred_element_type=jnp.float32)            # [1, EMBED_DIM]
    out_ref[...] = pooled.reshape(out_ref.shape).astype(out_ref.dtype)


# ----------------------------------------------------------------------------
# Parameter construction (deterministic, synthetic) with packing / pre-folding
# ----------------------------------------------------------------------------
def init_params(key):
    D = PATCH_EMBED_DIM
    scale = D ** (-0.5)
    attn_scale = HEAD_DIM ** (-0.5)
    ks = iter(jax.random.split(key, 4 + 8 * NUM_LAYERS))

    # patch conv: PyTorch weight [D, C, ph, pw] (no bias); stored as [C*ph*pw, D]
    conv_w = jax.random.normal(next(ks), (D, IN_CH, PATCH[0], PATCH[1]), DTYPE) * 0.02
    conv_w_mat = conv_w.reshape(D, -1).T                             # [192, D]

    class_embedding = scale * jax.random.normal(next(ks), (D,), DTYPE)
    positional_embedding = scale * jax.random.normal(next(ks), (SEQ, D), DTYPE)
    # token_base: row 0 = cls + pos[0], rows 1..P = pos[1:], pad rows = 0
    token_base = jnp.zeros((SEQ_PAD, D), DTYPE)
    token_base = token_base.at[0].set(class_embedding + positional_embedding[0])
    token_base = token_base.at[1:SEQ].set(positional_embedding[1:])

    ln_pre_post = jnp.stack([jnp.ones((D,), DTYPE), jnp.zeros((D,), DTYPE),
                             jnp.ones((D,), DTYPE), jnp.zeros((D,), DTYPE)])  # [4, D]

    head_weight = scale * jax.random.normal(next(ks), (D, EMBED_DIM), DTYPE)

    w_qkv_l, b_qkv_l, w_out_l, vecs_l, w_fc1_l, b_fc1_l, w_fc2_l = ([] for _ in range(7))
    for _ in range(NUM_LAYERS):
        w_qkv = jax.random.normal(next(ks), (D, 3 * D), DTYPE) * 0.02
        b_qkv = jax.random.normal(next(ks), (3 * D,), DTYPE) * 0.02
        # fold 1/sqrt(head_dim) into the q block (one-time parameter transform)
        w_qkv = w_qkv.at[:, :D].multiply(attn_scale)
        b_qkv = b_qkv.at[:D].multiply(attn_scale)
        w_out = jax.random.normal(next(ks), (D, D), DTYPE) * 0.02
        b_out = jax.random.normal(next(ks), (D,), DTYPE) * 0.02
        w_fc1 = jax.random.normal(next(ks), (D, MLP_DIM), DTYPE) * 0.02
        b_fc1 = jax.random.normal(next(ks), (MLP_DIM,), DTYPE) * 0.02
        w_fc2 = jax.random.normal(next(ks), (MLP_DIM, D), DTYPE) * 0.02
        b_fc2 = jax.random.normal(next(ks), (D,), DTYPE) * 0.02
        vecs = jnp.stack([jnp.ones((D,), DTYPE), jnp.zeros((D,), DTYPE),   # ln1 g/b
                          jnp.ones((D,), DTYPE), jnp.zeros((D,), DTYPE),   # ln2 g/b
                          b_out, b_fc2,
                          jnp.zeros((D,), DTYPE), jnp.zeros((D,), DTYPE)]) # [8, D]
        w_qkv_l.append(w_qkv)
        b_qkv_l.append(b_qkv.reshape(1, 3 * D))
        w_out_l.append(w_out)
        vecs_l.append(vecs)
        w_fc1_l.append(w_fc1)
        b_fc1_l.append(b_fc1.reshape(1, MLP_DIM))
        w_fc2_l.append(w_fc2)

    return {
        "conv_w_mat": conv_w_mat,
        "token_base": token_base,
        "ln_pre_post": ln_pre_post,
        "head_weight": head_weight,
        "w_qkv_all": jnp.stack(w_qkv_l),        # [L, D, 3D]
        "b_qkv_all": jnp.stack(b_qkv_l),        # [L, 1, 3D]
        "w_out_all": jnp.stack(w_out_l),        # [L, D, D]
        "vecs_all": jnp.stack(vecs_l),          # [L, 8, D]
        "w_fc1_all": jnp.stack(w_fc1_l),        # [L, D, MLP_DIM]
        "b_fc1_all": jnp.stack(b_fc1_l),        # [L, 1, MLP_DIM]
        "w_fc2_all": jnp.stack(w_fc2_l),        # [L, MLP_DIM, D]
    }


# ----------------------------------------------------------------------------
# Forward pass: one pallas_call, grid over batch (parallel across TCs on v7x)
# ----------------------------------------------------------------------------
@jax.jit
def vision_transformer_forward(x_nchw, params):
    """x_nchw: [B, 3, H, W] -> (pooled [B, EMBED_DIM], attn_weights=None)."""
    B, C, H, W = x_nchw.shape
    ph, pw = PATCH
    Hp, Wp = H // ph, W // pw
    D = PATCH_EMBED_DIM
    L = NUM_LAYERS

    # Patch extraction [B,C,H,W] -> [B, P, C*ph*pw] (per-patch flatten order
    # (C, ph, pw), matching the conv-weight flattening), padded per batch to
    # SEQ_PAD rows: row 0 = class-token slot (zeros), last 3 rows = pad (zeros).
    patches = x_nchw.reshape(B, C, Hp, ph, Wp, pw)
    patches = patches.transpose(0, 2, 4, 1, 3, 5).reshape(B, Hp * Wp, C * ph * pw)
    patches = jnp.pad(patches, ((0, 0), (1, SEQ_PAD - SEQ), (0, 0)))
    patches = patches.reshape(B * SEQ_PAD, PATCH_FLAT)

    inputs = [
        patches,                      # 0  [B*SEQ_PAD, 192]   (batch-sliced)
        params["conv_w_mat"],         # 1  [192, D]
        params["token_base"],         # 2  [SEQ_PAD, D]
        params["ln_pre_post"],        # 3  [4, D]
        params["w_qkv_all"],          # 4  [L, D, 3D]
        params["b_qkv_all"],          # 5  [L, 1, 3D]
        params["w_out_all"],          # 6  [L, D, D]
        params["vecs_all"],           # 7  [L, 8, D]
        params["w_fc1_all"],          # 8  [L, D, MLP_DIM]
        params["b_fc1_all"],          # 9  [L, 1, MLP_DIM]
        params["w_fc2_all"],          # 10 [L, MLP_DIM, D]
        params["head_weight"],        # 11 [D, EMBED_DIM]
    ]

    grid_spec = pltpu.PrefetchScalarGridSpec(
        num_scalar_prefetch=0,
        grid=(B,),
        in_specs=[
            pl.BlockSpec((SEQ_PAD, PATCH_FLAT), lambda b: (b, 0)),
            pl.BlockSpec((PATCH_FLAT, D), lambda b: (0, 0)),
            pl.BlockSpec((SEQ_PAD, D), lambda b: (0, 0)),
            pl.BlockSpec((4, D), lambda b: (0, 0)),
            pl.BlockSpec((L, D, 3 * D), lambda b: (0, 0, 0)),
            pl.BlockSpec((L, 1, 3 * D), lambda b: (0, 0, 0)),
            pl.BlockSpec((L, D, D), lambda b: (0, 0, 0)),
            pl.BlockSpec((L, 8, D), lambda b: (0, 0, 0)),
            pl.BlockSpec((L, D, MLP_DIM), lambda b: (0, 0, 0)),
            pl.BlockSpec((L, 1, MLP_DIM), lambda b: (0, 0, 0)),
            pl.BlockSpec((L, MLP_DIM, D), lambda b: (0, 0, 0)),
            pl.BlockSpec((D, EMBED_DIM), lambda b: (0, 0)),
        ],
        out_specs=pl.BlockSpec((1, 1, EMBED_DIM), lambda b: (b, 0, 0)),
    )

    pooled = pl.pallas_call(
        _vit_fused_kernel,
        out_shape=jax.ShapeDtypeStruct((B, 1, EMBED_DIM), DTYPE),
        grid_spec=grid_spec,
        compiler_params=pltpu.CompilerParams(
            dimension_semantics=("parallel",),
            allow_input_fusion=[True] + [False] * (len(inputs) - 1),
        ),
    )(*inputs)

    # return_weights=False -> no attention weights returned
    return pooled.reshape(B, EMBED_DIM), None


# ----------------------------------------------------------------------------
# Main
# ----------------------------------------------------------------------------
if __name__ == "__main__":
    key = jax.random.PRNGKey(0)
    k_param, k_x = jax.random.split(key)
    params = init_params(k_param)
    x = jax.random.normal(k_x, (BATCH, IN_CH, IMG, IMG), DTYPE)   # NCHW, like PyTorch
    pooled, w = vision_transformer_forward(x, params)
    pooled = jax.block_until_ready(pooled)
    assert pooled.shape == (BATCH, EMBED_DIM), pooled.shape
    assert bool(jnp.all(jnp.isfinite(pooled)))
    print("KERNEL_OK")
</pallas_src>

<mosaic_0001>
module attributes {stable_mosaic.version = 11 : i64} {
  func.func @_vit_fused_kernel(%arg0: i32, %arg1: memref<8x192xf32, #tpu.memory_space<vmem>>, %arg2: memref<192x64xf32, #tpu.memory_space<vmem>>, %arg3: memref<8x64xf32, #tpu.memory_space<vmem>>, %arg4: memref<4x64xf32, #tpu.memory_space<vmem>>, %arg5: memref<2x64x192xf32, #tpu.memory_space<vmem>>, %arg6: memref<2x1x192xf32, #tpu.memory_space<vmem>>, %arg7: memref<2x64x64xf32, #tpu.memory_space<vmem>>, %arg8: memref<2x8x64xf32, #tpu.memory_space<vmem>>, %arg9: memref<2x64x256xf32, #tpu.memory_space<vmem>>, %arg10: memref<2x1x256xf32, #tpu.memory_space<vmem>>, %arg11: memref<2x256x64xf32, #tpu.memory_space<vmem>>, %arg12: memref<64x32xf32, #tpu.memory_space<vmem>>, %arg13: memref<1x1x32xf32, #tpu.memory_space<vmem>>) attributes {dimension_semantics = [#tpu.dimension_semantics<parallel>], iteration_bounds = array<i64: 2>, scalar_prefetch = 0 : i64, scratch_operands = 0 : i64, tpu.core_type = #tpu.core_type<tc>, window_params = [{transform_indices = @transform_0, window_bounds = array<i64: 8, 192>}, {pipeline_mode = #tpu.pipeline_mode<synchronous>, transform_indices = @transform_1, window_bounds = array<i64: 192, 64>}, {pipeline_mode = #tpu.pipeline_mode<synchronous>, transform_indices = @transform_2, window_bounds = array<i64: 8, 64>}, {pipeline_mode = #tpu.pipeline_mode<synchronous>, transform_indices = @transform_3, window_bounds = array<i64: 4, 64>}, {pipeline_mode = #tpu.pipeline_mode<synchronous>, transform_indices = @transform_4, window_bounds = array<i64: 2, 64, 192>}, {pipeline_mode = #tpu.pipeline_mode<synchronous>, transform_indices = @transform_5, window_bounds = array<i64: 2, 1, 192>}, {pipeline_mode = #tpu.pipeline_mode<synchronous>, transform_indices = @transform_6, window_bounds = array<i64: 2, 64, 64>}, {pipeline_mode = #tpu.pipeline_mode<synchronous>, transform_indices = @transform_7, window_bounds = array<i64: 2, 8, 64>}, {pipeline_mode = #tpu.pipeline_mode<synchronous>, transform_indices = @transform_8, window_bounds = array<i64: 2, 64, 256>}, {pipeline_mode = #tpu.pipeline_mode<synchronous>, transform_indices = @transform_9, window_bounds = array<i64: 2, 1, 256>}, {pipeline_mode = #tpu.pipeline_mode<synchronous>, transform_indices = @transform_10, window_bounds = array<i64: 2, 256, 64>}, {pipeline_mode = #tpu.pipeline_mode<synchronous>, transform_indices = @transform_11, window_bounds = array<i64: 64, 32>}, {transform_indices = @transform_12, window_bounds = array<i64: 1, 1, 32>}]} {
    %c0 = arith.constant 0 : index
    %c0_0 = arith.constant 0 : index
    %0 = vector.load %arg1[%c0, %c0_0] : memref<8x192xf32, #tpu.memory_space<vmem>>, vector<8x192xf32>
    %c0_1 = arith.constant 0 : index
    %c0_2 = arith.constant 0 : index
    %1 = vector.load %arg2[%c0_1, %c0_2] : memref<192x64xf32, #tpu.memory_space<vmem>>, vector<192x64xf32>
    %cst = arith.constant dense<0.000000e+00> : vector<8x64xf32>
    %2 = tpu.matmul %0, %1, %cst {dimension_numbers = #tpu.dot_dimension_numbers<[1], [0], [0], [1], [0, 0, 1, 1], [], []>} : vector<8x192xf32>, vector<192x64xf32>, vector<8x64xf32> -> vector<8x64xf32>
    %c0_3 = arith.constant 0 : index
    %c0_4 = arith.constant 0 : index
    %3 = vector.load %arg3[%c0_3, %c0_4] : memref<8x64xf32, #tpu.memory_space<vmem>>, vector<8x64xf32>
    %4 = arith.addf %2, %3 : vector<8x64xf32>
    %c0_5 = arith.constant 0 : index
    %c0_6 = arith.constant 0 : index
    %5 = vector.load %arg4[%c0_5, %c0_6] : memref<4x64xf32, #tpu.memory_space<vmem>>, vector<4x64xf32>
    %6 = vector.extract_strided_slice %5 {offsets = [0, 0], sizes = [1, 64], strides = [1, 1]} : vector<4x64xf32> to vector<1x64xf32>
    %7 = vector.extract_strided_slice %5 {offsets = [1, 0], sizes = [1, 64], strides = [1, 1]} : vector<4x64xf32> to vector<1x64xf32>
    %cst_7 = arith.constant dense<0.000000e+00> : vector<8xf32>
    %8 = vector.multi_reduction <add>, %4, %cst_7 [1] : vector<8x64xf32> to vector<8xf32>
    %9 = vector.shape_cast %8 : vector<8xf32> to vector<8x1xf32>
    %cst_8 = arith.constant 6.400000e+01 : f32
    %10 = vector.broadcast %cst_8 : f32 to vector<8x1xf32>
    %11 = arith.divf %9, %10 : vector<8x1xf32>
    %12 = vector.broadcast %11 : vector<8x1xf32> to vector<8x64xf32>
    %13 = arith.subf %4, %12 : vector<8x64xf32>
    %14 = arith.mulf %13, %13 : vector<8x64xf32>
    %cst_9 = arith.constant dense<0.000000e+00> : vector<8xf32>
    %15 = vector.multi_reduction <add>, %14, %cst_9 [1] : vector<8x64xf32> to vector<8xf32>
    %16 = vector.shape_cast %15 : vector<8xf32> to vector<8x1xf32>
    %cst_10 = arith.constant 6.400000e+01 : f32
    %17 = vector.broadcast %cst_10 : f32 to vector<8x1xf32>
    %18 = arith.divf %16, %17 : vector<8x1xf32>
    %19 = vector.broadcast %11 : vector<8x1xf32> to vector<8x64xf32>
    %20 = arith.subf %4, %19 : vector<8x64xf32>
    %cst_11 = arith.constant 9.99999974E-6 : f32
    %21 = vector.broadcast %cst_11 : f32 to vector<8x1xf32>
    %22 = arith.addf %18, %21 : vector<8x1xf32>
    %23 = math.rsqrt %22 : vector<8x1xf32>
    %24 = vector.broadcast %23 : vector<8x1xf32> to vector<8x64xf32>
    %25 = arith.mulf %20, %24 : vector<8x64xf32>
    %26 = vector.broadcast %6 : vector<1x64xf32> to vector<8x64xf32>
    %27 = arith.mulf %25, %26 : vector<8x64xf32>
    %28 = vector.broadcast %7 : vector<1x64xf32> to vector<8x64xf32>
    %29 = arith.addf %27, %28 : vector<8x64xf32>
    %30 = tpu.iota {dimensions = array<i32: 1>} : vector<8x8xi32>
    %c5_i32 = arith.constant 5 : i32
    %31 = vector.broadcast %c5_i32 : i32 to vector<8x8xi32>
    %32 = arith.cmpi slt, %30, %31 : vector<8x8xi32>
    %cst_12 = arith.constant 0.000000e+00 : f32
    %cst_13 = arith.constant -1.000000e+30 : f32
    %33 = vector.broadcast %cst_12 : f32 to vector<8x8xf32>
    %34 = vector.broadcast %cst_13 : f32 to vector<8x8xf32>
    %35 = arith.select %32, %33, %34 : vector<8x8xi1>, vector<8x8xf32>
    %c0_14 = arith.constant 0 : index
    %c0_15 = arith.constant 0 : index
    %c0_16 = arith.constant 0 : index
    %36 = vector.load %arg8[%c0_14, %c0_15, %c0_16] : memref<2x8x64xf32, #tpu.memory_space<vmem>>, vector<1x8x64xf32>
    %37 = vector.shape_cast %36 : vector<1x8x64xf32> to vector<8x64xf32>
    %38 = vector.extract_strided_slice %37 {offsets = [0, 0], sizes = [1, 64], strides = [1, 1]} : vector<8x64xf32> to vector<1x64xf32>
    %39 = vector.extract_strided_slice %37 {offsets = [1, 0], sizes = [1, 64], strides = [1, 1]} : vector<8x64xf32> to vector<1x64xf32>
    %40 = vector.extract_strided_slice %37 {offsets = [2, 0], sizes = [1, 64], strides = [1, 1]} : vector<8x64xf32> to vector<1x64xf32>
    %41 = vector.extract_strided_slice %37 {offsets = [3, 0], sizes = [1, 64], strides = [1, 1]} : vector<8x64xf32> to vector<1x64xf32>
    %42 = vector.extract_strided_slice %37 {offsets = [4, 0], sizes = [1, 64], strides = [1, 1]} : vector<8x64xf32> to vector<1x64xf32>
    %43 = vector.extract_strided_slice %37 {offsets = [5, 0], sizes = [1, 64], strides = [1, 1]} : vector<8x64xf32> to vector<1x64xf32>
    %c0_17 = arith.constant 0 : index
    %c0_18 = arith.constant 0 : index
    %c0_19 = arith.constant 0 : index
    %44 = vector.load %arg6[%c0_17, %c0_18, %c0_19] : memref<2x1x192xf32, #tpu.memory_space<vmem>>, vector<1x1x192xf32>
    %45 = vector.shape_cast %44 : vector<1x1x192xf32> to vector<1x192xf32>
    %c0_20 = arith.constant 0 : index
    %c0_21 = arith.constant 0 : index
    %c0_22 = arith.constant 0 : index
    %46 = vector.load %arg10[%c0_20, %c0_21, %c0_22] : memref<2x1x256xf32, #tpu.memory_space<vmem>>, vector<1x1x256xf32>
    %47 = vector.shape_cast %46 : vector<1x1x256xf32> to vector<1x256xf32>
    %cst_23 = arith.constant dense<0.000000e+00> : vector<8xf32>
    %48 = vector.multi_reduction <add>, %29, %cst_23 [1] : vector<8x64xf32> to vector<8xf32>
    %49 = vector.shape_cast %48 : vector<8xf32> to vector<8x1xf32>
    %cst_24 = arith.constant 6.400000e+01 : f32
    %50 = vector.broadcast %cst_24 : f32 to vector<8x1xf32>
    %51 = arith.divf %49, %50 : vector<8x1xf32>
    %52 = vector.broadcast %51 : vector<8x1xf32> to vector<8x64xf32>
    %53 = arith.subf %29, %52 : vector<8x64xf32>
    %54 = arith.mulf %53, %53 : vector<8x64xf32>
    %cst_25 = arith.constant dense<0.000000e+00> : vector<8xf32>
    %55 = vector.multi_reduction <add>, %54, %cst_25 [1] : vector<8x64xf32> to vector<8xf32>
    %56 = vector.shape_cast %55 : vector<8xf32> to vector<8x1xf32>
    %cst_26 = arith.constant 6.400000e+01 : f32
    %57 = vector.broadcast %cst_26 : f32 to vector<8x1xf32>
    %58 = arith.divf %56, %57 : vector<8x1xf32>
    %59 = vector.broadcast %51 : vector<8x1xf32> to vector<8x64xf32>
    %60 = arith.subf %29, %59 : vector<8x64xf32>
    %cst_27 = arith.constant 9.99999974E-6 : f32
    %61 = vector.broadcast %cst_27 : f32 to vector<8x1xf32>
    %62 = arith.addf %58, %61 : vector<8x1xf32>
    %63 = math.rsqrt %62 : vector<8x1xf32>
    %64 = vector.broadcast %63 : vector<8x1xf32> to vector<8x64xf32>
    %65 = arith.mulf %60, %64 : vector<8x64xf32>
    %66 = vector.broadcast %38 : vector<1x64xf32> to vector<8x64xf32>
    %67 = arith.mulf %65, %66 : vector<8x64xf32>
    %68 = vector.broadcast %39 : vector<1x64xf32> to vector<8x64xf32>
    %69 = arith.addf %67, %68 : vector<8x64xf32>
    %c0_28 = arith.constant 0 : index
    %c0_29 = arith.constant 0 : index
    %c0_30 = arith.constant 0 : index
    %70 = vector.load %arg5[%c0_28, %c0_29, %c0_30] : memref<2x64x192xf32, #tpu.memory_space<vmem>>, vector<1x64x192xf32>
    %71 = vector.shape_cast %70 : vector<1x64x192xf32> to vector<64x192xf32>
    %cst_31 = arith.constant dense<0.000000e+00> : vector<8x192xf32>
    %72 = tpu.matmul %69, %71, %cst_31 {dimension_numbers = #tpu.dot_dimension_numbers<[1], [0], [0], [1], [0, 0, 1, 1], [], []>} : vector<8x64xf32>, vector<64x192xf32>, vector<8x192xf32> -> vector<8x192xf32>
    %73 = vector.broadcast %45 : vector<1x192xf32> to vector<8x192xf32>
    %74 = arith.addf %72, %73 : vector<8x192xf32>
    %75 = vector.extract_strided_slice %74 {offsets = [0, 0], sizes = [8, 16], strides = [1, 1]} : vector<8x192xf32> to vector<8x16xf32>
    %76 = vector.extract_strided_slice %74 {offsets = [0, 64], sizes = [8, 16], strides = [1, 1]} : vector<8x192xf32> to vector<8x16xf32>
    %77 = vector.extract_strided_slice %74 {offsets = [0, 128], sizes = [8, 16], strides = [1, 1]} : vector<8x192xf32> to vector<8x16xf32>
    %cst_32 = arith.constant dense<0.000000e+00> : vector<8x8xf32>
    %78 = tpu.matmul %75, %76, %cst_32 {dimension_numbers = #tpu.dot_dimension_numbers<[1], [1], [0], [0], [0, 0, 1, 0], [], []>} : vector<8x16xf32>, vector<8x16xf32>, vector<8x8xf32> -> vector<8x8xf32>
    %79 = arith.addf %78, %35 : vector<8x8xf32>
    %cst_33 = arith.constant dense<0xFF800000> : vector<8xf32>
    %80 = vector.multi_reduction <maximumf>, %79, %cst_33 [1] : vector<8x8xf32> to vector<8xf32>
    %81 = vector.shape_cast %80 : vector<8xf32> to vector<8x1xf32>
    %82 = vector.broadcast %81 : vector<8x1xf32> to vector<8x8xf32>
    %83 = arith.subf %79, %82 : vector<8x8xf32>
    %84 = math.exp %83 : vector<8x8xf32>
    %cst_34 = arith.constant dense<0.000000e+00> : vector<8xf32>
    %85 = vector.multi_reduction <add>, %84, %cst_34 [1] : vector<8x8xf32> to vector<8xf32>
    %86 = vector.shape_cast %85 : vector<8xf32> to vector<8x1xf32>
    %87 = vector.broadcast %86 : vector<8x1xf32> to vector<8x8xf32>
    %88 = arith.divf %84, %87 : vector<8x8xf32>
    %cst_35 = arith.constant dense<0.000000e+00> : vector<8x16xf32>
    %89 = tpu.matmul %88, %77, %cst_35 {dimension_numbers = #tpu.dot_dimension_numbers<[1], [0], [0], [1], [0, 0, 1, 1], [], []>} : vector<8x8xf32>, vector<8x16xf32>, vector<8x16xf32> -> vector<8x16xf32>
    %90 = vector.extract_strided_slice %74 {offsets = [0, 16], sizes = [8, 16], strides = [1, 1]} : vector<8x192xf32> to vector<8x16xf32>
    %91 = vector.extract_strided_slice %74 {offsets = [0, 80], sizes = [8, 16], strides = [1, 1]} : vector<8x192xf32> to vector<8x16xf32>
    %92 = vector.extract_strided_slice %74 {offsets = [0, 144], sizes = [8, 16], strides = [1, 1]} : vector<8x192xf32> to vector<8x16xf32>
    %cst_36 = arith.constant dense<0.000000e+00> : vector<8x8xf32>
    %93 = tpu.matmul %90, %91, %cst_36 {dimension_numbers = #tpu.dot_dimension_numbers<[1], [1], [0], [0], [0, 0, 1, 0], [], []>} : vector<8x16xf32>, vector<8x16xf32>, vector<8x8xf32> -> vector<8x8xf32>
    %94 = arith.addf %93, %35 : vector<8x8xf32>
    %cst_37 = arith.constant dense<0xFF800000> : vector<8xf32>
    %95 = vector.multi_reduction <maximumf>, %94, %cst_37 [1] : vector<8x8xf32> to vector<8xf32>
    %96 = vector.shape_cast %95 : vector<8xf32> to vector<8x1xf32>
    %97 = vector.broadcast %96 : vector<8x1xf32> to vector<8x8xf32>
    %98 = arith.subf %94, %97 : vector<8x8xf32>
    %99 = math.exp %98 : vector<8x8xf32>
    %cst_38 = arith.constant dense<0.000000e+00> : vector<8xf32>
    %100 = vector.multi_reduction <add>, %99, %cst_38 [1] : vector<8x8xf32> to vector<8xf32>
    %101 = vector.shape_cast %100 : vector<8xf32> to vector<8x1xf32>
    %102 = vector.broadcast %101 : vector<8x1xf32> to vector<8x8xf32>
    %103 = arith.divf %99, %102 : vector<8x8xf32>
    %cst_39 = arith.constant dense<0.000000e+00> : vector<8x16xf32>
    %104 = tpu.matmul %103, %92, %cst_39 {dimension_numbers = #tpu.dot_dimension_numbers<[1], [0], [0], [1], [0, 0, 1, 1], [], []>} : vector<8x8xf32>, vector<8x16xf32>, vector<8x16xf32> -> vector<8x16xf32>
    %105 = vector.extract_strided_slice %74 {offsets = [0, 32], sizes = [8, 16], strides = [1, 1]} : vector<8x192xf32> to vector<8x16xf32>
    %106 = vector.extract_strided_slice %74 {offsets = [0, 96], sizes = [8, 16], strides = [1, 1]} : vector<8x192xf32> to vector<8x16xf32>
    %107 = vector.extract_strided_slice %74 {offsets = [0, 160], sizes = [8, 16], strides = [1, 1]} : vector<8x192xf32> to vector<8x16xf32>
    %cst_40 = arith.constant dense<0.000000e+00> : vector<8x8xf32>
    %108 = tpu.matmul %105, %106, %cst_40 {dimension_numbers = #tpu.dot_dimension_numbers<[1], [1], [0], [0], [0, 0, 1, 0], [], []>} : vector<8x16xf32>, vector<8x16xf32>, vector<8x8xf32> -> vector<8x8xf32>
    %109 = arith.addf %108, %35 : vector<8x8xf32>
    %cst_41 = arith.constant dense<0xFF800000> : vector<8xf32>
    %110 = vector.multi_reduction <maximumf>, %109, %cst_41 [1] : vector<8x8xf32> to vector<8xf32>
    %111 = vector.shape_cast %110 : vector<8xf32> to vector<8x1xf32>
    %112 = vector.broadcast %111 : vector<8x1xf32> to vector<8x8xf32>
    %113 = arith.subf %109, %112 : vector<8x8xf32>
    %114 = math.exp %113 : vector<8x8xf32>
    %cst_42 = arith.constant dense<0.000000e+00> : vector<8xf32>
    %115 = vector.multi_reduction <add>, %114, %cst_42 [1] : vector<8x8xf32> to vector<8xf32>
    %116 = vector.shape_cast %115 : vector<8xf32> to vector<8x1xf32>
    %117 = vector.broadcast %116 : vector<8x1xf32> to vector<8x8xf32>
    %118 = arith.divf %114, %117 : vector<8x8xf32>
    %cst_43 = arith.constant dense<0.000000e+00> : vector<8x16xf32>
    %119 = tpu.matmul %118, %107, %cst_43 {dimension_numbers = #tpu.dot_dimension_numbers<[1], [0], [0], [1], [0, 0, 1, 1], [], []>} : vector<8x8xf32>, vector<8x16xf32>, vector<8x16xf32> -> vector<8x16xf32>
    %120 = vector.extract_strided_slice %74 {offsets = [0, 48], sizes = [8, 16], strides = [1, 1]} : vector<8x192xf32> to vector<8x16xf32>
    %121 = vector.extract_strided_slice %74 {offsets = [0, 112], sizes = [8, 16], strides = [1, 1]} : vector<8x192xf32> to vector<8x16xf32>
    %122 = vector.extract_strided_slice %74 {offsets = [0, 176], sizes = [8, 16], strides = [1, 1]} : vector<8x192xf32> to vector<8x16xf32>
    %cst_44 = arith.constant dense<0.000000e+00> : vector<8x8xf32>
    %123 = tpu.matmul %120, %121, %cst_44 {dimension_numbers = #tpu.dot_dimension_numbers<[1], [1], [0], [0], [0, 0, 1, 0], [], []>} : vector<8x16xf32>, vector<8x16xf32>, vector<8x8xf32> -> vector<8x8xf32>
    %124 = arith.addf %123, %35 : vector<8x8xf32>
    %cst_45 = arith.constant dense<0xFF800000> : vector<8xf32>
    %125 = vector.multi_reduction <maximumf>, %124, %cst_45 [1] : vector<8x8xf32> to vector<8xf32>
    %126 = vector.shape_cast %125 : vector<8xf32> to vector<8x1xf32>
    %127 = vector.broadcast %126 : vector<8x1xf32> to vector<8x8xf32>
    %128 = arith.subf %124, %127 : vector<8x8xf32>
    %129 = math.exp %128 : vector<8x8xf32>
    %cst_46 = arith.constant dense<0.000000e+00> : vector<8xf32>
    %130 = vector.multi_reduction <add>, %129, %cst_46 [1] : vector<8x8xf32> to vector<8xf32>
    %131 = vector.shape_cast %130 : vector<8xf32> to vector<8x1xf32>
    %132 = vector.broadcast %131 : vector<8x1xf32> to vector<8x8xf32>
    %133 = arith.divf %129, %132 : vector<8x8xf32>
    %cst_47 = arith.constant dense<0.000000e+00> : vector<8x16xf32>
    %134 = tpu.matmul %133, %122, %cst_47 {dimension_numbers = #tpu.dot_dimension_numbers<[1], [0], [0], [1], [0, 0, 1, 1], [], []>} : vector<8x8xf32>, vector<8x16xf32>, vector<8x16xf32> -> vector<8x16xf32>
    %135 = tpu.concatenate %89, %104, %119, %134 in 1 : vector<8x16xf32>, vector<8x16xf32>, vector<8x16xf32>, vector<8x16xf32> -> vector<8x64xf32>
    %c0_48 = arith.constant 0 : index
    %c0_49 = arith.constant 0 : index
    %c0_50 = arith.constant 0 : index
    %136 = vector.load %arg7[%c0_48, %c0_49, %c0_50] : memref<2x64x64xf32, #tpu.memory_space<vmem>>, vector<1x64x64xf32>
    %137 = vector.shape_cast %136 : vector<1x64x64xf32> to vector<64x64xf32>
    %cst_51 = arith.constant dense<0.000000e+00> : vector<8x64xf32>
    %138 = tpu.matmul %135, %137, %cst_51 {dimension_numbers = #tpu.dot_dimension_numbers<[1], [0], [0], [1], [0, 0, 1, 1], [], []>} : vector<8x64xf32>, vector<64x64xf32>, vector<8x64xf32> -> vector<8x64xf32>
    %139 = arith.addf %29, %138 : vector<8x64xf32>
    %140 = vector.broadcast %42 : vector<1x64xf32> to vector<8x64xf32>
    %141 = arith.addf %139, %140 : vector<8x64xf32>
    %cst_52 = arith.constant dense<0.000000e+00> : vector<8xf32>
    %142 = vector.multi_reduction <add>, %141, %cst_52 [1] : vector<8x64xf32> to vector<8xf32>
    %143 = vector.shape_cast %142 : vector<8xf32> to vector<8x1xf32>
    %cst_53 = arith.constant 6.400000e+01 : f32
    %144 = vector.broadcast %cst_53 : f32 to vector<8x1xf32>
    %145 = arith.divf %143, %144 : vector<8x1xf32>
    %146 = vector.broadcast %145 : vector<8x1xf32> to vector<8x64xf32>
    %147 = arith.subf %141, %146 : vector<8x64xf32>
    %148 = arith.mulf %147, %147 : vector<8x64xf32>
    %cst_54 = arith.constant dense<0.000000e+00> : vector<8xf32>
    %149 = vector.multi_reduction <add>, %148, %cst_54 [1] : vector<8x64xf32> to vector<8xf32>
    %150 = vector.shape_cast %149 : vector<8xf32> to vector<8x1xf32>
    %cst_55 = arith.constant 6.400000e+01 : f32
    %151 = vector.broadcast %cst_55 : f32 to vector<8x1xf32>
    %152 = arith.divf %150, %151 : vector<8x1xf32>
    %153 = vector.broadcast %145 : vector<8x1xf32> to vector<8x64xf32>
    %154 = arith.subf %141, %153 : vector<8x64xf32>
    %cst_56 = arith.constant 9.99999974E-6 : f32
    %155 = vector.broadcast %cst_56 : f32 to vector<8x1xf32>
    %156 = arith.addf %152, %155 : vector<8x1xf32>
    %157 = math.rsqrt %156 : vector<8x1xf32>
    %158 = vector.broadcast %157 : vector<8x1xf32> to vector<8x64xf32>
    %159 = arith.mulf %154, %158 : vector<8x64xf32>
    %160 = vector.broadcast %40 : vector<1x64xf32> to vector<8x64xf32>
    %161 = arith.mulf %159, %160 : vector<8x64xf32>
    %162 = vector.broadcast %41 : vector<1x64xf32> to vector<8x64xf32>
    %163 = arith.addf %161, %162 : vector<8x64xf32>
    %c0_57 = arith.constant 0 : index
    %c0_58 = arith.constant 0 : index
    %c0_59 = arith.constant 0 : index
    %164 = vector.load %arg9[%c0_57, %c0_58, %c0_59] : memref<2x64x256xf32, #tpu.memory_space<vmem>>, vector<1x64x256xf32>
    %165 = vector.shape_cast %164 : vector<1x64x256xf32> to vector<64x256xf32>
    %cst_60 = arith.constant dense<0.000000e+00> : vector<8x256xf32>
    %166 = tpu.matmul %163, %165, %cst_60 {dimension_numbers = #tpu.dot_dimension_numbers<[1], [0], [0], [1], [0, 0, 1, 1], [], []>} : vector<8x64xf32>, vector<64x256xf32>, vector<8x256xf32> -> vector<8x256xf32>
    %167 = vector.broadcast %47 : vector<1x256xf32> to vector<8x256xf32>
    %168 = arith.addf %166, %167 : vector<8x256xf32>
    %169 = arith.mulf %168, %168 : vector<8x256xf32>
    %170 = arith.mulf %168, %169 : vector<8x256xf32>
    %cst_61 = arith.constant 4.471500e-02 : f32
    %171 = vector.broadcast %cst_61 : f32 to vector<8x256xf32>
    %172 = arith.mulf %171, %170 : vector<8x256xf32>
    %173 = arith.addf %168, %172 : vector<8x256xf32>
    %cst_62 = arith.constant 0.797884583 : f32
    %174 = vector.broadcast %cst_62 : f32 to vector<8x256xf32>
    %175 = arith.mulf %174, %173 : vector<8x256xf32>
    %176 = math.tanh %175 : vector<8x256xf32>
    %cst_63 = arith.constant 1.000000e+00 : f32
    %177 = vector.broadcast %cst_63 : f32 to vector<8x256xf32>
    %178 = arith.addf %177, %176 : vector<8x256xf32>
    %cst_64 = arith.constant 5.000000e-01 : f32
    %179 = vector.broadcast %cst_64 : f32 to vector<8x256xf32>
    %180 = arith.mulf %179, %178 : vector<8x256xf32>
    %181 = arith.mulf %168, %180 : vector<8x256xf32>
    %c0_65 = arith.constant 0 : index
    %c0_66 = arith.constant 0 : index
    %c0_67 = arith.constant 0 : index
    %182 = vector.load %arg11[%c0_65, %c0_66, %c0_67] : memref<2x256x64xf32, #tpu.memory_space<vmem>>, vector<1x256x64xf32>
    %183 = vector.shape_cast %182 : vector<1x256x64xf32> to vector<256x64xf32>
    %cst_68 = arith.constant dense<0.000000e+00> : vector<8x64xf32>
    %184 = tpu.matmul %181, %183, %cst_68 {dimension_numbers = #tpu.dot_dimension_numbers<[1], [0], [0], [1], [0, 0, 1, 1], [], []>} : vector<8x256xf32>, vector<256x64xf32>, vector<8x64xf32> -> vector<8x64xf32>
    %185 = arith.addf %141, %184 : vector<8x64xf32>
    %186 = vector.broadcast %43 : vector<1x64xf32> to vector<8x64xf32>
    %187 = arith.addf %185, %186 : vector<8x64xf32>
    %c1 = arith.constant 1 : index
    %c0_69 = arith.constant 0 : index
    %c0_70 = arith.constant 0 : index
    %188 = vector.load %arg8[%c1, %c0_69, %c0_70] : memref<2x8x64xf32, #tpu.memory_space<vmem>>, vector<1x8x64xf32>
    %189 = vector.shape_cast %188 : vector<1x8x64xf32> to vector<8x64xf32>
    %190 = vector.extract_strided_slice %189 {offsets = [0, 0], sizes = [1, 64], strides = [1, 1]} : vector<8x64xf32> to vector<1x64xf32>
    %191 = vector.extract_strided_slice %189 {offsets = [1, 0], sizes = [1, 64], strides = [1, 1]} : vector<8x64xf32> to vector<1x64xf32>
    %192 = vector.extract_strided_slice %189 {offsets = [2, 0], sizes = [1, 64], strides = [1, 1]} : vector<8x64xf32> to vector<1x64xf32>
    %193 = vector.extract_strided_slice %189 {offsets = [3, 0], sizes = [1, 64], strides = [1, 1]} : vector<8x64xf32> to vector<1x64xf32>
    %194 = vector.extract_strided_slice %189 {offsets = [4, 0], sizes = [1, 64], strides = [1, 1]} : vector<8x64xf32> to vector<1x64xf32>
    %195 = vector.extract_strided_slice %189 {offsets = [5, 0], sizes = [1, 64], strides = [1, 1]} : vector<8x64xf32> to vector<1x64xf32>
    %c1_71 = arith.constant 1 : index
    %c0_72 = arith.constant 0 : index
    %c0_73 = arith.constant 0 : index
    %196 = vector.load %arg6[%c1_71, %c0_72, %c0_73] : memref<2x1x192xf32, #tpu.memory_space<vmem>>, vector<1x1x192xf32>
    %197 = vector.shape_cast %196 : vector<1x1x192xf32> to vector<1x192xf32>
    %c1_74 = arith.constant 1 : index
    %c0_75 = arith.constant 0 : index
    %c0_76 = arith.constant 0 : index
    %198 = vector.load %arg10[%c1_74, %c0_75, %c0_76] : memref<2x1x256xf32, #tpu.memory_space<vmem>>, vector<1x1x256xf32>
    %199 = vector.shape_cast %198 : vector<1x1x256xf32> to vector<1x256xf32>
    %cst_77 = arith.constant dense<0.000000e+00> : vector<8xf32>
    %200 = vector.multi_reduction <add>, %187, %cst_77 [1] : vector<8x64xf32> to vector<8xf32>
    %201 = vector.shape_cast %200 : vector<8xf32> to vector<8x1xf32>
    %cst_78 = arith.constant 6.400000e+01 : f32
    %202 = vector.broadcast %cst_78 : f32 to vector<8x1xf32>
    %203 = arith.divf %201, %202 : vector<8x1xf32>
    %204 = vector.broadcast %203 : vector<8x1xf32> to vector<8x64xf32>
    %205 = arith.subf %187, %204 : vector<8x64xf32>
    %206 = arith.mulf %205, %205 : vector<8x64xf32>
    %cst_79 = arith.constant dense<0.000000e+00> : vector<8xf32>
    %207 = vector.multi_reduction <add>, %206, %cst_79 [1] : vector<8x64xf32> to vector<8xf32>
    %208 = vector.shape_cast %207 : vector<8xf32> to vector<8x1xf32>
    %cst_80 = arith.constant 6.400000e+01 : f32
    %209 = vector.broadcast %cst_80 : f32 to vector<8x1xf32>
    %210 = arith.divf %208, %209 : vector<8x1xf32>
    %211 = vector.broadcast %203 : vector<8x1xf32> to vector<8x64xf32>
    %212 = arith.subf %187, %211 : vector<8x64xf32>
    %cst_81 = arith.constant 9.99999974E-6 : f32
    %213 = vector.broadcast %cst_81 : f32 to vector<8x1xf32>
    %214 = arith.addf %210, %213 : vector<8x1xf32>
    %215 = math.rsqrt %214 : vector<8x1xf32>
    %216 = vector.broadcast %215 : vector<8x1xf32> to vector<8x64xf32>
    %217 = arith.mulf %212, %216 : vector<8x64xf32>
    %218 = vector.broadcast %190 : vector<1x64xf32> to vector<8x64xf32>
    %219 = arith.mulf %217, %218 : vector<8x64xf32>
    %220 = vector.broadcast %191 : vector<1x64xf32> to vector<8x64xf32>
    %221 = arith.addf %219, %220 : vector<8x64xf32>
    %c1_82 = arith.constant 1 : index
    %c0_83 = arith.constant 0 : index
    %c0_84 = arith.constant 0 : index
    %222 = vector.load %arg5[%c1_82, %c0_83, %c0_84] : memref<2x64x192xf32, #tpu.memory_space<vmem>>, vector<1x64x192xf32>
    %223 = vector.shape_cast %222 : vector<1x64x192xf32> to vector<64x192xf32>
    %cst_85 = arith.constant dense<0.000000e+00> : vector<8x192xf32>
    %224 = tpu.matmul %221, %223, %cst_85 {dimension_numbers = #tpu.dot_dimension_numbers<[1], [0], [0], [1], [0, 0, 1, 1], [], []>} : vector<8x64xf32>, vector<64x192xf32>, vector<8x192xf32> -> vector<8x192xf32>
    %225 = vector.broadcast %197 : vector<1x192xf32> to vector<8x192xf32>
    %226 = arith.addf %224, %225 : vector<8x192xf32>
    %227 = vector.extract_strided_slice %226 {offsets = [0, 0], sizes = [8, 16], strides = [1, 1]} : vector<8x192xf32> to vector<8x16xf32>
    %228 = vector.extract_strided_slice %226 {offsets = [0, 64], sizes = [8, 16], strides = [1, 1]} : vector<8x192xf32> to vector<8x16xf32>
    %229 = vector.extract_strided_slice %226 {offsets = [0, 128], sizes = [8, 16], strides = [1, 1]} : vector<8x192xf32> to vector<8x16xf32>
    %cst_86 = arith.constant dense<0.000000e+00> : vector<8x8xf32>
    %230 = tpu.matmul %227, %228, %cst_86 {dimension_numbers = #tpu.dot_dimension_numbers<[1], [1], [0], [0], [0, 0, 1, 0], [], []>} : vector<8x16xf32>, vector<8x16xf32>, vector<8x8xf32> -> vector<8x8xf32>
    %231 = arith.addf %230, %35 : vector<8x8xf32>
    %cst_87 = arith.constant dense<0xFF800000> : vector<8xf32>
    %232 = vector.multi_reduction <maximumf>, %231, %cst_87 [1] : vector<8x8xf32> to vector<8xf32>
    %233 = vector.shape_cast %232 : vector<8xf32> to vector<8x1xf32>
    %234 = vector.broadcast %233 : vector<8x1xf32> to vector<8x8xf32>
    %235 = arith.subf %231, %234 : vector<8x8xf32>
    %236 = math.exp %235 : vector<8x8xf32>
    %cst_88 = arith.constant dense<0.000000e+00> : vector<8xf32>
    %237 = vector.multi_reduction <add>, %236, %cst_88 [1] : vector<8x8xf32> to vector<8xf32>
    %238 = vector.shape_cast %237 : vector<8xf32> to vector<8x1xf32>
    %239 = vector.broadcast %238 : vector<8x1xf32> to vector<8x8xf32>
    %240 = arith.divf %236, %239 : vector<8x8xf32>
    %cst_89 = arith.constant dense<0.000000e+00> : vector<8x16xf32>
    %241 = tpu.matmul %240, %229, %cst_89 {dimension_numbers = #tpu.dot_dimension_numbers<[1], [0], [0], [1], [0, 0, 1, 1], [], []>} : vector<8x8xf32>, vector<8x16xf32>, vector<8x16xf32> -> vector<8x16xf32>
    %242 = vector.extract_strided_slice %226 {offsets = [0, 16], sizes = [8, 16], strides = [1, 1]} : vector<8x192xf32> to vector<8x16xf32>
    %243 = vector.extract_strided_slice %226 {offsets = [0, 80], sizes = [8, 16], strides = [1, 1]} : vector<8x192xf32> to vector<8x16xf32>
    %244 = vector.extract_strided_slice %226 {offsets = [0, 144], sizes = [8, 16], strides = [1, 1]} : vector<8x192xf32> to vector<8x16xf32>
    %cst_90 = arith.constant dense<0.000000e+00> : vector<8x8xf32>
    %245 = tpu.matmul %242, %243, %cst_90 {dimension_numbers = #tpu.dot_dimension_numbers<[1], [1], [0], [0], [0, 0, 1, 0], [], []>} : vector<8x16xf32>, vector<8x16xf32>, vector<8x8xf32> -> vector<8x8xf32>
    %246 = arith.addf %245, %35 : vector<8x8xf32>
    %cst_91 = arith.constant dense<0xFF800000> : vector<8xf32>
    %247 = vector.multi_reduction <maximumf>, %246, %cst_91 [1] : vector<8x8xf32> to vector<8xf32>
    %248 = vector.shape_cast %247 : vector<8xf32> to vector<8x1xf32>
    %249 = vector.broadcast %248 : vector<8x1xf32> to vector<8x8xf32>
    %250 = arith.subf %246, %249 : vector<8x8xf32>
    %251 = math.exp %250 : vector<8x8xf32>
    %cst_92 = arith.constant dense<0.000000e+00> : vector<8xf32>
    %252 = vector.multi_reduction <add>, %251, %cst_92 [1] : vector<8x8xf32> to vector<8xf32>
    %253 = vector.shape_cast %252 : vector<8xf32> to vector<8x1xf32>
    %254 = vector.broadcast %253 : vector<8x1xf32> to vector<8x8xf32>
    %255 = arith.divf %251, %254 : vector<8x8xf32>
    %cst_93 = arith.constant dense<0.000000e+00> : vector<8x16xf32>
    %256 = tpu.matmul %255, %244, %cst_93 {dimension_numbers = #tpu.dot_dimension_numbers<[1], [0], [0], [1], [0, 0, 1, 1], [], []>} : vector<8x8xf32>, vector<8x16xf32>, vector<8x16xf32> -> vector<8x16xf32>
    %257 = vector.extract_strided_slice %226 {offsets = [0, 32], sizes = [8, 16], strides = [1, 1]} : vector<8x192xf32> to vector<8x16xf32>
    %258 = vector.extract_strided_slice %226 {offsets = [0, 96], sizes = [8, 16], strides = [1, 1]} : vector<8x192xf32> to vector<8x16xf32>
    %259 = vector.extract_strided_slice %226 {offsets = [0, 160], sizes = [8, 16], strides = [1, 1]} : vector<8x192xf32> to vector<8x16xf32>
    %cst_94 = arith.constant dense<0.000000e+00> : vector<8x8xf32>
    %260 = tpu.matmul %257, %258, %cst_94 {dimension_numbers = #tpu.dot_dimension_numbers<[1], [1], [0], [0], [0, 0, 1, 0], [], []>} : vector<8x16xf32>, vector<8x16xf32>, vector<8x8xf32> -> vector<8x8xf32>
    %261 = arith.addf %260, %35 : vector<8x8xf32>
    %cst_95 = arith.constant dense<0xFF800000> : vector<8xf32>
    %262 = vector.multi_reduction <maximumf>, %261, %cst_95 [1] : vector<8x8xf32> to vector<8xf32>
    %263 = vector.shape_cast %262 : vector<8xf32> to vector<8x1xf32>
    %264 = vector.broadcast %263 : vector<8x1xf32> to vector<8x8xf32>
    %265 = arith.subf %261, %264 : vector<8x8xf32>
    %266 = math.exp %265 : vector<8x8xf32>
    %cst_96 = arith.constant dense<0.000000e+00> : vector<8xf32>
    %267 = vector.multi_reduction <add>, %266, %cst_96 [1] : vector<8x8xf32> to vector<8xf32>
    %268 = vector.shape_cast %267 : vector<8xf32> to vector<8x1xf32>
    %269 = vector.broadcast %268 : vector<8x1xf32> to vector<8x8xf32>
    %270 = arith.divf %266, %269 : vector<8x8xf32>
    %cst_97 = arith.constant dense<0.000000e+00> : vector<8x16xf32>
    %271 = tpu.matmul %270, %259, %cst_97 {dimension_numbers = #tpu.dot_dimension_numbers<[1], [0], [0], [1], [0, 0, 1, 1], [], []>} : vector<8x8xf32>, vector<8x16xf32>, vector<8x16xf32> -> vector<8x16xf32>
    %272 = vector.extract_strided_slice %226 {offsets = [0, 48], sizes = [8, 16], strides = [1, 1]} : vector<8x192xf32> to vector<8x16xf32>
    %273 = vector.extract_strided_slice %226 {offsets = [0, 112], sizes = [8, 16], strides = [1, 1]} : vector<8x192xf32> to vector<8x16xf32>
    %274 = vector.extract_strided_slice %226 {offsets = [0, 176], sizes = [8, 16], strides = [1, 1]} : vector<8x192xf32> to vector<8x16xf32>
    %cst_98 = arith.constant dense<0.000000e+00> : vector<8x8xf32>
    %275 = tpu.matmul %272, %273, %cst_98 {dimension_numbers = #tpu.dot_dimension_numbers<[1], [1], [0], [0], [0, 0, 1, 0], [], []>} : vector<8x16xf32>, vector<8x16xf32>, vector<8x8xf32> -> vector<8x8xf32>
    %276 = arith.addf %275, %35 : vector<8x8xf32>
    %cst_99 = arith.constant dense<0xFF800000> : vector<8xf32>
    %277 = vector.multi_reduction <maximumf>, %276, %cst_99 [1] : vector<8x8xf32> to vector<8xf32>
    %278 = vector.shape_cast %277 : vector<8xf32> to vector<8x1xf32>
    %279 = vector.broadcast %278 : vector<8x1xf32> to vector<8x8xf32>
    %280 = arith.subf %276, %279 : vector<8x8xf32>
    %281 = math.exp %280 : vector<8x8xf32>
    %cst_100 = arith.constant dense<0.000000e+00> : vector<8xf32>
    %282 = vector.multi_reduction <add>, %281, %cst_100 [1] : vector<8x8xf32> to vector<8xf32>
    %283 = vector.shape_cast %282 : vector<8xf32> to vector<8x1xf32>
    %284 = vector.broadcast %283 : vector<8x1xf32> to vector<8x8xf32>
    %285 = arith.divf %281, %284 : vector<8x8xf32>
    %cst_101 = arith.constant dense<0.000000e+00> : vector<8x16xf32>
    %286 = tpu.matmul %285, %274, %cst_101 {dimension_numbers = #tpu.dot_dimension_numbers<[1], [0], [0], [1], [0, 0, 1, 1], [], []>} : vector<8x8xf32>, vector<8x16xf32>, vector<8x16xf32> -> vector<8x16xf32>
    %287 = tpu.concatenate %241, %256, %271, %286 in 1 : vector<8x16xf32>, vector<8x16xf32>, vector<8x16xf32>, vector<8x16xf32> -> vector<8x64xf32>
    %c1_102 = arith.constant 1 : index
    %c0_103 = arith.constant 0 : index
    %c0_104 = arith.constant 0 : index
    %288 = vector.load %arg7[%c1_102, %c0_103, %c0_104] : memref<2x64x64xf32, #tpu.memory_space<vmem>>, vector<1x64x64xf32>
    %289 = vector.shape_cast %288 : vector<1x64x64xf32> to vector<64x64xf32>
    %cst_105 = arith.constant dense<0.000000e+00> : vector<8x64xf32>
    %290 = tpu.matmul %287, %289, %cst_105 {dimension_numbers = #tpu.dot_dimension_numbers<[1], [0], [0], [1], [0, 0, 1, 1], [], []>} : vector<8x64xf32>, vector<64x64xf32>, vector<8x64xf32> -> vector<8x64xf32>
    %291 = arith.addf %187, %290 : vector<8x64xf32>
    %292 = vector.broadcast %194 : vector<1x64xf32> to vector<8x64xf32>
    %293 = arith.addf %291, %292 : vector<8x64xf32>
    %cst_106 = arith.constant dense<0.000000e+00> : vector<8xf32>
    %294 = vector.multi_reduction <add>, %293, %cst_106 [1] : vector<8x64xf32> to vector<8xf32>
    %295 = vector.shape_cast %294 : vector<8xf32> to vector<8x1xf32>
    %cst_107 = arith.constant 6.400000e+01 : f32
    %296 = vector.broadcast %cst_107 : f32 to vector<8x1xf32>
    %297 = arith.divf %295, %296 : vector<8x1xf32>
    %298 = vector.broadcast %297 : vector<8x1xf32> to vector<8x64xf32>
    %299 = arith.subf %293, %298 : vector<8x64xf32>
    %300 = arith.mulf %299, %299 : vector<8x64xf32>
    %cst_108 = arith.constant dense<0.000000e+00> : vector<8xf32>
    %301 = vector.multi_reduction <add>, %300, %cst_108 [1] : vector<8x64xf32> to vector<8xf32>
    %302 = vector.shape_cast %301 : vector<8xf32> to vector<8x1xf32>
    %cst_109 = arith.constant 6.400000e+01 : f32
    %303 = vector.broadcast %cst_109 : f32 to vector<8x1xf32>
    %304 = arith.divf %302, %303 : vector<8x1xf32>
    %305 = vector.broadcast %297 : vector<8x1xf32> to vector<8x64xf32>
    %306 = arith.subf %293, %305 : vector<8x64xf32>
    %cst_110 = arith.constant 9.99999974E-6 : f32
    %307 = vector.broadcast %cst_110 : f32 to vector<8x1xf32>
    %308 = arith.addf %304, %307 : vector<8x1xf32>
    %309 = math.rsqrt %308 : vector<8x1xf32>
    %310 = vector.broadcast %309 : vector<8x1xf32> to vector<8x64xf32>
    %311 = arith.mulf %306, %310 : vector<8x64xf32>
    %312 = vector.broadcast %192 : vector<1x64xf32> to vector<8x64xf32>
    %313 = arith.mulf %311, %312 : vector<8x64xf32>
    %314 = vector.broadcast %193 : vector<1x64xf32> to vector<8x64xf32>
    %315 = arith.addf %313, %314 : vector<8x64xf32>
    %c1_111 = arith.constant 1 : index
    %c0_112 = arith.constant 0 : index
    %c0_113 = arith.constant 0 : index
    %316 = vector.load %arg9[%c1_111, %c0_112, %c0_113] : memref<2x64x256xf32, #tpu.memory_space<vmem>>, vector<1x64x256xf32>
    %317 = vector.shape_cast %316 : vector<1x64x256xf32> to vector<64x256xf32>
    %cst_114 = arith.constant dense<0.000000e+00> : vector<8x256xf32>
    %318 = tpu.matmul %315, %317, %cst_114 {dimension_numbers = #tpu.dot_dimension_numbers<[1], [0], [0], [1], [0, 0, 1, 1], [], []>} : vector<8x64xf32>, vector<64x256xf32>, vector<8x256xf32> -> vector<8x256xf32>
    %319 = vector.broadcast %199 : vector<1x256xf32> to vector<8x256xf32>
    %320 = arith.addf %318, %319 : vector<8x256xf32>
    %321 = arith.mulf %320, %320 : vector<8x256xf32>
    %322 = arith.mulf %320, %321 : vector<8x256xf32>
    %cst_115 = arith.constant 4.471500e-02 : f32
    %323 = vector.broadcast %cst_115 : f32 to vector<8x256xf32>
    %324 = arith.mulf %323, %322 : vector<8x256xf32>
    %325 = arith.addf %320, %324 : vector<8x256xf32>
    %cst_116 = arith.constant 0.797884583 : f32
    %326 = vector.broadcast %cst_116 : f32 to vector<8x256xf32>
    %327 = arith.mulf %326, %325 : vector<8x256xf32>
    %328 = math.tanh %327 : vector<8x256xf32>
    %cst_117 = arith.constant 1.000000e+00 : f32
    %329 = vector.broadcast %cst_117 : f32 to vector<8x256xf32>
    %330 = arith.addf %329, %328 : vector<8x256xf32>
    %cst_118 = arith.constant 5.000000e-01 : f32
    %331 = vector.broadcast %cst_118 : f32 to vector<8x256xf32>
    %332 = arith.mulf %331, %330 : vector<8x256xf32>
    %333 = arith.mulf %320, %332 : vector<8x256xf32>
    %c1_119 = arith.constant 1 : index
    %c0_120 = arith.constant 0 : index
    %c0_121 = arith.constant 0 : index
    %334 = vector.load %arg11[%c1_119, %c0_120, %c0_121] : memref<2x256x64xf32, #tpu.memory_space<vmem>>, vector<1x256x64xf32>
    %335 = vector.shape_cast %334 : vector<1x256x64xf32> to vector<256x64xf32>
    %cst_122 = arith.constant dense<0.000000e+00> : vector<8x64xf32>
    %336 = tpu.matmul %333, %335, %cst_122 {dimension_numbers = #tpu.dot_dimension_numbers<[1], [0], [0], [1], [0, 0, 1, 1], [], []>} : vector<8x256xf32>, vector<256x64xf32>, vector<8x64xf32> -> vector<8x64xf32>
    %337 = arith.addf %293, %336 : vector<8x64xf32>
    %338 = vector.broadcast %195 : vector<1x64xf32> to vector<8x64xf32>
    %339 = arith.addf %337, %338 : vector<8x64xf32>
    %340 = vector.extract_strided_slice %5 {offsets = [2, 0], sizes = [1, 64], strides = [1, 1]} : vector<4x64xf32> to vector<1x64xf32>
    %341 = vector.extract_strided_slice %5 {offsets = [3, 0], sizes = [1, 64], strides = [1, 1]} : vector<4x64xf32> to vector<1x64xf32>
    %cst_123 = arith.constant dense<0.000000e+00> : vector<8xf32>
    %342 = vector.multi_reduction <add>, %339, %cst_123 [1] : vector<8x64xf32> to vector<8xf32>
    %343 = vector.shape_cast %342 : vector<8xf32> to vector<8x1xf32>
    %cst_124 = arith.constant 6.400000e+01 : f32
    %344 = vector.broadcast %cst_124 : f32 to vector<8x1xf32>
    %345 = arith.divf %343, %344 : vector<8x1xf32>
    %346 = vector.broadcast %345 : vector<8x1xf32> to vector<8x64xf32>
    %347 = arith.subf %339, %346 : vector<8x64xf32>
    %348 = arith.mulf %347, %347 : vector<8x64xf32>
    %cst_125 = arith.constant dense<0.000000e+00> : vector<8xf32>
    %349 = vector.multi_reduction <add>, %348, %cst_125 [1] : vector<8x64xf32> to vector<8xf32>
    %350 = vector.shape_cast %349 : vector<8xf32> to vector<8x1xf32>
    %cst_126 = arith.constant 6.400000e+01 : f32
    %351 = vector.broadcast %cst_126 : f32 to vector<8x1xf32>
    %352 = arith.divf %350, %351 : vector<8x1xf32>
    %353 = vector.broadcast %345 : vector<8x1xf32> to vector<8x64xf32>
    %354 = arith.subf %339, %353 : vector<8x64xf32>
    %cst_127 = arith.constant 9.99999974E-6 : f32
    %355 = vector.broadcast %cst_127 : f32 to vector<8x1xf32>
    %356 = arith.addf %352, %355 : vector<8x1xf32>
    %357 = math.rsqrt %356 : vector<8x1xf32>
    %358 = vector.broadcast %357 : vector<8x1xf32> to vector<8x64xf32>
    %359 = arith.mulf %354, %358 : vector<8x64xf32>
    %360 = vector.broadcast %340 : vector<1x64xf32> to vector<8x64xf32>
    %361 = arith.mulf %359, %360 : vector<8x64xf32>
    %362 = vector.broadcast %341 : vector<1x64xf32> to vector<8x64xf32>
    %363 = arith.addf %361, %362 : vector<8x64xf32>
    %364 = vector.extract_strided_slice %363 {offsets = [0, 0], sizes = [1, 64], strides = [1, 1]} : vector<8x64xf32> to vector<1x64xf32>
    %c0_128 = arith.constant 0 : index
    %c0_129 = arith.constant 0 : index
    %365 = vector.load %arg12[%c0_128, %c0_129] : memref<64x32xf32, #tpu.memory_space<vmem>>, vector<64x32xf32>
    %cst_130 = arith.constant dense<0.000000e+00> : vector<1x32xf32>
    %366 = tpu.matmul %364, %365, %cst_130 {dimension_numbers = #tpu.dot_dimension_numbers<[1], [0], [0], [1], [0, 0, 1, 1], [], []>} : vector<1x64xf32>, vector<64x32xf32>, vector<1x32xf32> -> vector<1x32xf32>
    %367 = vector.shape_cast %366 : vector<1x32xf32> to vector<1x1x32xf32>
    %c0_131 = arith.constant 0 : index
    %c0_132 = arith.constant 0 : index
    %c0_133 = arith.constant 0 : index
    %368 = vector.load %arg13[%c0_131, %c0_132, %c0_133] : memref<1x1x32xf32, #tpu.memory_space<vmem>>, vector<1x1x32xf32>
    tpu.vector_store %arg13[%c0_131, %c0_132, %c0_133], %367 {strides = array<i32>} : memref<1x1x32xf32, #tpu.memory_space<vmem>>, vector<1x1x32xf32>,
    return
  }
  func.func @transform_0(%arg0: i32) -> (i32, i32) {
    %c0_i32 = arith.constant 0 : i32
    %c0_i32_0 = arith.constant 0 : i32
    return %arg0, %c0_i32 : i32, i32
  }
  func.func @transform_1(%arg0: i32) -> (i32, i32) {
    %c0_i32 = arith.constant 0 : i32
    %c0_i32_0 = arith.constant 0 : i32
    %c0_i32_1 = arith.constant 0 : i32
    return %c0_i32, %c0_i32_0 : i32, i32
  }
  func.func @transform_2(%arg0: i32) -> (i32, i32) {
    %c0_i32 = arith.constant 0 : i32
    %c0_i32_0 = arith.constant 0 : i32
    %c0_i32_1 = arith.constant 0 : i32
    return %c0_i32, %c0_i32_0 : i32, i32
  }
  func.func @transform_3(%arg0: i32) -> (i32, i32) {
    %c0_i32 = arith.constant 0 : i32
    %c0_i32_0 = arith.constant 0 : i32
    %c0_i32_1 = arith.constant 0 : i32
    return %c0_i32, %c0_i32_0 : i32, i32
  }
  func.func @transform_4(%arg0: i32) -> (i32, i32, i32) {
    %c0_i32 = arith.constant 0 : i32
    %c0_i32_0 = arith.constant 0 : i32
    %c0_i32_1 = arith.constant 0 : i32
    %c0_i32_2 = arith.constant 0 : i32
    return %c0_i32, %c0_i32_0, %c0_i32_1 : i32, i32, i32
  }
  func.func @transform_5(%arg0: i32) -> (i32, i32, i32) {
    %c0_i32 = arith.constant 0 : i32
    %c0_i32_0 = arith.constant 0 : i32
    %c0_i32_1 = arith.constant 0 : i32
    %c0_i32_2 = arith.constant 0 : i32
    return %c0_i32, %c0_i32_0, %c0_i32_1 : i32, i32, i32
  }
  func.func @transform_6(%arg0: i32) -> (i32, i32, i32) {
    %c0_i32 = arith.constant 0 : i32
    %c0_i32_0 = arith.constant 0 : i32
    %c0_i32_1 = arith.constant 0 : i32
    %c0_i32_2 = arith.constant 0 : i32
    return %c0_i32, %c0_i32_0, %c0_i32_1 : i32, i32, i32
  }
  func.func @transform_7(%arg0: i32) -> (i32, i32, i32) {
    %c0_i32 = arith.constant 0 : i32
    %c0_i32_0 = arith.constant 0 : i32
    %c0_i32_1 = arith.constant 0 : i32
    %c0_i32_2 = arith.constant 0 : i32
    return %c0_i32, %c0_i32_0, %c0_i32_1 : i32, i32, i32
  }
  func.func @transform_8(%arg0: i32) -> (i32, i32, i32) {
    %c0_i32 = arith.constant 0 : i32
    %c0_i32_0 = arith.constant 0 : i32
    %c0_i32_1 = arith.constant 0 : i32
    %c0_i32_2 = arith.constant 0 : i32
    return %c0_i32, %c0_i32_0, %c0_i32_1 : i32, i32, i32
  }
  func.func @transform_9(%arg0: i32) -> (i32, i32, i32) {
    %c0_i32 = arith.constant 0 : i32
    %c0_i32_0 = arith.constant 0 : i32
    %c0_i32_1 = arith.constant 0 : i32
    %c0_i32_2 = arith.constant 0 : i32
    return %c0_i32, %c0_i32_0, %c0_i32_1 : i32, i32, i32
  }
  func.func @transform_10(%arg0: i32) -> (i32, i32, i32) {
    %c0_i32 = arith.constant 0 : i32
    %c0_i32_0 = arith.constant 0 : i32
    %c0_i32_1 = arith.constant 0 : i32
    %c0_i32_2 = arith.constant 0 : i32
    return %c0_i32, %c0_i32_0, %c0_i32_1 : i32, i32, i32
  }
  func.func @transform_11(%arg0: i32) -> (i32, i32) {
    %c0_i32 = arith.constant 0 : i32
    %c0_i32_0 = arith.constant 0 : i32
    %c0_i32_1 = arith.constant 0 : i32
    return %c0_i32, %c0_i32_0 : i32, i32
  }
  func.func @transform_12(%arg0: i32) -> (i32, i32, i32) {
    %c0_i32 = arith.constant 0 : i32
    %c0_i32_0 = arith.constant 0 : i32
    %c0_i32_1 = arith.constant 0 : i32
    return %arg0, %c0_i32, %c0_i32_0 : i32, i32, i32
  }
}

</mosaic_0001>

<llo_original>
// kernel: vision_transformer_forward.2
$region0: #{vision_transformer_forward.2}
  #allocation0 [shape = 'u32[]', space=smem, size = 0x4, offset = 0x4, fixed_abs, tag = 'smem constant byte address 0x4 - core index']
  #allocation1 [shape = 'u32[144,128]{1,0:T(1,128)}', space=vmem, size = 0x12000, scoped, tag = 'internal scratch']
  #allocation2 [shape = 'u32[2048]{0}', space=vmem, size = 0x2000, scoped, tag = 'scoped memory for vision_transformer_forward.2']
  #allocation3 [shape = 'u32[2048]{0}', space=vmem, size = 0x2000, scoped, tag = 'scoped memory for vision_transformer_forward.2']
  #allocation4 [shape = 'u32[2048]{0}', space=vmem, size = 0x2000, scoped, tag = 'scoped memory for vision_transformer_forward.2']
  #allocation5 [shape = 'u32[2048]{0}', space=vmem, size = 0x2000, scoped, tag = 'scoped memory for vision_transformer_forward.2']
  #allocation6 [shape = 'u32[2048]{0}', space=vmem, size = 0x2000, scoped, tag = 'scoped memory for vision_transformer_forward.2']
  %s0 = inlined_call_operand.vmem [shape: f32[192,64], index: 0, kind: input, shape index: {}]
  %s1 = inlined_call_operand.vmem [shape: f32[8,64], index: 1, kind: input, shape index: {}]
  %s2 = inlined_call_operand.vmem [shape: f32[4,64], index: 2, kind: input, shape index: {}]
  %s3 = inlined_call_operand.vmem [shape: f32[2,64,192], index: 3, kind: input, shape index: {}]
  %s4 = inlined_call_operand.vmem [shape: f32[2,1,192], index: 4, kind: input, shape index: {}]
  %s5 = inlined_call_operand.vmem [shape: f32[2,64,64], index: 5, kind: input, shape index: {}]
  %s6 = inlined_call_operand.vmem [shape: f32[2,8,64], index: 6, kind: input, shape index: {}]
  %s7 = inlined_call_operand.vmem [shape: f32[2,64,256], index: 7, kind: input, shape index: {}]
  %s8 = inlined_call_operand.vmem [shape: f32[2,1,256], index: 8, kind: input, shape index: {}]
  %s9 = inlined_call_operand.vmem [shape: f32[2,256,64], index: 9, kind: input, shape index: {}]
  %s10 = inlined_call_operand.vmem [shape: f32[64,32], index: 10, kind: input, shape index: {}]
  %s11 = inlined_call_operand.vmem [shape: f32[2,4,192], index: 11, kind: input, shape index: {}]
  %s12 = inlined_call_operand.<no memory space> [shape: f32[], index: 12, kind: input, shape index: {}]
  %s13 = inlined_call_operand.hbm [shape: f32[2,1,32], index: 13, kind: output, shape index: {}]
  %s14 = sld [smem:[#allocation0]]
  $region81: #{vision_transformer_forward.2} parent=0
    _
  %s16 = ssub.s32 1, %s14
  %s17 = scalar_select 0, %s16, %s14
  %v18 = vstv %s12
  $region1: #{vision_transformer_forward.2} parent=0
    #allocation7 [shape = 'u8[1024]{0}', space=vmem, size = 0x400, scoped, tag = 'output window, operand 0']
    #allocation8 [shape = 's32[2]{0}', space=sflag, size = 0x8, scoped, tag = 'scoped memory for vision_transformer_forward.2']
    %19 = vsyncpa [#allocation8], 0
    %s20 = scalar_lea.sflag [#allocation8], 1
    %21 = vsyncpa %s20, 0
    loop: start=0, step=1, limit=4
    $region2: #{vision_transformer_forward.2} parent=1 // loop_pre_header
      _
    $region3: #{vision_transformer_forward.2} parent=1 // loop_header
      %s23 = sphi 0, %s27
      %p24 = scmp.ge.s32.totalorder %s23, 4
      %s37 = sphi 0, %s39
      %s40 = sphi 0, %s37
      %s41 = sphi 0, %s40
      %s57 = sphi 0, %s41
      %s61 = sphi 0, %s61
      %s63 = sphi 0, %s61
      %s64 = sphi 0, %s63
      %s78 = sphi 0, %s64
      %s82 = sphi 0, %s82
      %s84 = sphi 0, %s82
      %s85 = sphi 0, %s84
      %s99 = sphi 0, %s85
      %s103 = sphi 0, %s103
      %s105 = sphi 0, %s103
      %s106 = sphi 0, %s105
      %s120 = sphi 0, %s106
      %s124 = sphi 0, %s124
      %s126 = sphi 0, %s124
      %s127 = sphi 0, %s126
      %s141 = sphi 0, %s127
      %s145 = sphi 0, %s145
      %s147 = sphi 0, %s145
      %s148 = sphi 0, %s147
      %s162 = sphi 0, %s148
      %s166 = sphi 0, %s166
      %s168 = sphi 0, %s166
      %s169 = sphi 0, %s168
      %s183 = sphi 0, %s169
      %s187 = sphi 0, %s187
      %s189 = sphi 0, %s187
      %s190 = sphi 0, %s189
      %s204 = sphi 0, %s190
      %s208 = sphi 0, %s208
      %s210 = sphi 0, %s208
      %s211 = sphi 0, %s210
      %s225 = sphi 0, %s211
      %s229 = sphi 0, %s229
      %s231 = sphi 0, %s229
      %s232 = sphi 0, %s231
      %s246 = sphi 0, %s232
      %s250 = sphi 0, %s250
      %s252 = sphi 0, %s250
      %s253 = sphi 0, %s252
      %s267 = sphi 0, %s253
      %s271 = sphi 0, %s271
      %s273 = sphi 0, %s271
      %s274 = sphi 0, %s273
      %s288 = sphi 0, %s274
      %s294 = sphi 0, %s296
      %s297 = sphi 0, %s294
      %s298 = sphi 0, %s297
      %s314 = sphi 0, %s298
    $region4: #{vision_transformer_forward.2} parent=1 // loop_header_branch
      %26 = sbr.rel (%p24) target = $region8
    $region5: #{vision_transformer_forward.2} parent=1 // loop_body
      %s28 = ssub.s32 %s23, 1
      %s29 = ssub.s32 %s23, 2
      %s30 = sadd.s32 %s23, 1
      %s33 = ssub.s32 %s23, %s30
      %s34 = ssub.s32 0, 0
      %s35 = sor.u32 %s33, %s34
      %p36 = scmp.eq.s32.totalorder %s35, 0
      %s38 = sadd.s32 %s37, 1
      %s39 = scalar_select %p36, %s37, %s38
      %p42 = pneg %p36
      %p43 = scmp.eq.s32.totalorder %s23, 1
      %p44 = por %p42, %p43
      %p45 = scmp.ne.s32.totalorder %s37, %s40
      %p46 = scmp.eq.s32.totalorder %s23, 0
      %p47 = por %p45, %p46
      %p48 = scmp.ne.s32.totalorder %s37, %s40
      %p49 = scmp.eq.s32.totalorder %s28, 1
      %p50 = por %p48, %p49
      %p51 = scmp.ne.s32.totalorder %s40, %s41
      %p52 = scmp.eq.s32.totalorder %s28, 0
      %p53 = por %p51, %p52
      %p54 = scmp.ne.s32.totalorder %s40, %s41
      %p55 = scmp.eq.s32.totalorder %s29, 1
      %p56 = por %p54, %p55
      %p58 = scmp.ne.s32.totalorder %s41, %s57
      %p59 = scmp.eq.s32.totalorder %s29, 0
      %p60 = por %p58, %p59
      %s62 = sadd.s32 %s61, 1
      %p65 = scmp.eq.s32.totalorder %s23, 1
      %p66 = scmp.ne.s32.totalorder %s61, %s63
      %p67 = scmp.eq.s32.totalorder %s23, 0
      %p68 = por %p66, %p67
      %p69 = scmp.ne.s32.totalorder %s61, %s63
      %p70 = scmp.eq.s32.totalorder %s28, 1
      %p71 = por %p69, %p70
      %p72 = scmp.ne.s32.totalorder %s63, %s64
      %p73 = scmp.eq.s32.totalorder %s28, 0
      %p74 = por %p72, %p73
      %p75 = scmp.ne.s32.totalorder %s63, %s64
      %p76 = scmp.eq.s32.totalorder %s29, 1
      %p77 = por %p75, %p76
      %p79 = scmp.ne.s32.totalorder %s64, %s78
      %p80 = scmp.eq.s32.totalorder %s29, 0
      %p81 = por %p79, %p80
      %s83 = sadd.s32 %s82, 1
      %p86 = scmp.eq.s32.totalorder %s23, 1
      %p87 = scmp.ne.s32.totalorder %s82, %s84
      %p88 = scmp.eq.s32.totalorder %s23, 0
      %p89 = por %p87, %p88
      %p90 = scmp.ne.s32.totalorder %s82, %s84
      %p91 = scmp.eq.s32.totalorder %s28, 1
      %p92 = por %p90, %p91
      %p93 = scmp.ne.s32.totalorder %s84, %s85
      %p94 = scmp.eq.s32.totalorder %s28, 0
      %p95 = por %p93, %p94
      %p96 = scmp.ne.s32.totalorder %s84, %s85
      %p97 = scmp.eq.s32.totalorder %s29, 1
      %p98 = por %p96, %p97
      %p100 = scmp.ne.s32.totalorder %s85, %s99
      %p101 = scmp.eq.s32.totalorder %s29, 0
      %p102 = por %p100, %p101
      %s104 = sadd.s32 %s103, 1
      %p107 = scmp.eq.s32.totalorder %s23, 1
      %p108 = scmp.ne.s32.totalorder %s103, %s105
      %p109 = scmp.eq.s32.totalorder %s23, 0
      %p110 = por %p108, %p109
      %p111 = scmp.ne.s32.totalorder %s103, %s105
      %p112 = scmp.eq.s32.totalorder %s28, 1
      %p113 = por %p111, %p112
      %p114 = scmp.ne.s32.totalorder %s105, %s106
      %p115 = scmp.eq.s32.totalorder %s28, 0
      %p116 = por %p114, %p115
      %p117 = scmp.ne.s32.totalorder %s105, %s106
      %p118 = scmp.eq.s32.totalorder %s29, 1
      %p119 = por %p117, %p118
      %p121 = scmp.ne.s32.totalorder %s106, %s120
      %p122 = scmp.eq.s32.totalorder %s29, 0
      %p123 = por %p121, %p122
      %s125 = sadd.s32 %s124, 1
      %p128 = scmp.eq.s32.totalorder %s23, 1
      %p129 = scmp.ne.s32.totalorder %s124, %s126
      %p130 = scmp.eq.s32.totalorder %s23, 0
      %p131 = por %p129, %p130
      %p132 = scmp.ne.s32.totalorder %s124, %s126
      %p133 = scmp.eq.s32.totalorder %s28, 1
      %p134 = por %p132, %p133
      %p135 = scmp.ne.s32.totalorder %s126, %s127
      %p136 = scmp.eq.s32.totalorder %s28, 0
      %p137 = por %p135, %p136
      %p138 = scmp.ne.s32.totalorder %s126, %s127
      %p139 = scmp.eq.s32.totalorder %s29, 1
      %p140 = por %p138, %p139
      %p142 = scmp.ne.s32.totalorder %s127, %s141
      %p143 = scmp.eq.s32.totalorder %s29, 0
      %p144 = por %p142, %p143
      %s146 = sadd.s32 %s145, 1
      %p149 = scmp.eq.s32.totalorder %s23, 1
      %p150 = scmp.ne.s32.totalorder %s145, %s147
      %p151 = scmp.eq.s32.totalorder %s23, 0
      %p152 = por %p150, %p151
      %p153 = scmp.ne.s32.totalorder %s145, %s147
      %p154 = scmp.eq.s32.totalorder %s28, 1
      %p155 = por %p153, %p154
      %p156 = scmp.ne.s32.totalorder %s147, %s148
      %p157 = scmp.eq.s32.totalorder %s28, 0
      %p158 = por %p156, %p157
      %p159 = scmp.ne.s32.totalorder %s147, %s148
      %p160 = scmp.eq.s32.totalorder %s29, 1
      %p161 = por %p159, %p160
      %p163 = scmp.ne.s32.totalorder %s148, %s162
      %p164 = scmp.eq.s32.totalorder %s29, 0
      %p165 = por %p163, %p164
      %s167 = sadd.s32 %s166, 1
      %p170 = scmp.eq.s32.totalorder %s23, 1
      %p171 = scmp.ne.s32.totalorder %s166, %s168
      %p172 = scmp.eq.s32.totalorder %s23, 0
      %p173 = por %p171, %p172
      %p174 = scmp.ne.s32.totalorder %s166, %s168
      %p175 = scmp.eq.s32.totalorder %s28, 1
      %p176 = por %p174, %p175
      %p177 = scmp.ne.s32.totalorder %s168, %s169
      %p178 = scmp.eq.s32.totalorder %s28, 0
      %p179 = por %p177, %p178
      %p180 = scmp.ne.s32.totalorder %s168, %s169
      %p181 = scmp.eq.s32.totalorder %s29, 1
      %p182 = por %p180, %p181
      %p184 = scmp.ne.s32.totalorder %s169, %s183
      %p185 = scmp.eq.s32.totalorder %s29, 0
      %p186 = por %p184, %p185
      %s188 = sadd.s32 %s187, 1
      %p191 = scmp.eq.s32.totalorder %s23, 1
      %p192 = scmp.ne.s32.totalorder %s187, %s189
      %p193 = scmp.eq.s32.totalorder %s23, 0
      %p194 = por %p192, %p193
      %p195 = scmp.ne.s32.totalorder %s187, %s189
      %p196 = scmp.eq.s32.totalorder %s28, 1
      %p197 = por %p195, %p196
      %p198 = scmp.ne.s32.totalorder %s189, %s190
      %p199 = scmp.eq.s32.totalorder %s28, 0
      %p200 = por %p198, %p199
      %p201 = scmp.ne.s32.totalorder %s189, %s190
      %p202 = scmp.eq.s32.totalorder %s29, 1
      %p203 = por %p201, %p202
      %p205 = scmp.ne.s32.totalorder %s190, %s204
      %p206 = scmp.eq.s32.totalorder %s29, 0
      %p207 = por %p205, %p206
      %s209 = sadd.s32 %s208, 1
      %p212 = scmp.eq.s32.totalorder %s23, 1
      %p213 = scmp.ne.s32.totalorder %s208, %s210
      %p214 = scmp.eq.s32.totalorder %s23, 0
      %p215 = por %p213, %p214
      %p216 = scmp.ne.s32.totalorder %s208, %s210
      %p217 = scmp.eq.s32.totalorder %s28, 1
      %p218 = por %p216, %p217
      %p219 = scmp.ne.s32.totalorder %s210, %s211
      %p220 = scmp.eq.s32.totalorder %s28, 0
      %p221 = por %p219, %p220
      %p222 = scmp.ne.s32.totalorder %s210, %s211
      %p223 = scmp.eq.s32.totalorder %s29, 1
      %p224 = por %p222, %p223
      %p226 = scmp.ne.s32.totalorder %s211, %s225
      %p227 = scmp.eq.s32.totalorder %s29, 0
      %p228 = por %p226, %p227
      %s230 = sadd.s32 %s229, 1
      %p233 = scmp.eq.s32.totalorder %s23, 1
      %p234 = scmp.ne.s32.totalorder %s229, %s231
      %p235 = scmp.eq.s32.totalorder %s23, 0
      %p236 = por %p234, %p235
      %p237 = scmp.ne.s32.totalorder %s229, %s231
      %p238 = scmp.eq.s32.totalorder %s28, 1
      %p239 = por %p237, %p238
      %p240 = scmp.ne.s32.totalorder %s231, %s232
      %p241 = scmp.eq.s32.totalorder %s28, 0
      %p242 = por %p240, %p241
      %p243 = scmp.ne.s32.totalorder %s231, %s232
      %p244 = scmp.eq.s32.totalorder %s29, 1
      %p245 = por %p243, %p244
      %p247 = scmp.ne.s32.totalorder %s232, %s246
      %p248 = scmp.eq.s32.totalorder %s29, 0
      %p249 = por %p247, %p248
      %s251 = sadd.s32 %s250, 1
      %p254 = scmp.eq.s32.totalorder %s23, 1
      %p255 = scmp.ne.s32.totalorder %s250, %s252
      %p256 = scmp.eq.s32.totalorder %s23, 0
      %p257 = por %p255, %p256
      %p258 = scmp.ne.s32.totalorder %s250, %s252
      %p259 = scmp.eq.s32.totalorder %s28, 1
      %p260 = por %p258, %p259
      %p261 = scmp.ne.s32.totalorder %s252, %s253
      %p262 = scmp.eq.s32.totalorder %s28, 0
      %p263 = por %p261, %p262
      %p264 = scmp.ne.s32.totalorder %s252, %s253
      %p265 = scmp.eq.s32.totalorder %s29, 1
      %p266 = por %p264, %p265
      %p268 = scmp.ne.s32.totalorder %s253, %s267
      %p269 = scmp.eq.s32.totalorder %s29, 0
      %p270 = por %p268, %p269
      %s272 = sadd.s32 %s271, 1
      %p275 = scmp.eq.s32.totalorder %s23, 1
      %p276 = scmp.ne.s32.totalorder %s271, %s273
      %p277 = scmp.eq.s32.totalorder %s23, 0
      %p278 = por %p276, %p277
      %p279 = scmp.ne.s32.totalorder %s271, %s273
      %p280 = scmp.eq.s32.totalorder %s28, 1
      %p281 = por %p279, %p280
      %p282 = scmp.ne.s32.totalorder %s273, %s274
      %p283 = scmp.eq.s32.totalorder %s28, 0
      %p284 = por %p282, %p283
      %p285 = scmp.ne.s32.totalorder %s273, %s274
      %p286 = scmp.eq.s32.totalorder %s29, 1
      %p287 = por %p285, %p286
      %p289 = scmp.ne.s32.totalorder %s274, %s288
      %p290 = scmp.eq.s32.totalorder %s29, 0
      %p291 = por %p289, %p290
      %s292 = ssub.s32 %s23, %s30
      %p293 = scmp.eq.s32.totalorder %s292, 0
      %s295 = sadd.s32 %s294, 1
      %s296 = scalar_select %p293, %s294, %s295
      %p299 = pneg %p293
      %p300 = scmp.eq.s32.totalorder %s23, 1
      %p301 = por %p299, %p300
      %p302 = scmp.ne.s32.totalorder %s294, %s297
      %p303 = scmp.eq.s32.totalorder %s23, 0
      %p304 = por %p302, %p303
      %p305 = scmp.ne.s32.totalorder %s294, %s297
      %p306 = scmp.eq.s32.totalorder %s28, 1
      %p307 = por %p305, %p306
      %p308 = scmp.ne.s32.totalorder %s297, %s298
      %p309 = scmp.eq.s32.totalorder %s28, 0
      %p310 = por %p308, %p309
      %p311 = scmp.ne.s32.totalorder %s297, %s298
      %p312 = scmp.eq.s32.totalorder %s29, 1
      %p313 = por %p311, %p312
      %p315 = scmp.ne.s32.totalorder %s298, %s314
      %p316 = scmp.eq.s32.totalorder %s29, 0
      %p317 = por %p315, %p316
      %p318 = scmp.le.s32.totalorder 1, %s23
      %p319 = scmp.lt.s32.totalorder %s23, 3
      %p320 = pnand %p318, %p319
      %p321 = pneg %p320
      // Predicated region
      $region9: #{vision_transformer_forward.2} parent=5 // pred_check
        _
      $region10: #{vision_transformer_forward.2} parent=5 // pred_check_branch
        %323 = sbr.rel (%p320) target = $region12
      $region11: #{vision_transformer_forward.2} parent=5 // pred_region
        %s324 = ssub.s32 %s23, 1
        // Predicated region
        $region13: #{vision_transformer_forward.2} parent=11 // pred_check
          %p325 = pneg %p74
        $region14: #{vision_transformer_forward.2} parent=11 // pred_check_branch
          %327 = sbr.rel (%p325) target = $region16
        $region15: #{vision_transformer_forward.2} parent=11 // pred_region
          _
        $region16: #{vision_transformer_forward.2} parent=11 // pred_fallthru
          _
        // Predicated region
        $region17: #{vision_transformer_forward.2} parent=11 // pred_check
          %p328 = pneg %p95
        $region18: #{vision_transformer_forward.2} parent=11 // pred_check_branch
          %330 = sbr.rel (%p328) target = $region20
        $region19: #{vision_transformer_forward.2} parent=11 // pred_region
          _
        $region20: #{vision_transformer_forward.2} parent=11 // pred_fallthru
          _
        // Predicated region
        $region21: #{vision_transformer_forward.2} parent=11 // pred_check
          %p331 = pneg %p116
        $region22: #{vision_transformer_forward.2} parent=11 // pred_check_branch
          %333 = sbr.rel (%p331) target = $region24
        $region23: #{vision_transformer_forward.2} parent=11 // pred_region
          _
        $region24: #{vision_transformer_forward.2} parent=11 // pred_fallthru
          _
        // Predicated region
        $region25: #{vision_transformer_forward.2} parent=11 // pred_check
          %p334 = pneg %p137
        $region26: #{vision_transformer_forward.2} parent=11 // pred_check_branch
          %336 = sbr.rel (%p334) target = $region28
        $region27: #{vision_transformer_forward.2} parent=11 // pred_region
          _
        $region28: #{vision_transformer_forward.2} parent=11 // pred_fallthru
          _
        // Predicated region
        $region29: #{vision_transformer_forward.2} parent=11 // pred_check
          %p337 = pneg %p158
        $region30: #{vision_transformer_forward.2} parent=11 // pred_check_branch
          %339 = sbr.rel (%p337) target = $region32
        $region31: #{vision_transformer_forward.2} parent=11 // pred_region
          _
        $region32: #{vision_transformer_forward.2} parent=11 // pred_fallthru
          _
        // Predicated region
        $region33: #{vision_transformer_forward.2} parent=11 // pred_check
          %p340 = pneg %p179
        $region34: #{vision_transformer_forward.2} parent=11 // pred_check_branch
          %342 = sbr.rel (%p340) target = $region36
        $region35: #{vision_transformer_forward.2} parent=11 // pred_region
          _
        $region36: #{vision_transformer_forward.2} parent=11 // pred_fallthru
          _
        // Predicated region
        $region37: #{vision_transformer_forward.2} parent=11 // pred_check
          %p343 = pneg %p200
        $region38: #{vision_transformer_forward.2} parent=11 // pred_check_branch
          %345 = sbr.rel (%p343) target = $region40
        $region39: #{vision_transformer_forward.2} parent=11 // pred_region
          _
        $region40: #{vision_transformer_forward.2} parent=11 // pred_fallthru
          _
        // Predicated region
        $region41: #{vision_transformer_forward.2} parent=11 // pred_check
          %p346 = pneg %p221
        $region42: #{vision_transformer_forward.2} parent=11 // pred_check_branch
          %348 = sbr.rel (%p346) target = $region44
        $region43: #{vision_transformer_forward.2} parent=11 // pred_region
          _
        $region44: #{vision_transformer_forward.2} parent=11 // pred_fallthru
          _
        // Predicated region
        $region45: #{vision_transformer_forward.2} parent=11 // pred_check
          %p349 = pneg %p242
        $region46: #{vision_transformer_forward.2} parent=11 // pred_check_branch
          %351 = sbr.rel (%p349) target = $region48
        $region47: #{vision_transformer_forward.2} parent=11 // pred_region
          _
        $region48: #{vision_transformer_forward.2} parent=11 // pred_fallthru
          _
        // Predicated region
        $region49: #{vision_transformer_forward.2} parent=11 // pred_check
          %p352 = pneg %p263
        $region50: #{vision_transformer_forward.2} parent=11 // pred_check_branch
          %354 = sbr.rel (%p352) target = $region52
        $region51: #{vision_transformer_forward.2} parent=11 // pred_region
          _
        $region52: #{vision_transformer_forward.2} parent=11 // pred_fallthru
          _
        // Predicated region
        $region53: #{vision_transformer_forward.2} parent=11 // pred_check
          %p355 = pneg %p284
        $region54: #{vision_transformer_forward.2} parent=11 // pred_check_branch
          %357 = sbr.rel (%p355) target = $region56
        $region55: #{vision_transformer_forward.2} parent=11 // pred_region
          _
        $region56: #{vision_transformer_forward.2} parent=11 // pred_fallthru
          _
      $region12: #{vision_transformer_forward.2} parent=5 // pred_fallthru
        _
      %p358 = scmp.lt.s32.totalorder %s23, 2
      // Predicated region
      $region57: #{vision_transformer_forward.2} parent=5 // pred_check
        %p359 = pneg %p358
      $region58: #{vision_transformer_forward.2} parent=5 // pred_check_branch
        %361 = sbr.rel (%p359) target = $region60
      $region59: #{vision_transformer_forward.2} parent=5 // pred_region
        // Predicated region
        $region61: #{vision_transformer_forward.2} parent=59 // pred_check
          %p362 = pneg %p47
        $region62: #{vision_transformer_forward.2} parent=59 // pred_check_branch
          %364 = sbr.rel (%p362) target = $region64
        $region63: #{vision_transformer_forward.2} parent=59 // pred_region
          %s366 = ssub.s32 1, 0
          %s367 = smul.u32 64, %s366
          %s368 = smul.u32 %s367, 2
          %p369 = scmp.lt.s32.totalorder %s23, 1
          %s370 = scalar_select %p369, %s23, 1
          %p371 = scmp.lt.s32.totalorder 0, 0
          %s372 = scalar_select %p371, 0, 0
          %s373 = smul.addr %s372, 2
          %s374 = smul.addr %s370, 2
          %s375 = sadd.s32 %s373, %s374
          %s376 = smul.addr %s375, 4
          %s377 = scalar_lea.vmem %s11, %s376
          %s379 = ssub.s32 1, 0
          %s380 = smul.u32 64, %s379
          %s381 = smul.u32 %s380, 2
        $region64: #{vision_transformer_forward.2} parent=59 // pred_fallthru
          _
      $region60: #{vision_transformer_forward.2} parent=5 // pred_fallthru
        _
      %p382 = scmp.le.s32.totalorder 1, %s23
      %p383 = scmp.lt.s32.totalorder %s23, 3
      %p384 = pnand %p382, %p383
      %p385 = pneg %p384
      // Predicated region
      $region65: #{vision_transformer_forward.2} parent=5 // pred_check
        _
      $region66: #{vision_transformer_forward.2} parent=5 // pred_check_branch
        %387 = sbr.rel (%p384) target = $region68
      $region67: #{vision_transformer_forward.2} parent=5 // pred_region
        #allocation9 [shape = 'u8[8192]{0}', space=vmem, size = 0x2000, dematerialized = true, scoped, tag = 'FusionAdapter Buffer %fusion.1 = f32[16,192]{1,0:T(8,128)} fusion(%param_11.2, %param_12), kind=kLoop, calls=%fused_computation.1.clone, metadata={op_name="jit(vision_transformer_forward)/reshape" stack_frame_id=10}']
        %s388 = ssub.s32 %s23, 1
        %s390 = ssub.s32 1, 0
        %s391 = smul.u32 64, %s390
        %s392 = smul.u32 %s391, 2
        %p393 = scmp.lt.s32.totalorder %s28, 1
        %s394 = scalar_select %p393, %s28, 1
        %p395 = scmp.lt.s32.totalorder 0, 0
        %s396 = scalar_select %p395, 0, 0
        %s397 = smul.addr %s396, 2
        %s398 = smul.addr %s394, 2
        %s399 = sadd.s32 %s397, %s398
        %s400 = smul.addr %s399, 4
        %s401 = scalar_lea.vmem %s11, %s400
        %p402 = pneg %p53
        %p403 = pneg %p50
        %p404 = pneg %p74
        %p405 = pneg %p71
        %p406 = pneg %p95
        %p407 = pneg %p92
        %p408 = pneg %p116
        %p409 = pneg %p113
        %p410 = pneg %p137
        %p411 = pneg %p134
        %p412 = pneg %p158
        %p413 = pneg %p155
        %p414 = pneg %p179
        %p415 = pneg %p176
        %p416 = pneg %p200
        %p417 = pneg %p197
        %p418 = pneg %p221
        %p419 = pneg %p218
        %p420 = pneg %p242
        %p421 = pneg %p239
        %p422 = pneg %p263
        %p423 = pneg %p260
        %p424 = pneg %p284
        %p425 = pneg %p281
        %p426 = pneg %p310
        %p427 = pneg %p307
        %s428 = sand.u32 %s297, 1
        %s429 = scalar_lea.sflag [#allocation8], %s428
        %s430 = sand.u32 %s297, 1
        %s431 = scalar_lea.vmem [#allocation7], %s430
        %s433 = ssub.s32 1, 0
        %s434 = smul.u32 64, %s433
        %s435 = smul.u32 %s434, 2
        %p436 = scmp.lt.s32.totalorder %s28, 1
        %s437 = scalar_select %p436, %s28, 1
        %p438 = scmp.lt.s32.totalorder 0, 0
        %s439 = scalar_select %p438, 0, 0
        %s440 = smul.addr %s439, 2
        %s441 = smul.addr %s437, 2
        %s442 = sadd.s32 %s440, %s441
        %s443 = smul.addr %s442, 4
        %s444 = scalar_lea.vmem %s11, %s443
        %s446 = ssub.s32 1, 0
        %s447 = smul.u32 64, %s446
        %s448 = smul.u32 %s447, 2
        %s449 = ssub.s32 0, 0
        %p450 = scmp.lt.s32.totalorder %s449, 0
        %s451 = scalar_select %p450, 0, 255
        %s452 = sand.u32 15, %s451
        %s453 = sand.u32 15, %s452
        %v454 = vld [vmem:[%s444] sm:%s453]
        %v455 = vlaneseq
        %v456 = vshrl.u32 %v455, 7
        %v457 = vadd.s32 %v456, 8
        %vm458 = vcmp.lt.s32.totalorder %v457, 12
        %v459 = vsel %vm458, %v454, %v18
        %v460 = vlaneseq
        %v461 = vand.u32 %v460, 127
        %vm463 = vcmp.lt.s32.totalorder %v461, 192
        %v464 = vsel %vm463, %v459, %v18
        %vm465 = vcmask 1046528
        %v466 = vsel %vm465, %v464, %v18
        %v467 = vrot.slane %v466, 7
        %s469 = ssub.s32 256, 1
        %470 = vst [vmem:[#allocation9] sm:%s469] %v467
        %s471 = scalar_lea.vmem %s444, 4
        %s472 = ssub.s32 0, 0
        %p473 = scmp.lt.s32.totalorder %s472, 0
        %s474 = scalar_select %p473, 0, 255
        %s475 = sand.u32 15, %s474
        %s476 = sand.u32 15, %s475
        %v477 = vld [vmem:[%s471] sm:%s476]
        %s478 = scalar_lea.vmem %s444, 4
        %v479 = vlaneseq
        %v480 = vshrl.u32 %v479, 7
        %v481 = vadd.s32 %v480, 8
        %vm482 = vcmp.lt.s32.totalorder %v481, 12
        %v483 = vsel %vm482, %v477, %v18
        %v484 = vlaneseq
        %v485 = vand.u32 %v484, 127
        %v486 = vadd.s32 %v485, 128
        %vm487 = vcmp.lt.s32.totalorder %v486, 192
        %v488 = vsel %vm487, %v483, %v18
        %vm489 = vcmask 1046528
        %v490 = vsel %vm489, %v488, %v18
        %v491 = vrot.slane %v490, 7
        %s492 = scalar_lea.vmem [#allocation9], 8
        %s494 = ssub.s32 256, 1
        %495 = vst [vmem:[%s492] sm:%s494] %v491
        %v496 = vld [vmem:[#allocation9] sm:$0xff]
        %v497 = vld [vmem:[#allocation9 + $0x8] sm:$0xff]
        %v498 = vld [vmem:[%s0] sm:$0xff]
        %v499 = vld [vmem:[%s0 + $0x8] sm:$0xff]
        %v500 = vld [vmem:[%s0 + $0x10] sm:$0xff]
        %v501 = vld [vmem:[%s0 + $0x18] sm:$0xff]
        %v502 = vld [vmem:[%s0 + $0x20] sm:$0xff]
        %v503 = vld [vmem:[%s0 + $0x28] sm:$0xff]
        %v504 = vld [vmem:[%s0 + $0x30] sm:$0xff]
        %v505 = vld [vmem:[%s0 + $0x38] sm:$0xff]
        %v506 = vld [vmem:[%s0 + $0x40] sm:$0xff]
        %v507 = vld [vmem:[%s0 + $0x48] sm:$0xff]
        %v508 = vld [vmem:[%s0 + $0x50] sm:$0xff]
        %v509 = vld [vmem:[%s0 + $0x58] sm:$0xff]
        %v510 = vld [vmem:[%s0 + $0x60] sm:$0xff]
        %v511 = vld [vmem:[%s0 + $0x68] sm:$0xff]
        %v512 = vld [vmem:[%s0 + $0x70] sm:$0xff]
        %v513 = vld [vmem:[%s0 + $0x78] sm:$0xff]
        %v514 = vld [vmem:[%s0 + $0x80] sm:$0xff]
        %v515 = vld [vmem:[%s0 + $0x88] sm:$0xff]
        %v516 = vld [vmem:[%s0 + $0x90] sm:$0xff]
        %v517 = vld [vmem:[%s0 + $0x98] sm:$0xff]
        %v518 = vld [vmem:[%s0 + $0xa0] sm:$0xff]
        %v519 = vld [vmem:[%s0 + $0xa8] sm:$0xff]
        %v520 = vld [vmem:[%s0 + $0xb0] sm:$0xff]
        %v521 = vld [vmem:[%s0 + $0xb8] sm:$0xff]
        %v522 = vld [vmem:[%s1] sm:$0xff]
        %vm523 = vcmask 523264
        %v525 = vsel %vm523, %v497, 0
        %527 = vmatprep.subr.mxu0 0.0
        %528 = vmatpush1.msra.mxu0 %v513
        %529 = vmatprep.subr.mxu0 0.0
        %530 = vmatpush1.msra.mxu0 %v512
        %531 = vmatprep.subr.mxu0 0.0
        %532 = vmatpush1.msra.mxu0 %v511
        %533 = vmatprep.subr.mxu0 0.0
        %534 = vmatpush1.msra.mxu0 %v510
        %535 = vmatprep.subr.mxu0 0.0
        %536 = vmatpush1.msra.mxu0 %v509
        %537 = vmatprep.subr.mxu0 0.0
        %538 = vmatpush1.msra.mxu0 %v508
        %539 = vmatprep.subr.mxu0 0.0
        %540 = vmatpush1.msra.mxu0 %v507
        %541 = vmatprep.subr.mxu0 0.0
        %542 = vmatpush1.msra.mxu0 %v506
        %543 = vmatprep.subr.mxu0 0.0
        %544 = vmatpush1.msra.mxu0 %v505
        %545 = vmatprep.subr.mxu0 0.0
        %546 = vmatpush1.msra.mxu0 %v504
        %547 = vmatprep.subr.mxu0 0.0
        %548 = vmatpush1.msra.mxu0 %v503
        %549 = vmatprep.subr.mxu0 0.0
        %550 = vmatpush1.msra.mxu0 %v502
        %551 = vmatprep.subr.mxu0 0.0
        %552 = vmatpush1.msra.mxu0 %v501
        %553 = vmatprep.subr.mxu0 0.0
        %554 = vmatpush1.msra.mxu0 %v500
        %555 = vmatprep.subr.mxu0 0.0
        %556 = vmatpush1.msra.mxu0 %v499
        %557 = vmatprep.subr.mxu0 0.0
        %558 = vmatpush1.msra.mxu0 %v498
        %559 = vmatprep.subr.mxu0 0.0
        %560 = vmatpush2.msra.mxu0 0.0
        %561 = vmatprep.subr.mxu0 0.0
        %562 = vmatpush2.msra.mxu0 0.0
        %563 = vmatprep.subr.mxu0 0.0
        %564 = vmatpush2.msra.mxu0 0.0
        %565 = vmatprep.subr.mxu0 0.0
        %566 = vmatpush2.msra.mxu0 0.0
        %567 = vmatprep.subr.mxu0 0.0
        %568 = vmatpush2.msra.mxu0 0.0
        %569 = vmatprep.subr.mxu0 0.0
        %570 = vmatpush2.msra.mxu0 0.0
        %571 = vmatprep.subr.mxu0 0.0
        %572 = vmatpush2.msra.mxu0 0.0
        %573 = vmatprep.subr.mxu0 0.0
        %574 = vmatpush2.msra.mxu0 0.0
        %575 = vmatprep.subr.mxu0 0.0
        %576 = vmatpush2.msra.mxu0 %v521
        %577 = vmatprep.subr.mxu0 0.0
        %578 = vmatpush2.msra.mxu0 %v520
        %579 = vmatprep.subr.mxu0 0.0
        %580 = vmatpush2.msra.mxu0 %v519
        %581 = vmatprep.subr.mxu0 0.0
        %582 = vmatpush2.msra.mxu0 %v518
        %583 = vmatprep.subr.mxu0 0.0
        %584 = vmatpush2.msra.mxu0 %v517
        %585 = vmatprep.subr.mxu0 0.0
        %586 = vmatpush2.msra.mxu0 %v516
        %587 = vmatprep.subr.mxu0 0.0
        %588 = vmatpush2.msra.mxu0 %v515
        %589 = vmatprep.subr.mxu0 0.0
        %590 = vmatpush2.msra.mxu0 %v514
        %591 = vmatprep.mubr.f32.mxu0 %v525
        %592 = vmatmul.mubr.f32.gmra.mxu0 %v496
        %v593 = vpop.f32.mrf.mxu0
        %v594 = vadd.f32 %v522, %v593
        %v595 = vpop.f32.mrf.mxu0
        %596 = vdwg.mxu0
        %v597 = vld [vmem:[%s2] sm:$0xf]
        %v598 = vsel %vm523, %v594, 0.0
        %599 = vadd.xlane.f32.xlu0 %v598
        %v600 = vpop.xlane.xlu0 %599
        %v601 = vrcp.pop 64.0
        %v602 = vmul.f32 %v600, %v601
        %v603 = vsub.f32 %v594, %v602
        %v604 = vmul.f32 %v603, %v603
        %v605 = vsel %vm523, %v604, 0.0
        %606 = vadd.xlane.f32.xlu0 %v605
        %v607 = vpop.xlane.xlu0 %606
        %v608 = vmul.f32 %v607, %v601
        %v609 = vadd.f32 %v608, 1e-05
        %v610 = vrsqrt.pop %v609
        %v611 = vmul.f32 %v603, %v610
        %v612 = vlaneseq
        %v613 = vshrl.u32 %v612, 7
        %v614 = vsub.s32 0, %v613
        %v615 = vrot.slane %v597, %v614
        %v616 = vmul.f32 %v611, %v615
        %v617 = vlaneseq
        %v618 = vshrl.u32 %v617, 7
        %v619 = vsub.s32 1, %v618
        %v620 = vrot.slane %v597, %v619
        %v621 = vadd.f32 %v616, %v620
        %v622 = vlaneseq
        %v623 = vand.u32 %v622, 127
        %vm624 = vcmp.lt.s32.totalorder %v623, 5
        %v625 = vsel %vm624, 0.0, -1e+30
        %v626 = vld [vmem:[%s6] sm:$0xff]
        %v627 = vld [vmem:[%s4] sm:$0x3]
        %v628 = vld [vmem:[%s8] sm:$0x3]
        %v629 = vsel %vm523, %v621, 0.0
        %630 = vadd.xlane.f32.xlu0 %v629
        %v631 = vpop.xlane.xlu0 %630
        %v632 = vmul.f32 %v631, %v601
        %v633 = vsub.f32 %v621, %v632
        %v634 = vmul.f32 %v633, %v633
        %v635 = vsel %vm523, %v634, 0.0
        %636 = vadd.xlane.f32.xlu0 %v635
        %v637 = vpop.xlane.xlu0 %636
        %v638 = vmul.f32 %v637, %v601
        %v639 = vadd.f32 %v638, 1e-05
        %v640 = vrsqrt.pop %v639
        %v641 = vmul.f32 %v633, %v640
        %v642 = vlaneseq
        %v643 = vshrl.u32 %v642, 7
        %v644 = vsub.s32 0, %v643
        %v645 = vrot.slane %v626, %v644
        %v646 = vmul.f32 %v641, %v645
        %v647 = vlaneseq
        %v648 = vshrl.u32 %v647, 7
        %v649 = vsub.s32 1, %v648
        %v650 = vrot.slane %v626, %v649
        %v651 = vadd.f32 %v646, %v650
        %v652 = vld [vmem:[%s3] sm:$0xff]
        %v653 = vld [vmem:[%s3 + $0x8] sm:$0xff]
        %v654 = vld [vmem:[%s3 + $0x10] sm:$0xff]
        %v655 = vld [vmem:[%s3 + $0x18] sm:$0xff]
        %v656 = vld [vmem:[%s3 + $0x20] sm:$0xff]
        %v657 = vld [vmem:[%s3 + $0x28] sm:$0xff]
        %v658 = vld [vmem:[%s3 + $0x30] sm:$0xff]
        %v659 = vld [vmem:[%s3 + $0x38] sm:$0xff]
        %v660 = vld [vmem:[%s3 + $0x40] sm:$0xff]
        %v661 = vld [vmem:[%s3 + $0x48] sm:$0xff]
        %v662 = vld [vmem:[%s3 + $0x50] sm:$0xff]
        %v663 = vld [vmem:[%s3 + $0x58] sm:$0xff]
        %v664 = vld [vmem:[%s3 + $0x60] sm:$0xff]
        %v665 = vld [vmem:[%s3 + $0x68] sm:$0xff]
        %v666 = vld [vmem:[%s3 + $0x70] sm:$0xff]
        %v667 = vld [vmem:[%s3 + $0x78] sm:$0xff]
        %v669 = vlaneseq
        %v670 = vshrl.u32 %v669, 7
        %v671 = vsub.s32 0, %v670
        %v672 = vrot.slane %v627, %v671
        %v673 = vlaneseq
        %v674 = vshrl.u32 %v673, 7
        %v675 = vsub.s32 1, %v674
        %v676 = vrot.slane %v627, %v675
        %v680 = vsel %vm523, %v651, 0
        %682 = vmatprep.subr.mxu0 0.0
        %683 = vmatpush1.msra.mxu0 0.0
        %684 = vmatprep.subr.mxu0 0.0
        %685 = vmatpush1.msra.mxu0 0.0
        %686 = vmatprep.subr.mxu0 0.0
        %687 = vmatpush1.msra.mxu0 0.0
        %688 = vmatprep.subr.mxu0 0.0
        %689 = vmatpush1.msra.mxu0 0.0
        %690 = vmatprep.subr.mxu0 0.0
        %691 = vmatpush1.msra.mxu0 0.0
        %692 = vmatprep.subr.mxu0 0.0
        %693 = vmatpush1.msra.mxu0 0.0
        %694 = vmatprep.subr.mxu0 0.0
        %695 = vmatpush1.msra.mxu0 0.0
        %696 = vmatprep.subr.mxu0 0.0
        %697 = vmatpush1.msra.mxu0 0.0
        %698 = vmatprep.subr.mxu0 %v667
        %699 = vmatpush1.msra.mxu0 %v666
        %700 = vmatprep.subr.mxu0 %v665
        %701 = vmatpush1.msra.mxu0 %v664
        %702 = vmatprep.subr.mxu0 %v663
        %703 = vmatpush1.msra.mxu0 %v662
        %704 = vmatprep.subr.mxu0 %v661
        %705 = vmatpush1.msra.mxu0 %v660
        %706 = vmatprep.subr.mxu0 %v659
        %707 = vmatpush1.msra.mxu0 %v658
        %708 = vmatprep.subr.mxu0 %v657
        %709 = vmatpush1.msra.mxu0 %v656
        %710 = vmatprep.subr.mxu0 %v655
        %711 = vmatpush1.msra.mxu0 %v654
        %712 = vmatprep.subr.mxu0 %v653
        %713 = vmatpush1.msra.mxu0 %v652
        %714 = vmatprep.subr.mxu0 0.0
        %715 = vmatpush2.msra.mxu0 0.0
        %716 = vmatprep.subr.mxu0 0.0
        %717 = vmatpush2.msra.mxu0 0.0
        %718 = vmatprep.subr.mxu0 0.0
        %719 = vmatpush2.msra.mxu0 0.0
        %720 = vmatprep.subr.mxu0 0.0
        %721 = vmatpush2.msra.mxu0 0.0
        %722 = vmatprep.subr.mxu0 0.0
        %723 = vmatpush2.msra.mxu0 0.0
        %724 = vmatprep.subr.mxu0 0.0
        %725 = vmatpush2.msra.mxu0 0.0
        %726 = vmatprep.subr.mxu0 0.0
        %727 = vmatpush2.msra.mxu0 0.0
        %728 = vmatprep.subr.mxu0 0.0
        %729 = vmatpush2.msra.mxu0 0.0
        %730 = vmatprep.subr.mxu0 0.0
        %731 = vmatpush2.msra.mxu0 0.0
        %732 = vmatprep.subr.mxu0 0.0
        %733 = vmatpush2.msra.mxu0 0.0
        %734 = vmatprep.subr.mxu0 0.0
        %735 = vmatpush2.msra.mxu0 0.0
        %736 = vmatprep.subr.mxu0 0.0
        %737 = vmatpush2.msra.mxu0 0.0
        %738 = vmatprep.subr.mxu0 0.0
        %739 = vmatpush2.msra.mxu0 0.0
        %740 = vmatprep.subr.mxu0 0.0
        %741 = vmatpush2.msra.mxu0 0.0
        %742 = vmatprep.subr.mxu0 0.0
        %743 = vmatpush2.msra.mxu0 0.0
        %744 = vmatprep.subr.mxu0 0.0
        %745 = vmatpush2.msra.mxu0 0.0
        %746 = vmatprep.mubr.f32.mxu0 0.0
        %747 = vmatmul.mubr.f32.gmra.mxu0 %v680
        %v748 = vpop.f32.mrf.mxu0
        %v749 = vadd.f32 %v672, %v748
        %v750 = vpop.f32.mrf.mxu0
        %v751 = vadd.f32 %v676, %v750
        %752 = vdwg.mxu0
        %754 = vrot.lane.b32.xlu0 %v749, 64
        %v755 = vpop.permute.xlu0 %754
        %vm756 = vcmask 130048
        %v757 = vsel %vm756, %v749, 0
        %v759 = vsel %vm756, %v755, 0
        %761 = vmatprep.subr.mxu0 0.0
        %762 = vmatpush1.xpose.msra.mxu0 0.0
        %763 = vmatprep.subr.mxu0 0.0
        %764 = vmatpush1.xpose.msra.mxu0 0.0
        %765 = vmatprep.subr.mxu0 0.0
        %766 = vmatpush1.xpose.msra.mxu0 0.0
        %767 = vmatprep.subr.mxu0 0.0
        %768 = vmatpush1.xpose.msra.mxu0 0.0
        %769 = vmatprep.subr.mxu0 0.0
        %770 = vmatpush1.xpose.msra.mxu0 0.0
        %771 = vmatprep.subr.mxu0 0.0
        %772 = vmatpush1.xpose.msra.mxu0 0.0
        %773 = vmatprep.subr.mxu0 0.0
        %774 = vmatpush1.xpose.msra.mxu0 0.0
        %775 = vmatprep.subr.mxu0 0.0
        %776 = vmatpush1.xpose.msra.mxu0 0.0
        %777 = vmatprep.subr.mxu0 0.0
        %778 = vmatpush1.xpose.msra.mxu0 0.0
        %779 = vmatprep.subr.mxu0 0.0
        %780 = vmatpush1.xpose.msra.mxu0 0.0
        %781 = vmatprep.subr.mxu0 0.0
        %782 = vmatpush1.xpose.msra.mxu0 0.0
        %783 = vmatprep.subr.mxu0 0.0
        %784 = vmatpush1.xpose.msra.mxu0 0.0
        %785 = vmatprep.subr.mxu0 0.0
        %786 = vmatpush1.xpose.msra.mxu0 0.0
        %787 = vmatprep.subr.mxu0 0.0
        %788 = vmatpush1.xpose.msra.mxu0 0.0
        %789 = vmatprep.subr.mxu0 0.0
        %790 = vmatpush1.xpose.msra.mxu0 0.0
        %791 = vmatprep.subr.mxu0 0.0
        %792 = vmatpush1.xpose.msra.mxu0 %v759
        %793 = vmatprep.subr.mxu0 0.0
        %794 = vmatpush2.xpose.msra.mxu0 0.0
        %795 = vmatprep.subr.mxu0 0.0
        %796 = vmatpush2.xpose.msra.mxu0 0.0
        %797 = vmatprep.subr.mxu0 0.0
        %798 = vmatpush2.xpose.msra.mxu0 0.0
        %799 = vmatprep.subr.mxu0 0.0
        %800 = vmatpush2.xpose.msra.mxu0 0.0
        %801 = vmatprep.subr.mxu0 0.0
        %802 = vmatpush2.xpose.msra.mxu0 0.0
        %803 = vmatprep.subr.mxu0 0.0
        %804 = vmatpush2.xpose.msra.mxu0 0.0
        %805 = vmatprep.subr.mxu0 0.0
        %806 = vmatpush2.xpose.msra.mxu0 0.0
        %807 = vmatprep.subr.mxu0 0.0
        %808 = vmatpush2.xpose.msra.mxu0 0.0
        %809 = vmatprep.subr.mxu0 0.0
        %810 = vmatpush2.xpose.msra.mxu0 0.0
        %811 = vmatprep.subr.mxu0 0.0
        %812 = vmatpush2.xpose.msra.mxu0 0.0
        %813 = vmatprep.subr.mxu0 0.0
        %814 = vmatpush2.xpose.msra.mxu0 0.0
        %815 = vmatprep.subr.mxu0 0.0
        %816 = vmatpush2.xpose.msra.mxu0 0.0
        %817 = vmatprep.subr.mxu0 0.0
        %818 = vmatpush2.xpose.msra.mxu0 0.0
        %819 = vmatprep.subr.mxu0 0.0
        %820 = vmatpush2.xpose.msra.mxu0 0.0
        %821 = vmatprep.subr.mxu0 0.0
        %822 = vmatpush2.xpose.msra.mxu0 0.0
        %823 = vmatprep.subr.mxu0 0.0
        %824 = vmatpush2.xpose.msra.mxu0 0.0
        %825 = vmatprep.mubr.f32.mxu0 0.0
        %826 = vmatmul.mubr.f32.gmra.mxu0 %v757
        %v827 = vpop.f32.mrf.mxu0
        %v828 = vadd.f32 %v625, %v827
        %v829 = vpop.f32.mrf.mxu0
        %830 = vdwg.mxu0
        %vm831 = vcmask 64512
        %v832 = vsel %vm831, %v828, -inf
        %833 = vmax.xlane.f32.xlu0 %v832
        %v834 = vpop.xlane.xlu0 %833
        %v835 = vsub.f32 %v828, %v834
        %v836 = vmul.f32 %v835, 1.442695
        %v837 = vpow.pop %v836
        %v838 = vsel %vm831, %v837, 0.0
        %839 = vadd.xlane.f32.xlu0 %v838
        %v840 = vpop.xlane.xlu0 %839
        %v841 = vrcp.pop %v840
        %v842 = vmul.f32 %v837, %v841
        %v844 = vsel %vm831, %v842, 0
        %846 = vmatprep.subr.mxu0 0.0
        %847 = vmatpush1.msra.mxu0 0.0
        %848 = vmatprep.subr.mxu0 0.0
        %849 = vmatpush1.msra.mxu0 0.0
        %850 = vmatprep.subr.mxu0 0.0
        %851 = vmatpush1.msra.mxu0 0.0
        %852 = vmatprep.subr.mxu0 0.0
        %853 = vmatpush1.msra.mxu0 0.0
        %854 = vmatprep.subr.mxu0 0.0
        %855 = vmatpush1.msra.mxu0 0.0
        %856 = vmatprep.subr.mxu0 0.0
        %857 = vmatpush1.msra.mxu0 0.0
        %858 = vmatprep.subr.mxu0 0.0
        %859 = vmatpush1.msra.mxu0 0.0
        %860 = vmatprep.subr.mxu0 0.0
        %861 = vmatpush1.msra.mxu0 0.0
        %862 = vmatprep.subr.mxu0 0.0
        %863 = vmatpush1.msra.mxu0 0.0
        %864 = vmatprep.subr.mxu0 0.0
        %865 = vmatpush1.msra.mxu0 0.0
        %866 = vmatprep.subr.mxu0 0.0
        %867 = vmatpush1.msra.mxu0 0.0
        %868 = vmatprep.subr.mxu0 0.0
        %869 = vmatpush1.msra.mxu0 0.0
        %870 = vmatprep.subr.mxu0 0.0
        %871 = vmatpush1.msra.mxu0 0.0
        %872 = vmatprep.subr.mxu0 0.0
        %873 = vmatpush1.msra.mxu0 0.0
        %874 = vmatprep.subr.mxu0 0.0
        %875 = vmatpush1.msra.mxu0 0.0
        %876 = vmatprep.subr.mxu0 0.0
        %877 = vmatpush1.msra.mxu0 %v751
        %878 = vmatprep.subr.mxu0 0.0
        %879 = vmatpush2.msra.mxu0 0.0
        %880 = vmatprep.subr.mxu0 0.0
        %881 = vmatpush2.msra.mxu0 0.0
        %882 = vmatprep.subr.mxu0 0.0
        %883 = vmatpush2.msra.mxu0 0.0
        %884 = vmatprep.subr.mxu0 0.0
        %885 = vmatpush2.msra.mxu0 0.0
        %886 = vmatprep.subr.mxu0 0.0
        %887 = vmatpush2.msra.mxu0 0.0
        %888 = vmatprep.subr.mxu0 0.0
        %889 = vmatpush2.msra.mxu0 0.0
        %890 = vmatprep.subr.mxu0 0.0
        %891 = vmatpush2.msra.mxu0 0.0
        %892 = vmatprep.subr.mxu0 0.0
        %893 = vmatpush2.msra.mxu0 0.0
        %894 = vmatprep.subr.mxu0 0.0
        %895 = vmatpush2.msra.mxu0 0.0
        %896 = vmatprep.subr.mxu0 0.0
        %897 = vmatpush2.msra.mxu0 0.0
        %898 = vmatprep.subr.mxu0 0.0
        %899 = vmatpush2.msra.mxu0 0.0
        %900 = vmatprep.subr.mxu0 0.0
        %901 = vmatpush2.msra.mxu0 0.0
        %902 = vmatprep.subr.mxu0 0.0
        %903 = vmatpush2.msra.mxu0 0.0
        %904 = vmatprep.subr.mxu0 0.0
        %905 = vmatpush2.msra.mxu0 0.0
        %906 = vmatprep.subr.mxu0 0.0
        %907 = vmatpush2.msra.mxu0 0.0
        %908 = vmatprep.subr.mxu0 0.0
        %909 = vmatpush2.msra.mxu0 0.0
        %910 = vmatprep.mubr.f32.mxu0 0.0
        %911 = vmatmul.mubr.f32.gmra.mxu0 %v844
        %v912 = vpop.f32.mrf.mxu0
        %v913 = vadd.f32 0.0, %v912
        %v914 = vpop.f32.mrf.mxu0
        %915 = vdwg.mxu0
        %916 = vrot.lane.b32.xlu0 %v749, 112
        %v917 = vpop.permute.xlu0 %916
        %918 = vrot.lane.b32.xlu0 %v749, 48
        %v919 = vpop.permute.xlu0 %918
        %v920 = vsel %vm756, %v917, 0
        %v922 = vsel %vm756, %v919, 0
        %924 = vmatprep.subr.mxu0 0.0
        %925 = vmatpush1.xpose.msra.mxu0 0.0
        %926 = vmatprep.subr.mxu0 0.0
        %927 = vmatpush1.xpose.msra.mxu0 0.0
        %928 = vmatprep.subr.mxu0 0.0
        %929 = vmatpush1.xpose.msra.mxu0 0.0
        %930 = vmatprep.subr.mxu0 0.0
        %931 = vmatpush1.xpose.msra.mxu0 0.0
        %932 = vmatprep.subr.mxu0 0.0
        %933 = vmatpush1.xpose.msra.mxu0 0.0
        %934 = vmatprep.subr.mxu0 0.0
        %935 = vmatpush1.xpose.msra.mxu0 0.0
        %936 = vmatprep.subr.mxu0 0.0
        %937 = vmatpush1.xpose.msra.mxu0 0.0
        %938 = vmatprep.subr.mxu0 0.0
        %939 = vmatpush1.xpose.msra.mxu0 0.0
        %940 = vmatprep.subr.mxu0 0.0
        %941 = vmatpush1.xpose.msra.mxu0 0.0
        %942 = vmatprep.subr.mxu0 0.0
        %943 = vmatpush1.xpose.msra.mxu0 0.0
        %944 = vmatprep.subr.mxu0 0.0
        %945 = vmatpush1.xpose.msra.mxu0 0.0
        %946 = vmatprep.subr.mxu0 0.0
        %947 = vmatpush1.xpose.msra.mxu0 0.0
        %948 = vmatprep.subr.mxu0 0.0
        %949 = vmatpush1.xpose.msra.mxu0 0.0
        %950 = vmatprep.subr.mxu0 0.0
        %951 = vmatpush1.xpose.msra.mxu0 0.0
        %952 = vmatprep.subr.mxu0 0.0
        %953 = vmatpush1.xpose.msra.mxu0 0.0
        %954 = vmatprep.subr.mxu0 0.0
        %955 = vmatpush1.xpose.msra.mxu0 %v922
        %956 = vmatprep.subr.mxu0 0.0
        %957 = vmatpush2.xpose.msra.mxu0 0.0
        %958 = vmatprep.subr.mxu0 0.0
        %959 = vmatpush2.xpose.msra.mxu0 0.0
        %960 = vmatprep.subr.mxu0 0.0
        %961 = vmatpush2.xpose.msra.mxu0 0.0
        %962 = vmatprep.subr.mxu0 0.0
        %963 = vmatpush2.xpose.msra.mxu0 0.0
        %964 = vmatprep.subr.mxu0 0.0
        %965 = vmatpush2.xpose.msra.mxu0 0.0
        %966 = vmatprep.subr.mxu0 0.0
        %967 = vmatpush2.xpose.msra.mxu0 0.0
        %968 = vmatprep.subr.mxu0 0.0
        %969 = vmatpush2.xpose.msra.mxu0 0.0
        %970 = vmatprep.subr.mxu0 0.0
        %971 = vmatpush2.xpose.msra.mxu0 0.0
        %972 = vmatprep.subr.mxu0 0.0
        %973 = vmatpush2.xpose.msra.mxu0 0.0
        %974 = vmatprep.subr.mxu0 0.0
        %975 = vmatpush2.xpose.msra.mxu0 0.0
        %976 = vmatprep.subr.mxu0 0.0
        %977 = vmatpush2.xpose.msra.mxu0 0.0
        %978 = vmatprep.subr.mxu0 0.0
        %979 = vmatpush2.xpose.msra.mxu0 0.0
        %980 = vmatprep.subr.mxu0 0.0
        %981 = vmatpush2.xpose.msra.mxu0 0.0
        %982 = vmatprep.subr.mxu0 0.0
        %983 = vmatpush2.xpose.msra.mxu0 0.0
        %984 = vmatprep.subr.mxu0 0.0
        %985 = vmatpush2.xpose.msra.mxu0 0.0
        %986 = vmatprep.subr.mxu0 0.0
        %987 = vmatpush2.xpose.msra.mxu0 0.0
        %988 = vmatprep.mubr.f32.mxu0 0.0
        %989 = vmatmul.mubr.f32.gmra.mxu0 %v920
        %v990 = vpop.f32.mrf.mxu0
        %v991 = vadd.f32 %v625, %v990
        %v992 = vpop.f32.mrf.mxu0
        %993 = vdwg.mxu0
        %v994 = vsel %vm831, %v991, -inf
        %995 = vmax.xlane.f32.xlu0 %v994
        %v996 = vpop.xlane.xlu0 %995
        %v997 = vsub.f32 %v991, %v996
        %v998 = vmul.f32 %v997, 1.442695
        %v999 = vpow.pop %v998
        %v1000 = vsel %vm831, %v999, 0.0
        %1001 = vadd.xlane.f32.xlu0 %v1000
        %v1002 = vpop.xlane.xlu0 %1001
        %v1003 = vrcp.pop %v1002
        %v1004 = vmul.f32 %v999, %v1003
        %1006 = vrot.lane.b32.xlu0 %v751, 112
        %v1007 = vpop.permute.xlu0 %1006
        %v1010 = vsel %vm831, %v1004, 0
        %1012 = vmatprep.subr.mxu0 0.0
        %1013 = vmatpush1.msra.mxu0 0.0
        %1014 = vmatprep.subr.mxu0 0.0
        %1015 = vmatpush1.msra.mxu0 0.0
        %1016 = vmatprep.subr.mxu0 0.0
        %1017 = vmatpush1.msra.mxu0 0.0
        %1018 = vmatprep.subr.mxu0 0.0
        %1019 = vmatpush1.msra.mxu0 0.0
        %1020 = vmatprep.subr.mxu0 0.0
        %1021 = vmatpush1.msra.mxu0 0.0
        %1022 = vmatprep.subr.mxu0 0.0
        %1023 = vmatpush1.msra.mxu0 0.0
        %1024 = vmatprep.subr.mxu0 0.0
        %1025 = vmatpush1.msra.mxu0 0.0
        %1026 = vmatprep.subr.mxu0 0.0
        %1027 = vmatpush1.msra.mxu0 0.0
        %1028 = vmatprep.subr.mxu0 0.0
        %1029 = vmatpush1.msra.mxu0 0.0
        %1030 = vmatprep.subr.mxu0 0.0
        %1031 = vmatpush1.msra.mxu0 0.0
        %1032 = vmatprep.subr.mxu0 0.0
        %1033 = vmatpush1.msra.mxu0 0.0
        %1034 = vmatprep.subr.mxu0 0.0
        %1035 = vmatpush1.msra.mxu0 0.0
        %1036 = vmatprep.subr.mxu0 0.0
        %1037 = vmatpush1.msra.mxu0 0.0
        %1038 = vmatprep.subr.mxu0 0.0
        %1039 = vmatpush1.msra.mxu0 0.0
        %1040 = vmatprep.subr.mxu0 0.0
        %1041 = vmatpush1.msra.mxu0 0.0
        %1042 = vmatprep.subr.mxu0 0.0
        %1043 = vmatpush1.msra.mxu0 %v1007
        %1044 = vmatprep.subr.mxu0 0.0
        %1045 = vmatpush2.msra.mxu0 0.0
        %1046 = vmatprep.subr.mxu0 0.0
        %1047 = vmatpush2.msra.mxu0 0.0
        %1048 = vmatprep.subr.mxu0 0.0
        %1049 = vmatpush2.msra.mxu0 0.0
        %1050 = vmatprep.subr.mxu0 0.0
        %1051 = vmatpush2.msra.mxu0 0.0
        %1052 = vmatprep.subr.mxu0 0.0
        %1053 = vmatpush2.msra.mxu0 0.0
        %1054 = vmatprep.subr.mxu0 0.0
        %1055 = vmatpush2.msra.mxu0 0.0
        %1056 = vmatprep.subr.mxu0 0.0
        %1057 = vmatpush2.msra.mxu0 0.0
        %1058 = vmatprep.subr.mxu0 0.0
        %1059 = vmatpush2.msra.mxu0 0.0
        %1060 = vmatprep.subr.mxu0 0.0
        %1061 = vmatpush2.msra.mxu0 0.0
        %1062 = vmatprep.subr.mxu0 0.0
        %1063 = vmatpush2.msra.mxu0 0.0
        %1064 = vmatprep.subr.mxu0 0.0
        %1065 = vmatpush2.msra.mxu0 0.0
        %1066 = vmatprep.subr.mxu0 0.0
        %1067 = vmatpush2.msra.mxu0 0.0
        %1068 = vmatprep.subr.mxu0 0.0
        %1069 = vmatpush2.msra.mxu0 0.0
        %1070 = vmatprep.subr.mxu0 0.0
        %1071 = vmatpush2.msra.mxu0 0.0
        %1072 = vmatprep.subr.mxu0 0.0
        %1073 = vmatpush2.msra.mxu0 0.0
        %1074 = vmatprep.subr.mxu0 0.0
        %1075 = vmatpush2.msra.mxu0 0.0
        %1076 = vmatprep.mubr.f32.mxu0 0.0
        %1077 = vmatmul.mubr.f32.gmra.mxu0 %v1010
        %v1078 = vpop.f32.mrf.mxu0
        %v1079 = vadd.f32 0.0, %v1078
        %v1080 = vpop.f32.mrf.mxu0
        %1081 = vdwg.mxu0
        %1082 = vrot.lane.b32.xlu0 %v749, 96
        %v1083 = vpop.permute.xlu0 %1082
        %1084 = vrot.lane.b32.xlu0 %v749, 32
        %v1085 = vpop.permute.xlu0 %1084
        %v1086 = vsel %vm756, %v1083, 0
        %v1088 = vsel %vm756, %v1085, 0
        %1090 = vmatprep.subr.mxu0 0.0
        %1091 = vmatpush1.xpose.msra.mxu0 0.0
        %1092 = vmatprep.subr.mxu0 0.0
        %1093 = vmatpush1.xpose.msra.mxu0 0.0
        %1094 = vmatprep.subr.mxu0 0.0
        %1095 = vmatpush1.xpose.msra.mxu0 0.0
        %1096 = vmatprep.subr.mxu0 0.0
        %1097 = vmatpush1.xpose.msra.mxu0 0.0
        %1098 = vmatprep.subr.mxu0 0.0
        %1099 = vmatpush1.xpose.msra.mxu0 0.0
        %1100 = vmatprep.subr.mxu0 0.0
        %1101 = vmatpush1.xpose.msra.mxu0 0.0
        %1102 = vmatprep.subr.mxu0 0.0
        %1103 = vmatpush1.xpose.msra.mxu0 0.0
        %1104 = vmatprep.subr.mxu0 0.0
        %1105 = vmatpush1.xpose.msra.mxu0 0.0
        %1106 = vmatprep.subr.mxu0 0.0
        %1107 = vmatpush1.xpose.msra.mxu0 0.0
        %1108 = vmatprep.subr.mxu0 0.0
        %1109 = vmatpush1.xpose.msra.mxu0 0.0
        %1110 = vmatprep.subr.mxu0 0.0
        %1111 = vmatpush1.xpose.msra.mxu0 0.0
        %1112 = vmatprep.subr.mxu0 0.0
        %1113 = vmatpush1.xpose.msra.mxu0 0.0
        %1114 = vmatprep.subr.mxu0 0.0
        %1115 = vmatpush1.xpose.msra.mxu0 0.0
        %1116 = vmatprep.subr.mxu0 0.0
        %1117 = vmatpush1.xpose.msra.mxu0 0.0
        %1118 = vmatprep.subr.mxu0 0.0
        %1119 = vmatpush1.xpose.msra.mxu0 0.0
        %1120 = vmatprep.subr.mxu0 0.0
        %1121 = vmatpush1.xpose.msra.mxu0 %v1088
        %1122 = vmatprep.subr.mxu0 0.0
        %1123 = vmatpush2.xpose.msra.mxu0 0.0
        %1124 = vmatprep.subr.mxu0 0.0
        %1125 = vmatpush2.xpose.msra.mxu0 0.0
        %1126 = vmatprep.subr.mxu0 0.0
        %1127 = vmatpush2.xpose.msra.mxu0 0.0
        %1128 = vmatprep.subr.mxu0 0.0
        %1129 = vmatpush2.xpose.msra.mxu0 0.0
        %1130 = vmatprep.subr.mxu0 0.0
        %1131 = vmatpush2.xpose.msra.mxu0 0.0
        %1132 = vmatprep.subr.mxu0 0.0
        %1133 = vmatpush2.xpose.msra.mxu0 0.0
        %1134 = vmatprep.subr.mxu0 0.0
        %1135 = vmatpush2.xpose.msra.mxu0 0.0
        %1136 = vmatprep.subr.mxu0 0.0
        %1137 = vmatpush2.xpose.msra.mxu0 0.0
        %1138 = vmatprep.subr.mxu0 0.0
        %1139 = vmatpush2.xpose.msra.mxu0 0.0
        %1140 = vmatprep.subr.mxu0 0.0
        %1141 = vmatpush2.xpose.msra.mxu0 0.0
        %1142 = vmatprep.subr.mxu0 0.0
        %1143 = vmatpush2.xpose.msra.mxu0 0.0
        %1144 = vmatprep.subr.mxu0 0.0
        %1145 = vmatpush2.xpose.msra.mxu0 0.0
        %1146 = vmatprep.subr.mxu0 0.0
        %1147 = vmatpush2.xpose.msra.mxu0 0.0
        %1148 = vmatprep.subr.mxu0 0.0
        %1149 = vmatpush2.xpose.msra.mxu0 0.0
        %1150 = vmatprep.subr.mxu0 0.0
        %1151 = vmatpush2.xpose.msra.mxu0 0.0
        %1152 = vmatprep.subr.mxu0 0.0
        %1153 = vmatpush2.xpose.msra.mxu0 0.0
        %1154 = vmatprep.mubr.f32.mxu0 0.0
        %1155 = vmatmul.mubr.f32.gmra.mxu0 %v1086
        %v1156 = vpop.f32.mrf.mxu0
        %v1157 = vadd.f32 %v625, %v1156
        %v1158 = vpop.f32.mrf.mxu0
        %1159 = vdwg.mxu0
        %v1160 = vsel %vm831, %v1157, -inf
        %1161 = vmax.xlane.f32.xlu0 %v1160
        %v1162 = vpop.xlane.xlu0 %1161
        %v1163 = vsub.f32 %v1157, %v1162
        %v1164 = vmul.f32 %v1163, 1.442695
        %v1165 = vpow.pop %v1164
        %v1166 = vsel %vm831, %v1165, 0.0
        %1167 = vadd.xlane.f32.xlu0 %v1166
        %v1168 = vpop.xlane.xlu0 %1167
        %v1169 = vrcp.pop %v1168
        %v1170 = vmul.f32 %v1165, %v1169
        %1171 = vrot.lane.b32.xlu0 %v751, 96
        %v1172 = vpop.permute.xlu0 %1171
        %v1175 = vsel %vm831, %v1170, 0
        %1177 = vmatprep.subr.mxu0 0.0
        %1178 = vmatpush1.msra.mxu0 0.0
        %1179 = vmatprep.subr.mxu0 0.0
        %1180 = vmatpush1.msra.mxu0 0.0
        %1181 = vmatprep.subr.mxu0 0.0
        %1182 = vmatpush1.msra.mxu0 0.0
        %1183 = vmatprep.subr.mxu0 0.0
        %1184 = vmatpush1.msra.mxu0 0.0
        %1185 = vmatprep.subr.mxu0 0.0
        %1186 = vmatpush1.msra.mxu0 0.0
        %1187 = vmatprep.subr.mxu0 0.0
        %1188 = vmatpush1.msra.mxu0 0.0
        %1189 = vmatprep.subr.mxu0 0.0
        %1190 = vmatpush1.msra.mxu0 0.0
        %1191 = vmatprep.subr.mxu0 0.0
        %1192 = vmatpush1.msra.mxu0 0.0
        %1193 = vmatprep.subr.mxu0 0.0
        %1194 = vmatpush1.msra.mxu0 0.0
        %1195 = vmatprep.subr.mxu0 0.0
        %1196 = vmatpush1.msra.mxu0 0.0
        %1197 = vmatprep.subr.mxu0 0.0
        %1198 = vmatpush1.msra.mxu0 0.0
        %1199 = vmatprep.subr.mxu0 0.0
        %1200 = vmatpush1.msra.mxu0 0.0
        %1201 = vmatprep.subr.mxu0 0.0
        %1202 = vmatpush1.msra.mxu0 0.0
        %1203 = vmatprep.subr.mxu0 0.0
        %1204 = vmatpush1.msra.mxu0 0.0
        %1205 = vmatprep.subr.mxu0 0.0
        %1206 = vmatpush1.msra.mxu0 0.0
        %1207 = vmatprep.subr.mxu0 0.0
        %1208 = vmatpush1.msra.mxu0 %v1172
        %1209 = vmatprep.subr.mxu0 0.0
        %1210 = vmatpush2.msra.mxu0 0.0
        %1211 = vmatprep.subr.mxu0 0.0
        %1212 = vmatpush2.msra.mxu0 0.0
        %1213 = vmatprep.subr.mxu0 0.0
        %1214 = vmatpush2.msra.mxu0 0.0
        %1215 = vmatprep.subr.mxu0 0.0
        %1216 = vmatpush2.msra.mxu0 0.0
        %1217 = vmatprep.subr.mxu0 0.0
        %1218 = vmatpush2.msra.mxu0 0.0
        %1219 = vmatprep.subr.mxu0 0.0
        %1220 = vmatpush2.msra.mxu0 0.0
        %1221 = vmatprep.subr.mxu0 0.0
        %1222 = vmatpush2.msra.mxu0 0.0
        %1223 = vmatprep.subr.mxu0 0.0
        %1224 = vmatpush2.msra.mxu0 0.0
        %1225 = vmatprep.subr.mxu0 0.0
        %1226 = vmatpush2.msra.mxu0 0.0
        %1227 = vmatprep.subr.mxu0 0.0
        %1228 = vmatpush2.msra.mxu0 0.0
        %1229 = vmatprep.subr.mxu0 0.0
        %1230 = vmatpush2.msra.mxu0 0.0
        %1231 = vmatprep.subr.mxu0 0.0
        %1232 = vmatpush2.msra.mxu0 0.0
        %1233 = vmatprep.subr.mxu0 0.0
        %1234 = vmatpush2.msra.mxu0 0.0
        %1235 = vmatprep.subr.mxu0 0.0
        %1236 = vmatpush2.msra.mxu0 0.0
        %1237 = vmatprep.subr.mxu0 0.0
        %1238 = vmatpush2.msra.mxu0 0.0
        %1239 = vmatprep.subr.mxu0 0.0
        %1240 = vmatpush2.msra.mxu0 0.0
        %1241 = vmatprep.mubr.f32.mxu0 0.0
        %1242 = vmatmul.mubr.f32.gmra.mxu0 %v1175
        %v1243 = vpop.f32.mrf.mxu0
        %v1244 = vadd.f32 0.0, %v1243
        %v1245 = vpop.f32.mrf.mxu0
        %1246 = vdwg.mxu0
        %1247 = vrot.lane.b32.xlu0 %v749, 80
        %v1248 = vpop.permute.xlu0 %1247
        %1249 = vrot.lane.b32.xlu0 %v749, 16
        %v1250 = vpop.permute.xlu0 %1249
        %v1251 = vsel %vm756, %v1248, 0
        %v1253 = vsel %vm756, %v1250, 0
        %1255 = vmatprep.subr.mxu0 0.0
        %1256 = vmatpush1.xpose.msra.mxu0 0.0
        %1257 = vmatprep.subr.mxu0 0.0
        %1258 = vmatpush1.xpose.msra.mxu0 0.0
        %1259 = vmatprep.subr.mxu0 0.0
        %1260 = vmatpush1.xpose.msra.mxu0 0.0
        %1261 = vmatprep.subr.mxu0 0.0
        %1262 = vmatpush1.xpose.msra.mxu0 0.0
        %1263 = vmatprep.subr.mxu0 0.0
        %1264 = vmatpush1.xpose.msra.mxu0 0.0
        %1265 = vmatprep.subr.mxu0 0.0
        %1266 = vmatpush1.xpose.msra.mxu0 0.0
        %1267 = vmatprep.subr.mxu0 0.0
        %1268 = vmatpush1.xpose.msra.mxu0 0.0
        %1269 = vmatprep.subr.mxu0 0.0
        %1270 = vmatpush1.xpose.msra.mxu0 0.0
        %1271 = vmatprep.subr.mxu0 0.0
        %1272 = vmatpush1.xpose.msra.mxu0 0.0
        %1273 = vmatprep.subr.mxu0 0.0
        %1274 = vmatpush1.xpose.msra.mxu0 0.0
        %1275 = vmatprep.subr.mxu0 0.0
        %1276 = vmatpush1.xpose.msra.mxu0 0.0
        %1277 = vmatprep.subr.mxu0 0.0
        %1278 = vmatpush1.xpose.msra.mxu0 0.0
        %1279 = vmatprep.subr.mxu0 0.0
        %1280 = vmatpush1.xpose.msra.mxu0 0.0
        %1281 = vmatprep.subr.mxu0 0.0
        %1282 = vmatpush1.xpose.msra.mxu0 0.0
        %1283 = vmatprep.subr.mxu0 0.0
        %1284 = vmatpush1.xpose.msra.mxu0 0.0
        %1285 = vmatprep.subr.mxu0 0.0
        %1286 = vmatpush1.xpose.msra.mxu0 %v1253
        %1287 = vmatprep.subr.mxu0 0.0
        %1288 = vmatpush2.xpose.msra.mxu0 0.0
        %1289 = vmatprep.subr.mxu0 0.0
        %1290 = vmatpush2.xpose.msra.mxu0 0.0
        %1291 = vmatprep.subr.mxu0 0.0
        %1292 = vmatpush2.xpose.msra.mxu0 0.0
        %1293 = vmatprep.subr.mxu0 0.0
        %1294 = vmatpush2.xpose.msra.mxu0 0.0
        %1295 = vmatprep.subr.mxu0 0.0
        %1296 = vmatpush2.xpose.msra.mxu0 0.0
        %1297 = vmatprep.subr.mxu0 0.0
        %1298 = vmatpush2.xpose.msra.mxu0 0.0
        %1299 = vmatprep.subr.mxu0 0.0
        %1300 = vmatpush2.xpose.msra.mxu0 0.0
        %1301 = vmatprep.subr.mxu0 0.0
        %1302 = vmatpush2.xpose.msra.mxu0 0.0
        %1303 = vmatprep.subr.mxu0 0.0
        %1304 = vmatpush2.xpose.msra.mxu0 0.0
        %1305 = vmatprep.subr.mxu0 0.0
        %1306 = vmatpush2.xpose.msra.mxu0 0.0
        %1307 = vmatprep.subr.mxu0 0.0
        %1308 = vmatpush2.xpose.msra.mxu0 0.0
        %1309 = vmatprep.subr.mxu0 0.0
        %1310 = vmatpush2.xpose.msra.mxu0 0.0
        %1311 = vmatprep.subr.mxu0 0.0
        %1312 = vmatpush2.xpose.msra.mxu0 0.0
        %1313 = vmatprep.subr.mxu0 0.0
        %1314 = vmatpush2.xpose.msra.mxu0 0.0
        %1315 = vmatprep.subr.mxu0 0.0
        %1316 = vmatpush2.xpose.msra.mxu0 0.0
        %1317 = vmatprep.subr.mxu0 0.0
        %1318 = vmatpush2.xpose.msra.mxu0 0.0
        %1319 = vmatprep.mubr.f32.mxu0 0.0
        %1320 = vmatmul.mubr.f32.gmra.mxu0 %v1251
        %v1321 = vpop.f32.mrf.mxu0
        %v1322 = vadd.f32 %v625, %v1321
        %v1323 = vpop.f32.mrf.mxu0
        %1324 = vdwg.mxu0
        %v1325 = vsel %vm831, %v1322, -inf
        %1326 = vmax.xlane.f32.xlu0 %v1325
        %v1327 = vpop.xlane.xlu0 %1326
        %v1328 = vsub.f32 %v1322, %v1327
        %v1329 = vmul.f32 %v1328, 1.442695
        %v1330 = vpow.pop %v1329
        %v1331 = vsel %vm831, %v1330, 0.0
        %1332 = vadd.xlane.f32.xlu0 %v1331
        %v1333 = vpop.xlane.xlu0 %1332
        %v1334 = vrcp.pop %v1333
        %v1335 = vmul.f32 %v1330, %v1334
        %1336 = vrot.lane.b32.xlu0 %v751, 80
        %v1337 = vpop.permute.xlu0 %1336
        %v1340 = vsel %vm831, %v1335, 0
        %1342 = vmatprep.subr.mxu0 0.0
        %1343 = vmatpush1.msra.mxu0 0.0
        %1344 = vmatprep.subr.mxu0 0.0
        %1345 = vmatpush1.msra.mxu0 0.0
        %1346 = vmatprep.subr.mxu0 0.0
        %1347 = vmatpush1.msra.mxu0 0.0
        %1348 = vmatprep.subr.mxu0 0.0
        %1349 = vmatpush1.msra.mxu0 0.0
        %1350 = vmatprep.subr.mxu0 0.0
        %1351 = vmatpush1.msra.mxu0 0.0
        %1352 = vmatprep.subr.mxu0 0.0
        %1353 = vmatpush1.msra.mxu0 0.0
        %1354 = vmatprep.subr.mxu0 0.0
        %1355 = vmatpush1.msra.mxu0 0.0
        %1356 = vmatprep.subr.mxu0 0.0
        %1357 = vmatpush1.msra.mxu0 0.0
        %1358 = vmatprep.subr.mxu0 0.0
        %1359 = vmatpush1.msra.mxu0 0.0
        %1360 = vmatprep.subr.mxu0 0.0
        %1361 = vmatpush1.msra.mxu0 0.0
        %1362 = vmatprep.subr.mxu0 0.0
        %1363 = vmatpush1.msra.mxu0 0.0
        %1364 = vmatprep.subr.mxu0 0.0
        %1365 = vmatpush1.msra.mxu0 0.0
        %1366 = vmatprep.subr.mxu0 0.0
        %1367 = vmatpush1.msra.mxu0 0.0
        %1368 = vmatprep.subr.mxu0 0.0
        %1369 = vmatpush1.msra.mxu0 0.0
        %1370 = vmatprep.subr.mxu0 0.0
        %1371 = vmatpush1.msra.mxu0 0.0
        %1372 = vmatprep.subr.mxu0 0.0
        %1373 = vmatpush1.msra.mxu0 %v1337
        %1374 = vmatprep.subr.mxu0 0.0
        %1375 = vmatpush2.msra.mxu0 0.0
        %1376 = vmatprep.subr.mxu0 0.0
        %1377 = vmatpush2.msra.mxu0 0.0
        %1378 = vmatprep.subr.mxu0 0.0
        %1379 = vmatpush2.msra.mxu0 0.0
        %1380 = vmatprep.subr.mxu0 0.0
        %1381 = vmatpush2.msra.mxu0 0.0
        %1382 = vmatprep.subr.mxu0 0.0
        %1383 = vmatpush2.msra.mxu0 0.0
        %1384 = vmatprep.subr.mxu0 0.0
        %1385 = vmatpush2.msra.mxu0 0.0
        %1386 = vmatprep.subr.mxu0 0.0
        %1387 = vmatpush2.msra.mxu0 0.0
        %1388 = vmatprep.subr.mxu0 0.0
        %1389 = vmatpush2.msra.mxu0 0.0
        %1390 = vmatprep.subr.mxu0 0.0
        %1391 = vmatpush2.msra.mxu0 0.0
        %1392 = vmatprep.subr.mxu0 0.0
        %1393 = vmatpush2.msra.mxu0 0.0
        %1394 = vmatprep.subr.mxu0 0.0
        %1395 = vmatpush2.msra.mxu0 0.0
        %1396 = vmatprep.subr.mxu0 0.0
        %1397 = vmatpush2.msra.mxu0 0.0
        %1398 = vmatprep.subr.mxu0 0.0
        %1399 = vmatpush2.msra.mxu0 0.0
        %1400 = vmatprep.subr.mxu0 0.0
        %1401 = vmatpush2.msra.mxu0 0.0
        %1402 = vmatprep.subr.mxu0 0.0
        %1403 = vmatpush2.msra.mxu0 0.0
        %1404 = vmatprep.subr.mxu0 0.0
        %1405 = vmatpush2.msra.mxu0 0.0
        %1406 = vmatprep.mubr.f32.mxu0 0.0
        %1407 = vmatmul.mubr.f32.gmra.mxu0 %v1340
        %v1408 = vpop.f32.mrf.mxu0
        %v1409 = vadd.f32 0.0, %v1408
        %v1410 = vpop.f32.mrf.mxu0
        %1411 = vdwg.mxu0
        %1413 = vrot.lane.b32.xlu0 %v1079, 16
        %v1414 = vpop.permute.xlu0 %1413
        %1417 = vrot.lane.b32.xlu0 %v1244, 32
        %v1418 = vpop.permute.xlu0 %1417
        %1421 = vrot.lane.b32.xlu0 %v1409, 48
        %v1422 = vpop.permute.xlu0 %1421
        %v1424 = vsel %vm756, %v913, %v1414
        %vm1425 = vcmask 261120
        %v1426 = vsel %vm1425, %v1424, %v1418
        %vm1427 = vcmask 392192
        %v1428 = vsel %vm1427, %v1426, %v1422
        %v1429 = vld [vmem:[%s5] sm:$0xff]
        %v1430 = vld [vmem:[%s5 + $0x8] sm:$0xff]
        %v1431 = vld [vmem:[%s5 + $0x10] sm:$0xff]
        %v1432 = vld [vmem:[%s5 + $0x18] sm:$0xff]
        %v1433 = vld [vmem:[%s5 + $0x20] sm:$0xff]
        %v1434 = vld [vmem:[%s5 + $0x28] sm:$0xff]
        %v1435 = vld [vmem:[%s5 + $0x30] sm:$0xff]
        %v1436 = vld [vmem:[%s5 + $0x38] sm:$0xff]
        %v1438 = vsel %vm523, %v1428, 0
        %1440 = vmatprep.subr.mxu0 0.0
        %1441 = vmatpush1.msra.mxu0 0.0
        %1442 = vmatprep.subr.mxu0 0.0
        %1443 = vmatpush1.msra.mxu0 0.0
        %1444 = vmatprep.subr.mxu0 0.0
        %1445 = vmatpush1.msra.mxu0 0.0
        %1446 = vmatprep.subr.mxu0 0.0
        %1447 = vmatpush1.msra.mxu0 0.0
        %1448 = vmatprep.subr.mxu0 0.0
        %1449 = vmatpush1.msra.mxu0 0.0
        %1450 = vmatprep.subr.mxu0 0.0
        %1451 = vmatpush1.msra.mxu0 0.0
        %1452 = vmatprep.subr.mxu0 0.0
        %1453 = vmatpush1.msra.mxu0 0.0
        %1454 = vmatprep.subr.mxu0 0.0
        %1455 = vmatpush1.msra.mxu0 0.0
        %1456 = vmatprep.subr.mxu0 0.0
        %1457 = vmatpush1.msra.mxu0 %v1436
        %1458 = vmatprep.subr.mxu0 0.0
        %1459 = vmatpush1.msra.mxu0 %v1435
        %1460 = vmatprep.subr.mxu0 0.0
        %1461 = vmatpush1.msra.mxu0 %v1434
        %1462 = vmatprep.subr.mxu0 0.0
        %1463 = vmatpush1.msra.mxu0 %v1433
        %1464 = vmatprep.subr.mxu0 0.0
        %1465 = vmatpush1.msra.mxu0 %v1432
        %1466 = vmatprep.subr.mxu0 0.0
        %1467 = vmatpush1.msra.mxu0 %v1431
        %1468 = vmatprep.subr.mxu0 0.0
        %1469 = vmatpush1.msra.mxu0 %v1430
        %1470 = vmatprep.subr.mxu0 0.0
        %1471 = vmatpush1.msra.mxu0 %v1429
        %1472 = vmatprep.subr.mxu0 0.0
        %1473 = vmatpush2.msra.mxu0 0.0
        %1474 = vmatprep.subr.mxu0 0.0
        %1475 = vmatpush2.msra.mxu0 0.0
        %1476 = vmatprep.subr.mxu0 0.0
        %1477 = vmatpush2.msra.mxu0 0.0
        %1478 = vmatprep.subr.mxu0 0.0
        %1479 = vmatpush2.msra.mxu0 0.0
        %1480 = vmatprep.subr.mxu0 0.0
        %1481 = vmatpush2.msra.mxu0 0.0
        %1482 = vmatprep.subr.mxu0 0.0
        %1483 = vmatpush2.msra.mxu0 0.0
        %1484 = vmatprep.subr.mxu0 0.0
        %1485 = vmatpush2.msra.mxu0 0.0
        %1486 = vmatprep.subr.mxu0 0.0
        %1487 = vmatpush2.msra.mxu0 0.0
        %1488 = vmatprep.subr.mxu0 0.0
        %1489 = vmatpush2.msra.mxu0 0.0
        %1490 = vmatprep.subr.mxu0 0.0
        %1491 = vmatpush2.msra.mxu0 0.0
        %1492 = vmatprep.subr.mxu0 0.0
        %1493 = vmatpush2.msra.mxu0 0.0
        %1494 = vmatprep.subr.mxu0 0.0
        %1495 = vmatpush2.msra.mxu0 0.0
        %1496 = vmatprep.subr.mxu0 0.0
        %1497 = vmatpush2.msra.mxu0 0.0
        %1498 = vmatprep.subr.mxu0 0.0
        %1499 = vmatpush2.msra.mxu0 0.0
        %1500 = vmatprep.subr.mxu0 0.0
        %1501 = vmatpush2.msra.mxu0 0.0
        %1502 = vmatprep.subr.mxu0 0.0
        %1503 = vmatpush2.msra.mxu0 0.0
        %1504 = vmatprep.mubr.f32.mxu0 0.0
        %1505 = vmatmul.mubr.f32.gmra.mxu0 %v1438
        %v1506 = vpop.f32.mrf.mxu0
        %v1507 = vadd.f32 0.0, %v1506
        %v1508 = vpop.f32.mrf.mxu0
        %1509 = vdwg.mxu0
        %v1510 = vadd.f32 %v621, %v1507
        %v1511 = vlaneseq
        %v1512 = vshrl.u32 %v1511, 7
        %v1513 = vsub.s32 4, %v1512
        %v1514 = vrot.slane %v626, %v1513
        %v1515 = vadd.f32 %v1510, %v1514
        %v1516 = vsel %vm523, %v1515, 0.0
        %1517 = vadd.xlane.f32.xlu0 %v1516
        %v1518 = vpop.xlane.xlu0 %1517
        %v1519 = vmul.f32 %v1518, %v601
        %v1520 = vsub.f32 %v1515, %v1519
        %v1521 = vmul.f32 %v1520, %v1520
        %v1522 = vsel %vm523, %v1521, 0.0
        %1523 = vadd.xlane.f32.xlu0 %v1522
        %v1524 = vpop.xlane.xlu0 %1523
        %v1525 = vmul.f32 %v1524, %v601
        %v1526 = vadd.f32 %v1525, 1e-05
        %v1527 = vrsqrt.pop %v1526
        %v1528 = vmul.f32 %v1520, %v1527
        %v1529 = vlaneseq
        %v1530 = vshrl.u32 %v1529, 7
        %v1531 = vsub.s32 2, %v1530
        %v1532 = vrot.slane %v626, %v1531
        %v1533 = vmul.f32 %v1528, %v1532
        %v1534 = vlaneseq
        %v1535 = vshrl.u32 %v1534, 7
        %v1536 = vsub.s32 3, %v1535
        %v1537 = vrot.slane %v626, %v1536
        %v1538 = vadd.f32 %v1533, %v1537
        %v1539 = vld [vmem:[%s7] sm:$0xff]
        %v1540 = vld [vmem:[%s7 + $0x8] sm:$0xff]
        %v1541 = vld [vmem:[%s7 + $0x10] sm:$0xff]
        %v1542 = vld [vmem:[%s7 + $0x18] sm:$0xff]
        %v1543 = vld [vmem:[%s7 + $0x20] sm:$0xff]
        %v1544 = vld [vmem:[%s7 + $0x28] sm:$0xff]
        %v1545 = vld [vmem:[%s7 + $0x30] sm:$0xff]
        %v1546 = vld [vmem:[%s7 + $0x38] sm:$0xff]
        %v1547 = vld [vmem:[%s7 + $0x40] sm:$0xff]
        %v1548 = vld [vmem:[%s7 + $0x48] sm:$0xff]
        %v1549 = vld [vmem:[%s7 + $0x50] sm:$0xff]
        %v1550 = vld [vmem:[%s7 + $0x58] sm:$0xff]
        %v1551 = vld [vmem:[%s7 + $0x60] sm:$0xff]
        %v1552 = vld [vmem:[%s7 + $0x68] sm:$0xff]
        %v1553 = vld [vmem:[%s7 + $0x70] sm:$0xff]
        %v1554 = vld [vmem:[%s7 + $0x78] sm:$0xff]
        %v1556 = vlaneseq
        %v1557 = vshrl.u32 %v1556, 7
        %v1558 = vsub.s32 0, %v1557
        %v1559 = vrot.slane %v628, %v1558
        %v1560 = vlaneseq
        %v1561 = vshrl.u32 %v1560, 7
        %v1562 = vsub.s32 1, %v1561
        %v1563 = vrot.slane %v628, %v1562
        %v1567 = vsel %vm523, %v1538, 0
        %1569 = vmatprep.subr.mxu0 0.0
        %1570 = vmatpush1.msra.mxu0 0.0
        %1571 = vmatprep.subr.mxu0 0.0
        %1572 = vmatpush1.msra.mxu0 0.0
        %1573 = vmatprep.subr.mxu0 0.0
        %1574 = vmatpush1.msra.mxu0 0.0
        %1575 = vmatprep.subr.mxu0 0.0
        %1576 = vmatpush1.msra.mxu0 0.0
        %1577 = vmatprep.subr.mxu0 0.0
        %1578 = vmatpush1.msra.mxu0 0.0
        %1579 = vmatprep.subr.mxu0 0.0
        %1580 = vmatpush1.msra.mxu0 0.0
        %1581 = vmatprep.subr.mxu0 0.0
        %1582 = vmatpush1.msra.mxu0 0.0
        %1583 = vmatprep.subr.mxu0 0.0
        %1584 = vmatpush1.msra.mxu0 0.0
        %1585 = vmatprep.subr.mxu0 %v1554
        %1586 = vmatpush1.msra.mxu0 %v1553
        %1587 = vmatprep.subr.mxu0 %v1552
        %1588 = vmatpush1.msra.mxu0 %v1551
        %1589 = vmatprep.subr.mxu0 %v1550
        %1590 = vmatpush1.msra.mxu0 %v1549
        %1591 = vmatprep.subr.mxu0 %v1548
        %1592 = vmatpush1.msra.mxu0 %v1547
        %1593 = vmatprep.subr.mxu0 %v1546
        %1594 = vmatpush1.msra.mxu0 %v1545
        %1595 = vmatprep.subr.mxu0 %v1544
        %1596 = vmatpush1.msra.mxu0 %v1543
        %1597 = vmatprep.subr.mxu0 %v1542
        %1598 = vmatpush1.msra.mxu0 %v1541
        %1599 = vmatprep.subr.mxu0 %v1540
        %1600 = vmatpush1.msra.mxu0 %v1539
        %1601 = vmatprep.subr.mxu0 0.0
        %1602 = vmatpush2.msra.mxu0 0.0
        %1603 = vmatprep.subr.mxu0 0.0
        %1604 = vmatpush2.msra.mxu0 0.0
        %1605 = vmatprep.subr.mxu0 0.0
        %1606 = vmatpush2.msra.mxu0 0.0
        %1607 = vmatprep.subr.mxu0 0.0
        %1608 = vmatpush2.msra.mxu0 0.0
        %1609 = vmatprep.subr.mxu0 0.0
        %1610 = vmatpush2.msra.mxu0 0.0
        %1611 = vmatprep.subr.mxu0 0.0
        %1612 = vmatpush2.msra.mxu0 0.0
        %1613 = vmatprep.subr.mxu0 0.0
        %1614 = vmatpush2.msra.mxu0 0.0
        %1615 = vmatprep.subr.mxu0 0.0
        %1616 = vmatpush2.msra.mxu0 0.0
        %1617 = vmatprep.subr.mxu0 0.0
        %1618 = vmatpush2.msra.mxu0 0.0
        %1619 = vmatprep.subr.mxu0 0.0
        %1620 = vmatpush2.msra.mxu0 0.0
        %1621 = vmatprep.subr.mxu0 0.0
        %1622 = vmatpush2.msra.mxu0 0.0
        %1623 = vmatprep.subr.mxu0 0.0
        %1624 = vmatpush2.msra.mxu0 0.0
        %1625 = vmatprep.subr.mxu0 0.0
        %1626 = vmatpush2.msra.mxu0 0.0
        %1627 = vmatprep.subr.mxu0 0.0
        %1628 = vmatpush2.msra.mxu0 0.0
        %1629 = vmatprep.subr.mxu0 0.0
        %1630 = vmatpush2.msra.mxu0 0.0
        %1631 = vmatprep.subr.mxu0 0.0
        %1632 = vmatpush2.msra.mxu0 0.0
        %1633 = vmatprep.mubr.f32.mxu0 0.0
        %1634 = vmatmul.mubr.f32.gmra.mxu0 %v1567
        %v1635 = vpop.f32.mrf.mxu0
        %v1636 = vadd.f32 %v1559, %v1635
        %v1637 = vpop.f32.mrf.mxu0
        %v1638 = vadd.f32 %v1563, %v1637
        %1639 = vdwg.mxu0
        %v1640 = vmul.f32 %v1636, %v1636
        %v1641 = vmul.f32 %v1638, %v1638
        %v1642 = vmul.f32 %v1636, %v1640
        %v1643 = vmul.f32 %v1638, %v1641
        %v1644 = vmul.f32 %v1642, 0.044715
        %v1645 = vmul.f32 %v1643, 0.044715
        %v1646 = vadd.f32 %v1636, %v1644
        %v1647 = vadd.f32 %v1638, %v1645
        %v1648 = vmul.f32 %v1646, 0.7978846
        %v1649 = vmul.f32 %v1647, 0.7978846
        %v1650 = vtanh.pop %v1648
        %v1651 = vtanh.pop %v1649
        %v1652 = vadd.f32 %v1650, 1.0
        %v1653 = vadd.f32 %v1651, 1.0
        %v1654 = vmul.f32 %v1652, 0.5
        %v1655 = vmul.f32 %v1653, 0.5
        %v1656 = vmul.f32 %v1636, %v1654
        %v1657 = vmul.f32 %v1638, %v1655
        %v1658 = vld [vmem:[%s9] sm:$0xff]
        %v1659 = vld [vmem:[%s9 + $0x8] sm:$0xff]
        %v1660 = vld [vmem:[%s9 + $0x10] sm:$0xff]
        %v1661 = vld [vmem:[%s9 + $0x18] sm:$0xff]
        %v1662 = vld [vmem:[%s9 + $0x20] sm:$0xff]
        %v1663 = vld [vmem:[%s9 + $0x28] sm:$0xff]
        %v1664 = vld [vmem:[%s9 + $0x30] sm:$0xff]
        %v1665 = vld [vmem:[%s9 + $0x38] sm:$0xff]
        %v1666 = vld [vmem:[%s9 + $0x40] sm:$0xff]
        %v1667 = vld [vmem:[%s9 + $0x48] sm:$0xff]
        %v1668 = vld [vmem:[%s9 + $0x50] sm:$0xff]
        %v1669 = vld [vmem:[%s9 + $0x58] sm:$0xff]
        %v1670 = vld [vmem:[%s9 + $0x60] sm:$0xff]
        %v1671 = vld [vmem:[%s9 + $0x68] sm:$0xff]
        %v1672 = vld [vmem:[%s9 + $0x70] sm:$0xff]
        %v1673 = vld [vmem:[%s9 + $0x78] sm:$0xff]
        %v1674 = vld [vmem:[%s9 + $0x80] sm:$0xff]
        %v1675 = vld [vmem:[%s9 + $0x88] sm:$0xff]
        %v1676 = vld [vmem:[%s9 + $0x90] sm:$0xff]
        %v1677 = vld [vmem:[%s9 + $0x98] sm:$0xff]
        %v1678 = vld [vmem:[%s9 + $0xa0] sm:$0xff]
        %v1679 = vld [vmem:[%s9 + $0xa8] sm:$0xff]
        %v1680 = vld [vmem:[%s9 + $0xb0] sm:$0xff]
        %v1681 = vld [vmem:[%s9 + $0xb8] sm:$0xff]
        %v1682 = vld [vmem:[%s9 + $0xc0] sm:$0xff]
        %v1683 = vld [vmem:[%s9 + $0xc8] sm:$0xff]
        %v1684 = vld [vmem:[%s9 + $0xd0] sm:$0xff]
        %v1685 = vld [vmem:[%s9 + $0xd8] sm:$0xff]
        %v1686 = vld [vmem:[%s9 + $0xe0] sm:$0xff]
        %v1687 = vld [vmem:[%s9 + $0xe8] sm:$0xff]
        %v1688 = vld [vmem:[%s9 + $0xf0] sm:$0xff]
        %v1689 = vld [vmem:[%s9 + $0xf8] sm:$0xff]
        %1690 = vmatprep.subr.mxu0 0.0
        %1691 = vmatpush1.msra.mxu0 %v1673
        %1692 = vmatprep.subr.mxu0 0.0
        %1693 = vmatpush1.msra.mxu0 %v1672
        %1694 = vmatprep.subr.mxu0 0.0
        %1695 = vmatpush1.msra.mxu0 %v1671
        %1696 = vmatprep.subr.mxu0 0.0
        %1697 = vmatpush1.msra.mxu0 %v1670
        %1698 = vmatprep.subr.mxu0 0.0
        %1699 = vmatpush1.msra.mxu0 %v1669
        %1700 = vmatprep.subr.mxu0 0.0
        %1701 = vmatpush1.msra.mxu0 %v1668
        %1702 = vmatprep.subr.mxu0 0.0
        %1703 = vmatpush1.msra.mxu0 %v1667
        %1704 = vmatprep.subr.mxu0 0.0
        %1705 = vmatpush1.msra.mxu0 %v1666
        %1706 = vmatprep.subr.mxu0 0.0
        %1707 = vmatpush1.msra.mxu0 %v1665
        %1708 = vmatprep.subr.mxu0 0.0
        %1709 = vmatpush1.msra.mxu0 %v1664
        %1710 = vmatprep.subr.mxu0 0.0
        %1711 = vmatpush1.msra.mxu0 %v1663
        %1712 = vmatprep.subr.mxu0 0.0
        %1713 = vmatpush1.msra.mxu0 %v1662
        %1714 = vmatprep.subr.mxu0 0.0
        %1715 = vmatpush1.msra.mxu0 %v1661
        %1716 = vmatprep.subr.mxu0 0.0
        %1717 = vmatpush1.msra.mxu0 %v1660
        %1718 = vmatprep.subr.mxu0 0.0
        %1719 = vmatpush1.msra.mxu0 %v1659
        %1720 = vmatprep.subr.mxu0 0.0
        %1721 = vmatpush1.msra.mxu0 %v1658
        %1722 = vmatprep.subr.mxu0 0.0
        %1723 = vmatpush2.msra.mxu0 %v1689
        %1724 = vmatprep.subr.mxu0 0.0
        %1725 = vmatpush2.msra.mxu0 %v1688
        %1726 = vmatprep.subr.mxu0 0.0
        %1727 = vmatpush2.msra.mxu0 %v1687
        %1728 = vmatprep.subr.mxu0 0.0
        %1729 = vmatpush2.msra.mxu0 %v1686
        %1730 = vmatprep.subr.mxu0 0.0
        %1731 = vmatpush2.msra.mxu0 %v1685
        %1732 = vmatprep.subr.mxu0 0.0
        %1733 = vmatpush2.msra.mxu0 %v1684
        %1734 = vmatprep.subr.mxu0 0.0
        %1735 = vmatpush2.msra.mxu0 %v1683
        %1736 = vmatprep.subr.mxu0 0.0
        %1737 = vmatpush2.msra.mxu0 %v1682
        %1738 = vmatprep.subr.mxu0 0.0
        %1739 = vmatpush2.msra.mxu0 %v1681
        %1740 = vmatprep.subr.mxu0 0.0
        %1741 = vmatpush2.msra.mxu0 %v1680
        %1742 = vmatprep.subr.mxu0 0.0
        %1743 = vmatpush2.msra.mxu0 %v1679
        %1744 = vmatprep.subr.mxu0 0.0
        %1745 = vmatpush2.msra.mxu0 %v1678
        %1746 = vmatprep.subr.mxu0 0.0
        %1747 = vmatpush2.msra.mxu0 %v1677
        %1748 = vmatprep.subr.mxu0 0.0
        %1749 = vmatpush2.msra.mxu0 %v1676
        %1750 = vmatprep.subr.mxu0 0.0
        %1751 = vmatpush2.msra.mxu0 %v1675
        %1752 = vmatprep.subr.mxu0 0.0
        %1753 = vmatpush2.msra.mxu0 %v1674
        %1754 = vmatprep.mubr.f32.mxu0 %v1657
        %1755 = vmatmul.mubr.f32.gmra.mxu0 %v1656
        %v1756 = vpop.f32.mrf.mxu0
        %v1757 = vadd.f32 0.0, %v1756
        %v1758 = vpop.f32.mrf.mxu0
        %1759 = vdwg.mxu0
        %v1760 = vadd.f32 %v1515, %v1757
        %v1761 = vlaneseq
        %v1762 = vshrl.u32 %v1761, 7
        %v1763 = vsub.s32 5, %v1762
        %v1764 = vrot.slane %v626, %v1763
        %v1765 = vadd.f32 %v1760, %v1764
        %s1766 = scalar_lea.vmem %s6, 8
        %v1767 = vld [vmem:[%s1766] sm:$0xff]
        %s1768 = scalar_lea.vmem %s4, 2
        %v1769 = vld [vmem:[%s1768] sm:$0x3]
        %s1770 = scalar_lea.vmem %s8, 2
        %v1771 = vld [vmem:[%s1770] sm:$0x3]
        %v1772 = vsel %vm523, %v1765, 0.0
        %1773 = vadd.xlane.f32.xlu0 %v1772
        %v1774 = vpop.xlane.xlu0 %1773
        %v1775 = vmul.f32 %v1774, %v601
        %v1776 = vsub.f32 %v1765, %v1775
        %v1777 = vmul.f32 %v1776, %v1776
        %v1778 = vsel %vm523, %v1777, 0.0
        %1779 = vadd.xlane.f32.xlu0 %v1778
        %v1780 = vpop.xlane.xlu0 %1779
        %v1781 = vmul.f32 %v1780, %v601
        %v1782 = vadd.f32 %v1781, 1e-05
        %v1783 = vrsqrt.pop %v1782
        %v1784 = vmul.f32 %v1776, %v1783
        %v1785 = vlaneseq
        %v1786 = vshrl.u32 %v1785, 7
        %v1787 = vsub.s32 0, %v1786
        %v1788 = vrot.slane %v1767, %v1787
        %v1789 = vmul.f32 %v1784, %v1788
        %v1790 = vlaneseq
        %v1791 = vshrl.u32 %v1790, 7
        %v1792 = vsub.s32 1, %v1791
        %v1793 = vrot.slane %v1767, %v1792
        %v1794 = vadd.f32 %v1789, %v1793
        %s1795 = scalar_lea.vmem %s3, 128
        %v1796 = vld [vmem:[%s1795] sm:$0xff]
        %v1797 = vld [vmem:[%s1795 + $0x8] sm:$0xff]
        %v1798 = vld [vmem:[%s1795 + $0x10] sm:$0xff]
        %v1799 = vld [vmem:[%s1795 + $0x18] sm:$0xff]
        %v1800 = vld [vmem:[%s1795 + $0x20] sm:$0xff]
        %v1801 = vld [vmem:[%s1795 + $0x28] sm:$0xff]
        %v1802 = vld [vmem:[%s1795 + $0x30] sm:$0xff]
        %v1803 = vld [vmem:[%s1795 + $0x38] sm:$0xff]
        %v1804 = vld [vmem:[%s1795 + $0x40] sm:$0xff]
        %v1805 = vld [vmem:[%s1795 + $0x48] sm:$0xff]
        %v1806 = vld [vmem:[%s1795 + $0x50] sm:$0xff]
        %v1807 = vld [vmem:[%s1795 + $0x58] sm:$0xff]
        %v1808 = vld [vmem:[%s1795 + $0x60] sm:$0xff]
        %v1809 = vld [vmem:[%s1795 + $0x68] sm:$0xff]
        %v1810 = vld [vmem:[%s1795 + $0x70] sm:$0xff]
        %v1811 = vld [vmem:[%s1795 + $0x78] sm:$0xff]
        %v1813 = vlaneseq
        %v1814 = vshrl.u32 %v1813, 7
        %v1815 = vsub.s32 0, %v1814
        %v1816 = vrot.slane %v1769, %v1815
        %v1817 = vlaneseq
        %v1818 = vshrl.u32 %v1817, 7
        %v1819 = vsub.s32 1, %v1818
        %v1820 = vrot.slane %v1769, %v1819
        %v1824 = vsel %vm523, %v1794, 0
        %1826 = vmatprep.subr.mxu0 0.0
        %1827 = vmatpush1.msra.mxu0 0.0
        %1828 = vmatprep.subr.mxu0 0.0
        %1829 = vmatpush1.msra.mxu0 0.0
        %1830 = vmatprep.subr.mxu0 0.0
        %1831 = vmatpush1.msra.mxu0 0.0
        %1832 = vmatprep.subr.mxu0 0.0
        %1833 = vmatpush1.msra.mxu0 0.0
        %1834 = vmatprep.subr.mxu0 0.0
        %1835 = vmatpush1.msra.mxu0 0.0
        %1836 = vmatprep.subr.mxu0 0.0
        %1837 = vmatpush1.msra.mxu0 0.0
        %1838 = vmatprep.subr.mxu0 0.0
        %1839 = vmatpush1.msra.mxu0 0.0
        %1840 = vmatprep.subr.mxu0 0.0
        %1841 = vmatpush1.msra.mxu0 0.0
        %1842 = vmatprep.subr.mxu0 %v1811
        %1843 = vmatpush1.msra.mxu0 %v1810
        %1844 = vmatprep.subr.mxu0 %v1809
        %1845 = vmatpush1.msra.mxu0 %v1808
        %1846 = vmatprep.subr.mxu0 %v1807
        %1847 = vmatpush1.msra.mxu0 %v1806
        %1848 = vmatprep.subr.mxu0 %v1805
        %1849 = vmatpush1.msra.mxu0 %v1804
        %1850 = vmatprep.subr.mxu0 %v1803
        %1851 = vmatpush1.msra.mxu0 %v1802
        %1852 = vmatprep.subr.mxu0 %v1801
        %1853 = vmatpush1.msra.mxu0 %v1800
        %1854 = vmatprep.subr.mxu0 %v1799
        %1855 = vmatpush1.msra.mxu0 %v1798
        %1856 = vmatprep.subr.mxu0 %v1797
        %1857 = vmatpush1.msra.mxu0 %v1796
        %1858 = vmatprep.subr.mxu0 0.0
        %1859 = vmatpush2.msra.mxu0 0.0
        %1860 = vmatprep.subr.mxu0 0.0
        %1861 = vmatpush2.msra.mxu0 0.0
        %1862 = vmatprep.subr.mxu0 0.0
        %1863 = vmatpush2.msra.mxu0 0.0
        %1864 = vmatprep.subr.mxu0 0.0
        %1865 = vmatpush2.msra.mxu0 0.0
        %1866 = vmatprep.subr.mxu0 0.0
        %1867 = vmatpush2.msra.mxu0 0.0
        %1868 = vmatprep.subr.mxu0 0.0
        %1869 = vmatpush2.msra.mxu0 0.0
        %1870 = vmatprep.subr.mxu0 0.0
        %1871 = vmatpush2.msra.mxu0 0.0
        %1872 = vmatprep.subr.mxu0 0.0
        %1873 = vmatpush2.msra.mxu0 0.0
        %1874 = vmatprep.subr.mxu0 0.0
        %1875 = vmatpush2.msra.mxu0 0.0
        %1876 = vmatprep.subr.mxu0 0.0
        %1877 = vmatpush2.msra.mxu0 0.0
        %1878 = vmatprep.subr.mxu0 0.0
        %1879 = vmatpush2.msra.mxu0 0.0
        %1880 = vmatprep.subr.mxu0 0.0
        %1881 = vmatpush2.msra.mxu0 0.0
        %1882 = vmatprep.subr.mxu0 0.0
        %1883 = vmatpush2.msra.mxu0 0.0
        %1884 = vmatprep.subr.mxu0 0.0
        %1885 = vmatpush2.msra.mxu0 0.0
        %1886 = vmatprep.subr.mxu0 0.0
        %1887 = vmatpush2.msra.mxu0 0.0
        %1888 = vmatprep.subr.mxu0 0.0
        %1889 = vmatpush2.msra.mxu0 0.0
        %1890 = vmatprep.mubr.f32.mxu0 0.0
        %1891 = vmatmul.mubr.f32.gmra.mxu0 %v1824
        %v1892 = vpop.f32.mrf.mxu0
        %v1893 = vadd.f32 %v1816, %v1892
        %v1894 = vpop.f32.mrf.mxu0
        %v1895 = vadd.f32 %v1820, %v1894
        %1896 = vdwg.mxu0
        %1898 = vrot.lane.b32.xlu0 %v1893, 64
        %v1899 = vpop.permute.xlu0 %1898
        %v1900 = vsel %vm756, %v1893, 0
        %v1902 = vsel %vm756, %v1899, 0
        %1904 = vmatprep.subr.mxu0 0.0
        %1905 = vmatpush1.xpose.msra.mxu0 0.0
        %1906 = vmatprep.subr.mxu0 0.0
        %1907 = vmatpush1.xpose.msra.mxu0 0.0
        %1908 = vmatprep.subr.mxu0 0.0
        %1909 = vmatpush1.xpose.msra.mxu0 0.0
        %1910 = vmatprep.subr.mxu0 0.0
        %1911 = vmatpush1.xpose.msra.mxu0 0.0
        %1912 = vmatprep.subr.mxu0 0.0
        %1913 = vmatpush1.xpose.msra.mxu0 0.0
        %1914 = vmatprep.subr.mxu0 0.0
        %1915 = vmatpush1.xpose.msra.mxu0 0.0
        %1916 = vmatprep.subr.mxu0 0.0
        %1917 = vmatpush1.xpose.msra.mxu0 0.0
        %1918 = vmatprep.subr.mxu0 0.0
        %1919 = vmatpush1.xpose.msra.mxu0 0.0
        %1920 = vmatprep.subr.mxu0 0.0
        %1921 = vmatpush1.xpose.msra.mxu0 0.0
        %1922 = vmatprep.subr.mxu0 0.0
        %1923 = vmatpush1.xpose.msra.mxu0 0.0
        %1924 = vmatprep.subr.mxu0 0.0
        %1925 = vmatpush1.xpose.msra.mxu0 0.0
        %1926 = vmatprep.subr.mxu0 0.0
        %1927 = vmatpush1.xpose.msra.mxu0 0.0
        %1928 = vmatprep.subr.mxu0 0.0
        %1929 = vmatpush1.xpose.msra.mxu0 0.0
        %1930 = vmatprep.subr.mxu0 0.0
        %1931 = vmatpush1.xpose.msra.mxu0 0.0
        %1932 = vmatprep.subr.mxu0 0.0
        %1933 = vmatpush1.xpose.msra.mxu0 0.0
        %1934 = vmatprep.subr.mxu0 0.0
        %1935 = vmatpush1.xpose.msra.mxu0 %v1902
        %1936 = vmatprep.subr.mxu0 0.0
        %1937 = vmatpush2.xpose.msra.mxu0 0.0
        %1938 = vmatprep.subr.mxu0 0.0
        %1939 = vmatpush2.xpose.msra.mxu0 0.0
        %1940 = vmatprep.subr.mxu0 0.0
        %1941 = vmatpush2.xpose.msra.mxu0 0.0
        %1942 = vmatprep.subr.mxu0 0.0
        %1943 = vmatpush2.xpose.msra.mxu0 0.0
        %1944 = vmatprep.subr.mxu0 0.0
        %1945 = vmatpush2.xpose.msra.mxu0 0.0
        %1946 = vmatprep.subr.mxu0 0.0
        %1947 = vmatpush2.xpose.msra.mxu0 0.0
        %1948 = vmatprep.subr.mxu0 0.0
        %1949 = vmatpush2.xpose.msra.mxu0 0.0
        %1950 = vmatprep.subr.mxu0 0.0
        %1951 = vmatpush2.xpose.msra.mxu0 0.0
        %1952 = vmatprep.subr.mxu0 0.0
        %1953 = vmatpush2.xpose.msra.mxu0 0.0
        %1954 = vmatprep.subr.mxu0 0.0
        %1955 = vmatpush2.xpose.msra.mxu0 0.0
        %1956 = vmatprep.subr.mxu0 0.0
        %1957 = vmatpush2.xpose.msra.mxu0 0.0
        %1958 = vmatprep.subr.mxu0 0.0
        %1959 = vmatpush2.xpose.msra.mxu0 0.0
        %1960 = vmatprep.subr.mxu0 0.0
        %1961 = vmatpush2.xpose.msra.mxu0 0.0
        %1962 = vmatprep.subr.mxu0 0.0
        %1963 = vmatpush2.xpose.msra.mxu0 0.0
        %1964 = vmatprep.subr.mxu0 0.0
        %1965 = vmatpush2.xpose.msra.mxu0 0.0
        %1966 = vmatprep.subr.mxu0 0.0
        %1967 = vmatpush2.xpose.msra.mxu0 0.0
        %1968 = vmatprep.mubr.f32.mxu0 0.0
        %1969 = vmatmul.mubr.f32.gmra.mxu0 %v1900
        %v1970 = vpop.f32.mrf.mxu0
        %v1971 = vadd.f32 %v625, %v1970
        %v1972 = vpop.f32.mrf.mxu0
        %1973 = vdwg.mxu0
        %v1974 = vsel %vm831, %v1971, -inf
        %1975 = vmax.xlane.f32.xlu0 %v1974
        %v1976 = vpop.xlane.xlu0 %1975
        %v1977 = vsub.f32 %v1971, %v1976
        %v1978 = vmul.f32 %v1977, 1.442695
        %v1979 = vpow.pop %v1978
        %v1980 = vsel %vm831, %v1979, 0.0
        %1981 = vadd.xlane.f32.xlu0 %v1980
        %v1982 = vpop.xlane.xlu0 %1981
        %v1983 = vrcp.pop %v1982
        %v1984 = vmul.f32 %v1979, %v1983
        %v1986 = vsel %vm831, %v1984, 0
        %1988 = vmatprep.subr.mxu0 0.0
        %1989 = vmatpush1.msra.mxu0 0.0
        %1990 = vmatprep.subr.mxu0 0.0
        %1991 = vmatpush1.msra.mxu0 0.0
        %1992 = vmatprep.subr.mxu0 0.0
        %1993 = vmatpush1.msra.mxu0 0.0
        %1994 = vmatprep.subr.mxu0 0.0
        %1995 = vmatpush1.msra.mxu0 0.0
        %1996 = vmatprep.subr.mxu0 0.0
        %1997 = vmatpush1.msra.mxu0 0.0
        %1998 = vmatprep.subr.mxu0 0.0
        %1999 = vmatpush1.msra.mxu0 0.0
        %2000 = vmatprep.subr.mxu0 0.0
        %2001 = vmatpush1.msra.mxu0 0.0
        %2002 = vmatprep.subr.mxu0 0.0
        %2003 = vmatpush1.msra.mxu0 0.0
        %2004 = vmatprep.subr.mxu0 0.0
        %2005 = vmatpush1.msra.mxu0 0.0
        %2006 = vmatprep.subr.mxu0 0.0
        %2007 = vmatpush1.msra.mxu0 0.0
        %2008 = vmatprep.subr.mxu0 0.0
        %2009 = vmatpush1.msra.mxu0 0.0
        %2010 = vmatprep.subr.mxu0 0.0
        %2011 = vmatpush1.msra.mxu0 0.0
        %2012 = vmatprep.subr.mxu0 0.0
        %2013 = vmatpush1.msra.mxu0 0.0
        %2014 = vmatprep.subr.mxu0 0.0
        %2015 = vmatpush1.msra.mxu0 0.0
        %2016 = vmatprep.subr.mxu0 0.0
        %2017 = vmatpush1.msra.mxu0 0.0
        %2018 = vmatprep.subr.mxu0 0.0
        %2019 = vmatpush1.msra.mxu0 %v1895
        %2020 = vmatprep.subr.mxu0 0.0
        %2021 = vmatpush2.msra.mxu0 0.0
        %2022 = vmatprep.subr.mxu0 0.0
        %2023 = vmatpush2.msra.mxu0 0.0
        %2024 = vmatprep.subr.mxu0 0.0
        %2025 = vmatpush2.msra.mxu0 0.0
        %2026 = vmatprep.subr.mxu0 0.0
        %2027 = vmatpush2.msra.mxu0 0.0
        %2028 = vmatprep.subr.mxu0 0.0
        %2029 = vmatpush2.msra.mxu0 0.0
        %2030 = vmatprep.subr.mxu0 0.0
        %2031 = vmatpush2.msra.mxu0 0.0
        %2032 = vmatprep.subr.mxu0 0.0
        %2033 = vmatpush2.msra.mxu0 0.0
        %2034 = vmatprep.subr.mxu0 0.0
        %2035 = vmatpush2.msra.mxu0 0.0
        %2036 = vmatprep.subr.mxu0 0.0
        %2037 = vmatpush2.msra.mxu0 0.0
        %2038 = vmatprep.subr.mxu0 0.0
        %2039 = vmatpush2.msra.mxu0 0.0
        %2040 = vmatprep.subr.mxu0 0.0
        %2041 = vmatpush2.msra.mxu0 0.0
        %2042 = vmatprep.subr.mxu0 0.0
        %2043 = vmatpush2.msra.mxu0 0.0
        %2044 = vmatprep.subr.mxu0 0.0
        %2045 = vmatpush2.msra.mxu0 0.0
        %2046 = vmatprep.subr.mxu0 0.0
        %2047 = vmatpush2.msra.mxu0 0.0
        %2048 = vmatprep.subr.mxu0 0.0
        %2049 = vmatpush2.msra.mxu0 0.0
        %2050 = vmatprep.subr.mxu0 0.0
        %2051 = vmatpush2.msra.mxu0 0.0
        %2052 = vmatprep.mubr.f32.mxu0 0.0
        %2053 = vmatmul.mubr.f32.gmra.mxu0 %v1986
        %v2054 = vpop.f32.mrf.mxu0
        %v2055 = vadd.f32 0.0, %v2054
        %v2056 = vpop.f32.mrf.mxu0
        %2057 = vdwg.mxu0
        %2058 = vrot.lane.b32.xlu0 %v1893, 112
        %v2059 = vpop.permute.xlu0 %2058
        %2060 = vrot.lane.b32.xlu0 %v1893, 48
        %v2061 = vpop.permute.xlu0 %2060
        %v2062 = vsel %vm756, %v2059, 0
        %v2064 = vsel %vm756, %v2061, 0
        %2066 = vmatprep.subr.mxu0 0.0
        %2067 = vmatpush1.xpose.msra.mxu0 0.0
        %2068 = vmatprep.subr.mxu0 0.0
        %2069 = vmatpush1.xpose.msra.mxu0 0.0
        %2070 = vmatprep.subr.mxu0 0.0
        %2071 = vmatpush1.xpose.msra.mxu0 0.0
        %2072 = vmatprep.subr.mxu0 0.0
        %2073 = vmatpush1.xpose.msra.mxu0 0.0
        %2074 = vmatprep.subr.mxu0 0.0
        %2075 = vmatpush1.xpose.msra.mxu0 0.0
        %2076 = vmatprep.subr.mxu0 0.0
        %2077 = vmatpush1.xpose.msra.mxu0 0.0
        %2078 = vmatprep.subr.mxu0 0.0
        %2079 = vmatpush1.xpose.msra.mxu0 0.0
        %2080 = vmatprep.subr.mxu0 0.0
        %2081 = vmatpush1.xpose.msra.mxu0 0.0
        %2082 = vmatprep.subr.mxu0 0.0
        %2083 = vmatpush1.xpose.msra.mxu0 0.0
        %2084 = vmatprep.subr.mxu0 0.0
        %2085 = vmatpush1.xpose.msra.mxu0 0.0
        %2086 = vmatprep.subr.mxu0 0.0
        %2087 = vmatpush1.xpose.msra.mxu0 0.0
        %2088 = vmatprep.subr.mxu0 0.0
        %2089 = vmatpush1.xpose.msra.mxu0 0.0
        %2090 = vmatprep.subr.mxu0 0.0
        %2091 = vmatpush1.xpose.msra.mxu0 0.0
        %2092 = vmatprep.subr.mxu0 0.0
        %2093 = vmatpush1.xpose.msra.mxu0 0.0
        %2094 = vmatprep.subr.mxu0 0.0
        %2095 = vmatpush1.xpose.msra.mxu0 0.0
        %2096 = vmatprep.subr.mxu0 0.0
        %2097 = vmatpush1.xpose.msra.mxu0 %v2064
        %2098 = vmatprep.subr.mxu0 0.0
        %2099 = vmatpush2.xpose.msra.mxu0 0.0
        %2100 = vmatprep.subr.mxu0 0.0
        %2101 = vmatpush2.xpose.msra.mxu0 0.0
        %2102 = vmatprep.subr.mxu0 0.0
        %2103 = vmatpush2.xpose.msra.mxu0 0.0
        %2104 = vmatprep.subr.mxu0 0.0
        %2105 = vmatpush2.xpose.msra.mxu0 0.0
        %2106 = vmatprep.subr.mxu0 0.0
        %2107 = vmatpush2.xpose.msra.mxu0 0.0
        %2108 = vmatprep.subr.mxu0 0.0
        %2109 = vmatpush2.xpose.msra.mxu0 0.0
        %2110 = vmatprep.subr.mxu0 0.0
        %2111 = vmatpush2.xpose.msra.mxu0 0.0
        %2112 = vmatprep.subr.mxu0 0.0
        %2113 = vmatpush2.xpose.msra.mxu0 0.0
        %2114 = vmatprep.subr.mxu0 0.0
        %2115 = vmatpush2.xpose.msra.mxu0 0.0
        %2116 = vmatprep.subr.mxu0 0.0
        %2117 = vmatpush2.xpose.msra.mxu0 0.0
        %2118 = vmatprep.subr.mxu0 0.0
        %2119 = vmatpush2.xpose.msra.mxu0 0.0
        %2120 = vmatprep.subr.mxu0 0.0
        %2121 = vmatpush2.xpose.msra.mxu0 0.0
        %2122 = vmatprep.subr.mxu0 0.0
        %2123 = vmatpush2.xpose.msra.mxu0 0.0
        %2124 = vmatprep.subr.mxu0 0.0
        %2125 = vmatpush2.xpose.msra.mxu0 0.0
        %2126 = vmatprep.subr.mxu0 0.0
        %2127 = vmatpush2.xpose.msra.mxu0 0.0
        %2128 = vmatprep.subr.mxu0 0.0
        %2129 = vmatpush2.xpose.msra.mxu0 0.0
        %2130 = vmatprep.mubr.f32.mxu0 0.0
        %2131 = vmatmul.mubr.f32.gmra.mxu0 %v2062
        %v2132 = vpop.f32.mrf.mxu0
        %v2133 = vadd.f32 %v625, %v2132
        %v2134 = vpop.f32.mrf.mxu0
        %2135 = vdwg.mxu0
        %v2136 = vsel %vm831, %v2133, -inf
        %2137 = vmax.xlane.f32.xlu0 %v2136
        %v2138 = vpop.xlane.xlu0 %2137
        %v2139 = vsub.f32 %v2133, %v2138
        %v2140 = vmul.f32 %v2139, 1.442695
        %v2141 = vpow.pop %v2140
        %v2142 = vsel %vm831, %v2141, 0.0
        %2143 = vadd.xlane.f32.xlu0 %v2142
        %v2144 = vpop.xlane.xlu0 %2143
        %v2145 = vrcp.pop %v2144
        %v2146 = vmul.f32 %v2141, %v2145
        %2148 = vrot.lane.b32.xlu0 %v1895, 112
        %v2149 = vpop.permute.xlu0 %2148
        %v2152 = vsel %vm831, %v2146, 0
        %2154 = vmatprep.subr.mxu0 0.0
        %2155 = vmatpush1.msra.mxu0 0.0
        %2156 = vmatprep.subr.mxu0 0.0
        %2157 = vmatpush1.msra.mxu0 0.0
        %2158 = vmatprep.subr.mxu0 0.0
        %2159 = vmatpush1.msra.mxu0 0.0
        %2160 = vmatprep.subr.mxu0 0.0
        %2161 = vmatpush1.msra.mxu0 0.0
        %2162 = vmatprep.subr.mxu0 0.0
        %2163 = vmatpush1.msra.mxu0 0.0
        %2164 = vmatprep.subr.mxu0 0.0
        %2165 = vmatpush1.msra.mxu0 0.0
        %2166 = vmatprep.subr.mxu0 0.0
        %2167 = vmatpush1.msra.mxu0 0.0
        %2168 = vmatprep.subr.mxu0 0.0
        %2169 = vmatpush1.msra.mxu0 0.0
        %2170 = vmatprep.subr.mxu0 0.0
        %2171 = vmatpush1.msra.mxu0 0.0
        %2172 = vmatprep.subr.mxu0 0.0
        %2173 = vmatpush1.msra.mxu0 0.0
        %2174 = vmatprep.subr.mxu0 0.0
        %2175 = vmatpush1.msra.mxu0 0.0
        %2176 = vmatprep.subr.mxu0 0.0
        %2177 = vmatpush1.msra.mxu0 0.0
        %2178 = vmatprep.subr.mxu0 0.0
        %2179 = vmatpush1.msra.mxu0 0.0
        %2180 = vmatprep.subr.mxu0 0.0
        %2181 = vmatpush1.msra.mxu0 0.0
        %2182 = vmatprep.subr.mxu0 0.0
        %2183 = vmatpush1.msra.mxu0 0.0
        %2184 = vmatprep.subr.mxu0 0.0
        %2185 = vmatpush1.msra.mxu0 %v2149
        %2186 = vmatprep.subr.mxu0 0.0
        %2187 = vmatpush2.msra.mxu0 0.0
        %2188 = vmatprep.subr.mxu0 0.0
        %2189 = vmatpush2.msra.mxu0 0.0
        %2190 = vmatprep.subr.mxu0 0.0
        %2191 = vmatpush2.msra.mxu0 0.0
        %2192 = vmatprep.subr.mxu0 0.0
        %2193 = vmatpush2.msra.mxu0 0.0
        %2194 = vmatprep.subr.mxu0 0.0
        %2195 = vmatpush2.msra.mxu0 0.0
        %2196 = vmatprep.subr.mxu0 0.0
        %2197 = vmatpush2.msra.mxu0 0.0
        %2198 = vmatprep.subr.mxu0 0.0
        %2199 = vmatpush2.msra.mxu0 0.0
        %2200 = vmatprep.subr.mxu0 0.0
        %2201 = vmatpush2.msra.mxu0 0.0
        %2202 = vmatprep.subr.mxu0 0.0
        %2203 = vmatpush2.msra.mxu0 0.0
        %2204 = vmatprep.subr.mxu0 0.0
        %2205 = vmatpush2.msra.mxu0 0.0
        %2206 = vmatprep.subr.mxu0 0.0
        %2207 = vmatpush2.msra.mxu0 0.0
        %2208 = vmatprep.subr.mxu0 0.0
        %2209 = vmatpush2.msra.mxu0 0.0
        %2210 = vmatprep.subr.mxu0 0.0
        %2211 = vmatpush2.msra.mxu0 0.0
        %2212 = vmatprep.subr.mxu0 0.0
        %2213 = vmatpush2.msra.mxu0 0.0
        %2214 = vmatprep.subr.mxu0 0.0
        %2215 = vmatpush2.msra.mxu0 0.0
        %2216 = vmatprep.subr.mxu0 0.0
        %2217 = vmatpush2.msra.mxu0 0.0
        %2218 = vmatprep.mubr.f32.mxu0 0.0
        %2219 = vmatmul.mubr.f32.gmra.mxu0 %v2152
        %v2220 = vpop.f32.mrf.mxu0
        %v2221 = vadd.f32 0.0, %v2220
        %v2222 = vpop.f32.mrf.mxu0
        %2223 = vdwg.mxu0
        %2224 = vrot.lane.b32.xlu0 %v1893, 96
        %v2225 = vpop.permute.xlu0 %2224
        %2226 = vrot.lane.b32.xlu0 %v1893, 32
        %v2227 = vpop.permute.xlu0 %2226
        %v2228 = vsel %vm756, %v2225, 0
        %v2230 = vsel %vm756, %v2227, 0
        %2232 = vmatprep.subr.mxu0 0.0
        %2233 = vmatpush1.xpose.msra.mxu0 0.0
        %2234 = vmatprep.subr.mxu0 0.0
        %2235 = vmatpush1.xpose.msra.mxu0 0.0
        %2236 = vmatprep.subr.mxu0 0.0
        %2237 = vmatpush1.xpose.msra.mxu0 0.0
        %2238 = vmatprep.subr.mxu0 0.0
        %2239 = vmatpush1.xpose.msra.mxu0 0.0
        %2240 = vmatprep.subr.mxu0 0.0
        %2241 = vmatpush1.xpose.msra.mxu0 0.0
        %2242 = vmatprep.subr.mxu0 0.0
        %2243 = vmatpush1.xpose.msra.mxu0 0.0
        %2244 = vmatprep.subr.mxu0 0.0
        %2245 = vmatpush1.xpose.msra.mxu0 0.0
        %2246 = vmatprep.subr.mxu0 0.0
        %2247 = vmatpush1.xpose.msra.mxu0 0.0
        %2248 = vmatprep.subr.mxu0 0.0
        %2249 = vmatpush1.xpose.msra.mxu0 0.0
        %2250 = vmatprep.subr.mxu0 0.0
        %2251 = vmatpush1.xpose.msra.mxu0 0.0
        %2252 = vmatprep.subr.mxu0 0.0
        %2253 = vmatpush1.xpose.msra.mxu0 0.0
        %2254 = vmatprep.subr.mxu0 0.0
        %2255 = vmatpush1.xpose.msra.mxu0 0.0
        %2256 = vmatprep.subr.mxu0 0.0
        %2257 = vmatpush1.xpose.msra.mxu0 0.0
        %2258 = vmatprep.subr.mxu0 0.0
        %2259 = vmatpush1.xpose.msra.mxu0 0.0
        %2260 = vmatprep.subr.mxu0 0.0
        %2261 = vmatpush1.xpose.msra.mxu0 0.0
        %2262 = vmatprep.subr.mxu0 0.0
        %2263 = vmatpush1.xpose.msra.mxu0 %v2230
        %2264 = vmatprep.subr.mxu0 0.0
        %2265 = vmatpush2.xpose.msra.mxu0 0.0
        %2266 = vmatprep.subr.mxu0 0.0
        %2267 = vmatpush2.xpose.msra.mxu0 0.0
        %2268 = vmatprep.subr.mxu0 0.0
        %2269 = vmatpush2.xpose.msra.mxu0 0.0
        %2270 = vmatprep.subr.mxu0 0.0
        %2271 = vmatpush2.xpose.msra.mxu0 0.0
        %2272 = vmatprep.subr.mxu0 0.0
        %2273 = vmatpush2.xpose.msra.mxu0 0.0
        %2274 = vmatprep.subr.mxu0 0.0
        %2275 = vmatpush2.xpose.msra.mxu0 0.0
        %2276 = vmatprep.subr.mxu0 0.0
        %2277 = vmatpush2.xpose.msra.mxu0 0.0
        %2278 = vmatprep.subr.mxu0 0.0
        %2279 = vmatpush2.xpose.msra.mxu0 0.0
        %2280 = vmatprep.subr.mxu0 0.0
        %2281 = vmatpush2.xpose.msra.mxu0 0.0
        %2282 = vmatprep.subr.mxu0 0.0
        %2283 = vmatpush2.xpose.msra.mxu0 0.0
        %2284 = vmatprep.subr.mxu0 0.0
        %2285 = vmatpush2.xpose.msra.mxu0 0.0
        %2286 = vmatprep.subr.mxu0 0.0
        %2287 = vmatpush2.xpose.msra.mxu0 0.0
        %2288 = vmatprep.subr.mxu0 0.0
        %2289 = vmatpush2.xpose.msra.mxu0 0.0
        %2290 = vmatprep.subr.mxu0 0.0
        %2291 = vmatpush2.xpose.msra.mxu0 0.0
        %2292 = vmatprep.subr.mxu0 0.0
        %2293 = vmatpush2.xpose.msra.mxu0 0.0
        %2294 = vmatprep.subr.mxu0 0.0
        %2295 = vmatpush2.xpose.msra.mxu0 0.0
        %2296 = vmatprep.mubr.f32.mxu0 0.0
        %2297 = vmatmul.mubr.f32.gmra.mxu0 %v2228
        %v2298 = vpop.f32.mrf.mxu0
        %v2299 = vadd.f32 %v625, %v2298
        %v2300 = vpop.f32.mrf.mxu0
        %2301 = vdwg.mxu0
        %v2302 = vsel %vm831, %v2299, -inf
        %2303 = vmax.xlane.f32.xlu0 %v2302
        %v2304 = vpop.xlane.xlu0 %2303
        %v2305 = vsub.f32 %v2299, %v2304
        %v2306 = vmul.f32 %v2305, 1.442695
        %v2307 = vpow.pop %v2306
        %v2308 = vsel %vm831, %v2307, 0.0
        %2309 = vadd.xlane.f32.xlu0 %v2308
        %v2310 = vpop.xlane.xlu0 %2309
        %v2311 = vrcp.pop %v2310
        %v2312 = vmul.f32 %v2307, %v2311
        %2313 = vrot.lane.b32.xlu0 %v1895, 96
        %v2314 = vpop.permute.xlu0 %2313
        %v2317 = vsel %vm831, %v2312, 0
        %2319 = vmatprep.subr.mxu0 0.0
        %2320 = vmatpush1.msra.mxu0 0.0
        %2321 = vmatprep.subr.mxu0 0.0
        %2322 = vmatpush1.msra.mxu0 0.0
        %2323 = vmatprep.subr.mxu0 0.0
        %2324 = vmatpush1.msra.mxu0 0.0
        %2325 = vmatprep.subr.mxu0 0.0
        %2326 = vmatpush1.msra.mxu0 0.0
        %2327 = vmatprep.subr.mxu0 0.0
        %2328 = vmatpush1.msra.mxu0 0.0
        %2329 = vmatprep.subr.mxu0 0.0
        %2330 = vmatpush1.msra.mxu0 0.0
        %2331 = vmatprep.subr.mxu0 0.0
        %2332 = vmatpush1.msra.mxu0 0.0
        %2333 = vmatprep.subr.mxu0 0.0
        %2334 = vmatpush1.msra.mxu0 0.0
        %2335 = vmatprep.subr.mxu0 0.0
        %2336 = vmatpush1.msra.mxu0 0.0
        %2337 = vmatprep.subr.mxu0 0.0
        %2338 = vmatpush1.msra.mxu0 0.0
        %2339 = vmatprep.subr.mxu0 0.0
        %2340 = vmatpush1.msra.mxu0 0.0
        %2341 = vmatprep.subr.mxu0 0.0
        %2342 = vmatpush1.msra.mxu0 0.0
        %2343 = vmatprep.subr.mxu0 0.0
        %2344 = vmatpush1.msra.mxu0 0.0
        %2345 = vmatprep.subr.mxu0 0.0
        %2346 = vmatpush1.msra.mxu0 0.0
        %2347 = vmatprep.subr.mxu0 0.0
        %2348 = vmatpush1.msra.mxu0 0.0
        %2349 = vmatprep.subr.mxu0 0.0
        %2350 = vmatpush1.msra.mxu0 %v2314
        %2351 = vmatprep.subr.mxu0 0.0
        %2352 = vmatpush2.msra.mxu0 0.0
        %2353 = vmatprep.subr.mxu0 0.0
        %2354 = vmatpush2.msra.mxu0 0.0
        %2355 = vmatprep.subr.mxu0 0.0
        %2356 = vmatpush2.msra.mxu0 0.0
        %2357 = vmatprep.subr.mxu0 0.0
        %2358 = vmatpush2.msra.mxu0 0.0
        %2359 = vmatprep.subr.mxu0 0.0
        %2360 = vmatpush2.msra.mxu0 0.0
        %2361 = vmatprep.subr.mxu0 0.0
        %2362 = vmatpush2.msra.mxu0 0.0
        %2363 = vmatprep.subr.mxu0 0.0
        %2364 = vmatpush2.msra.mxu0 0.0
        %2365 = vmatprep.subr.mxu0 0.0
        %2366 = vmatpush2.msra.mxu0 0.0
        %2367 = vmatprep.subr.mxu0 0.0
        %2368 = vmatpush2.msra.mxu0 0.0
        %2369 = vmatprep.subr.mxu0 0.0
        %2370 = vmatpush2.msra.mxu0 0.0
        %2371 = vmatprep.subr.mxu0 0.0
        %2372 = vmatpush2.msra.mxu0 0.0
        %2373 = vmatprep.subr.mxu0 0.0
        %2374 = vmatpush2.msra.mxu0 0.0
        %2375 = vmatprep.subr.mxu0 0.0
        %2376 = vmatpush2.msra.mxu0 0.0
        %2377 = vmatprep.subr.mxu0 0.0
        %2378 = vmatpush2.msra.mxu0 0.0
        %2379 = vmatprep.subr.mxu0 0.0
        %2380 = vmatpush2.msra.mxu0 0.0
        %2381 = vmatprep.subr.mxu0 0.0
        %2382 = vmatpush2.msra.mxu0 0.0
        %2383 = vmatprep.mubr.f32.mxu0 0.0
        %2384 = vmatmul.mubr.f32.gmra.mxu0 %v2317
        %v2385 = vpop.f32.mrf.mxu0
        %v2386 = vadd.f32 0.0, %v2385
        %v2387 = vpop.f32.mrf.mxu0
        %2388 = vdwg.mxu0
        %2389 = vrot.lane.b32.xlu0 %v1893, 80
        %v2390 = vpop.permute.xlu0 %2389
        %2391 = vrot.lane.b32.xlu0 %v1893, 16
        %v2392 = vpop.permute.xlu0 %2391
        %v2393 = vsel %vm756, %v2390, 0
        %v2395 = vsel %vm756, %v2392, 0
        %2397 = vmatprep.subr.mxu0 0.0
        %2398 = vmatpush1.xpose.msra.mxu0 0.0
        %2399 = vmatprep.subr.mxu0 0.0
        %2400 = vmatpush1.xpose.msra.mxu0 0.0
        %2401 = vmatprep.subr.mxu0 0.0
        %2402 = vmatpush1.xpose.msra.mxu0 0.0
        %2403 = vmatprep.subr.mxu0 0.0
        %2404 = vmatpush1.xpose.msra.mxu0 0.0
        %2405 = vmatprep.subr.mxu0 0.0
        %2406 = vmatpush1.xpose.msra.mxu0 0.0
        %2407 = vmatprep.subr.mxu0 0.0
        %2408 = vmatpush1.xpose.msra.mxu0 0.0
        %2409 = vmatprep.subr.mxu0 0.0
        %2410 = vmatpush1.xpose.msra.mxu0 0.0
        %2411 = vmatprep.subr.mxu0 0.0
        %2412 = vmatpush1.xpose.msra.mxu0 0.0
        %2413 = vmatprep.subr.mxu0 0.0
        %2414 = vmatpush1.xpose.msra.mxu0 0.0
        %2415 = vmatprep.subr.mxu0 0.0
        %2416 = vmatpush1.xpose.msra.mxu0 0.0
        %2417 = vmatprep.subr.mxu0 0.0
        %2418 = vmatpush1.xpose.msra.mxu0 0.0
        %2419 = vmatprep.subr.mxu0 0.0
        %2420 = vmatpush1.xpose.msra.mxu0 0.0
        %2421 = vmatprep.subr.mxu0 0.0
        %2422 = vmatpush1.xpose.msra.mxu0 0.0
        %2423 = vmatprep.subr.mxu0 0.0
        %2424 = vmatpush1.xpose.msra.mxu0 0.0
        %2425 = vmatprep.subr.mxu0 0.0
        %2426 = vmatpush1.xpose.msra.mxu0 0.0
        %2427 = vmatprep.subr.mxu0 0.0
        %2428 = vmatpush1.xpose.msra.mxu0 %v2395
        %2429 = vmatprep.subr.mxu0 0.0
        %2430 = vmatpush2.xpose.msra.mxu0 0.0
        %2431 = vmatprep.subr.mxu0 0.0
        %2432 = vmatpush2.xpose.msra.mxu0 0.0
        %2433 = vmatprep.subr.mxu0 0.0
        %2434 = vmatpush2.xpose.msra.mxu0 0.0
        %2435 = vmatprep.subr.mxu0 0.0
        %2436 = vmatpush2.xpose.msra.mxu0 0.0
        %2437 = vmatprep.subr.mxu0 0.0
        %2438 = vmatpush2.xpose.msra.mxu0 0.0
        %2439 = vmatprep.subr.mxu0 0.0
        %2440 = vmatpush2.xpose.msra.mxu0 0.0
        %2441 = vmatprep.subr.mxu0 0.0
        %2442 = vmatpush2.xpose.msra.mxu0 0.0
        %2443 = vmatprep.subr.mxu0 0.0
        %2444 = vmatpush2.xpose.msra.mxu0 0.0
        %2445 = vmatprep.subr.mxu0 0.0
        %2446 = vmatpush2.xpose.msra.mxu0 0.0
        %2447 = vmatprep.subr.mxu0 0.0
        %2448 = vmatpush2.xpose.msra.mxu0 0.0
        %2449 = vmatprep.subr.mxu0 0.0
        %2450 = vmatpush2.xpose.msra.mxu0 0.0
        %2451 = vmatprep.subr.mxu0 0.0
        %2452 = vmatpush2.xpose.msra.mxu0 0.0
        %2453 = vmatprep.subr.mxu0 0.0
        %2454 = vmatpush2.xpose.msra.mxu0 0.0
        %2455 = vmatprep.subr.mxu0 0.0
        %2456 = vmatpush2.xpose.msra.mxu0 0.0
        %2457 = vmatprep.subr.mxu0 0.0
        %2458 = vmatpush2.xpose.msra.mxu0 0.0
        %2459 = vmatprep.subr.mxu0 0.0
        %2460 = vmatpush2.xpose.msra.mxu0 0.0
        %2461 = vmatprep.mubr.f32.mxu0 0.0
        %2462 = vmatmul.mubr.f32.gmra.mxu0 %v2393
        %v2463 = vpop.f32.mrf.mxu0
        %v2464 = vadd.f32 %v625, %v2463
        %v2465 = vpop.f32.mrf.mxu0
        %2466 = vdwg.mxu0
        %v2467 = vsel %vm831, %v2464, -inf
        %2468 = vmax.xlane.f32.xlu0 %v2467
        %v2469 = vpop.xlane.xlu0 %2468
        %v2470 = vsub.f32 %v2464, %v2469
        %v2471 = vmul.f32 %v2470, 1.442695
        %v2472 = vpow.pop %v2471
        %v2473 = vsel %vm831, %v2472, 0.0
        %2474 = vadd.xlane.f32.xlu0 %v2473
        %v2475 = vpop.xlane.xlu0 %2474
        %v2476 = vrcp.pop %v2475
        %v2477 = vmul.f32 %v2472, %v2476
        %2478 = vrot.lane.b32.xlu0 %v1895, 80
        %v2479 = vpop.permute.xlu0 %2478
        %v2482 = vsel %vm831, %v2477, 0
        %2484 = vmatprep.subr.mxu0 0.0
        %2485 = vmatpush1.msra.mxu0 0.0
        %2486 = vmatprep.subr.mxu0 0.0
        %2487 = vmatpush1.msra.mxu0 0.0
        %2488 = vmatprep.subr.mxu0 0.0
        %2489 = vmatpush1.msra.mxu0 0.0
        %2490 = vmatprep.subr.mxu0 0.0
        %2491 = vmatpush1.msra.mxu0 0.0
        %2492 = vmatprep.subr.mxu0 0.0
        %2493 = vmatpush1.msra.mxu0 0.0
        %2494 = vmatprep.subr.mxu0 0.0
        %2495 = vmatpush1.msra.mxu0 0.0
        %2496 = vmatprep.subr.mxu0 0.0
        %2497 = vmatpush1.msra.mxu0 0.0
        %2498 = vmatprep.subr.mxu0 0.0
        %2499 = vmatpush1.msra.mxu0 0.0
        %2500 = vmatprep.subr.mxu0 0.0
        %2501 = vmatpush1.msra.mxu0 0.0
        %2502 = vmatprep.subr.mxu0 0.0
        %2503 = vmatpush1.msra.mxu0 0.0
        %2504 = vmatprep.subr.mxu0 0.0
        %2505 = vmatpush1.msra.mxu0 0.0
        %2506 = vmatprep.subr.mxu0 0.0
        %2507 = vmatpush1.msra.mxu0 0.0
        %2508 = vmatprep.subr.mxu0 0.0
        %2509 = vmatpush1.msra.mxu0 0.0
        %2510 = vmatprep.subr.mxu0 0.0
        %2511 = vmatpush1.msra.mxu0 0.0
        %2512 = vmatprep.subr.mxu0 0.0
        %2513 = vmatpush1.msra.mxu0 0.0
        %2514 = vmatprep.subr.mxu0 0.0
        %2515 = vmatpush1.msra.mxu0 %v2479
        %2516 = vmatprep.subr.mxu0 0.0
        %2517 = vmatpush2.msra.mxu0 0.0
        %2518 = vmatprep.subr.mxu0 0.0
        %2519 = vmatpush2.msra.mxu0 0.0
        %2520 = vmatprep.subr.mxu0 0.0
        %2521 = vmatpush2.msra.mxu0 0.0
        %2522 = vmatprep.subr.mxu0 0.0
        %2523 = vmatpush2.msra.mxu0 0.0
        %2524 = vmatprep.subr.mxu0 0.0
        %2525 = vmatpush2.msra.mxu0 0.0
        %2526 = vmatprep.subr.mxu0 0.0
        %2527 = vmatpush2.msra.mxu0 0.0
        %2528 = vmatprep.subr.mxu0 0.0
        %2529 = vmatpush2.msra.mxu0 0.0
        %2530 = vmatprep.subr.mxu0 0.0
        %2531 = vmatpush2.msra.mxu0 0.0
        %2532 = vmatprep.subr.mxu0 0.0
        %2533 = vmatpush2.msra.mxu0 0.0
        %2534 = vmatprep.subr.mxu0 0.0
        %2535 = vmatpush2.msra.mxu0 0.0
        %2536 = vmatprep.subr.mxu0 0.0
        %2537 = vmatpush2.msra.mxu0 0.0
        %2538 = vmatprep.subr.mxu0 0.0
        %2539 = vmatpush2.msra.mxu0 0.0
        %2540 = vmatprep.subr.mxu0 0.0
        %2541 = vmatpush2.msra.mxu0 0.0
        %2542 = vmatprep.subr.mxu0 0.0
        %2543 = vmatpush2.msra.mxu0 0.0
        %2544 = vmatprep.subr.mxu0 0.0
        %2545 = vmatpush2.msra.mxu0 0.0
        %2546 = vmatprep.subr.mxu0 0.0
        %2547 = vmatpush2.msra.mxu0 0.0
        %2548 = vmatprep.mubr.f32.mxu0 0.0
        %2549 = vmatmul.mubr.f32.gmra.mxu0 %v2482
        %v2550 = vpop.f32.mrf.mxu0
        %v2551 = vadd.f32 0.0, %v2550
        %v2552 = vpop.f32.mrf.mxu0
        %2553 = vdwg.mxu0
        %2555 = vrot.lane.b32.xlu0 %v2221, 16
        %v2556 = vpop.permute.xlu0 %2555
        %2559 = vrot.lane.b32.xlu0 %v2386, 32
        %v2560 = vpop.permute.xlu0 %2559
        %2563 = vrot.lane.b32.xlu0 %v2551, 48
        %v2564 = vpop.permute.xlu0 %2563
        %v2566 = vsel %vm756, %v2055, %v2556
        %v2567 = vsel %vm1425, %v2566, %v2560
        %v2568 = vsel %vm1427, %v2567, %v2564
        %s2569 = scalar_lea.vmem %s5, 64
        %v2570 = vld [vmem:[%s2569] sm:$0xff]
        %v2571 = vld [vmem:[%s2569 + $0x8] sm:$0xff]
        %v2572 = vld [vmem:[%s2569 + $0x10] sm:$0xff]
        %v2573 = vld [vmem:[%s2569 + $0x18] sm:$0xff]
        %v2574 = vld [vmem:[%s2569 + $0x20] sm:$0xff]
        %v2575 = vld [vmem:[%s2569 + $0x28] sm:$0xff]
        %v2576 = vld [vmem:[%s2569 + $0x30] sm:$0xff]
        %v2577 = vld [vmem:[%s2569 + $0x38] sm:$0xff]
        %v2579 = vsel %vm523, %v2568, 0
        %2581 = vmatprep.subr.mxu0 0.0
        %2582 = vmatpush1.msra.mxu0 0.0
        %2583 = vmatprep.subr.mxu0 0.0
        %2584 = vmatpush1.msra.mxu0 0.0
        %2585 = vmatprep.subr.mxu0 0.0
        %2586 = vmatpush1.msra.mxu0 0.0
        %2587 = vmatprep.subr.mxu0 0.0
        %2588 = vmatpush1.msra.mxu0 0.0
        %2589 = vmatprep.subr.mxu0 0.0
        %2590 = vmatpush1.msra.mxu0 0.0
        %2591 = vmatprep.subr.mxu0 0.0
        %2592 = vmatpush1.msra.mxu0 0.0
        %2593 = vmatprep.subr.mxu0 0.0
        %2594 = vmatpush1.msra.mxu0 0.0
        %2595 = vmatprep.subr.mxu0 0.0
        %2596 = vmatpush1.msra.mxu0 0.0
        %2597 = vmatprep.subr.mxu0 0.0
        %2598 = vmatpush1.msra.mxu0 %v2577
        %2599 = vmatprep.subr.mxu0 0.0
        %2600 = vmatpush1.msra.mxu0 %v2576
        %2601 = vmatprep.subr.mxu0 0.0
        %2602 = vmatpush1.msra.mxu0 %v2575
        %2603 = vmatprep.subr.mxu0 0.0
        %2604 = vmatpush1.msra.mxu0 %v2574
        %2605 = vmatprep.subr.mxu0 0.0
        %2606 = vmatpush1.msra.mxu0 %v2573
        %2607 = vmatprep.subr.mxu0 0.0
        %2608 = vmatpush1.msra.mxu0 %v2572
        %2609 = vmatprep.subr.mxu0 0.0
        %2610 = vmatpush1.msra.mxu0 %v2571
        %2611 = vmatprep.subr.mxu0 0.0
        %2612 = vmatpush1.msra.mxu0 %v2570
        %2613 = vmatprep.subr.mxu0 0.0
        %2614 = vmatpush2.msra.mxu0 0.0
        %2615 = vmatprep.subr.mxu0 0.0
        %2616 = vmatpush2.msra.mxu0 0.0
        %2617 = vmatprep.subr.mxu0 0.0
        %2618 = vmatpush2.msra.mxu0 0.0
        %2619 = vmatprep.subr.mxu0 0.0
        %2620 = vmatpush2.msra.mxu0 0.0
        %2621 = vmatprep.subr.mxu0 0.0
        %2622 = vmatpush2.msra.mxu0 0.0
        %2623 = vmatprep.subr.mxu0 0.0
        %2624 = vmatpush2.msra.mxu0 0.0
        %2625 = vmatprep.subr.mxu0 0.0
        %2626 = vmatpush2.msra.mxu0 0.0
        %2627 = vmatprep.subr.mxu0 0.0
        %2628 = vmatpush2.msra.mxu0 0.0
        %2629 = vmatprep.subr.mxu0 0.0
        %2630 = vmatpush2.msra.mxu0 0.0
        %2631 = vmatprep.subr.mxu0 0.0
        %2632 = vmatpush2.msra.mxu0 0.0
        %2633 = vmatprep.subr.mxu0 0.0
        %2634 = vmatpush2.msra.mxu0 0.0
        %2635 = vmatprep.subr.mxu0 0.0
        %2636 = vmatpush2.msra.mxu0 0.0
        %2637 = vmatprep.subr.mxu0 0.0
        %2638 = vmatpush2.msra.mxu0 0.0
        %2639 = vmatprep.subr.mxu0 0.0
        %2640 = vmatpush2.msra.mxu0 0.0
        %2641 = vmatprep.subr.mxu0 0.0
        %2642 = vmatpush2.msra.mxu0 0.0
        %2643 = vmatprep.subr.mxu0 0.0
        %2644 = vmatpush2.msra.mxu0 0.0
        %2645 = vmatprep.mubr.f32.mxu0 0.0
        %2646 = vmatmul.mubr.f32.gmra.mxu0 %v2579
        %v2647 = vpop.f32.mrf.mxu0
        %v2648 = vadd.f32 0.0, %v2647
        %v2649 = vpop.f32.mrf.mxu0
        %2650 = vdwg.mxu0
        %v2651 = vadd.f32 %v1765, %v2648
        %v2652 = vlaneseq
        %v2653 = vshrl.u32 %v2652, 7
        %v2654 = vsub.s32 4, %v2653
        %v2655 = vrot.slane %v1767, %v2654
        %v2656 = vadd.f32 %v2651, %v2655
        %v2657 = vsel %vm523, %v2656, 0.0
        %2658 = vadd.xlane.f32.xlu0 %v2657
        %v2659 = vpop.xlane.xlu0 %2658
        %v2660 = vmul.f32 %v2659, %v601
        %v2661 = vsub.f32 %v2656, %v2660
        %v2662 = vmul.f32 %v2661, %v2661
        %v2663 = vsel %vm523, %v2662, 0.0
        %2664 = vadd.xlane.f32.xlu0 %v2663
        %v2665 = vpop.xlane.xlu0 %2664
        %v2666 = vmul.f32 %v2665, %v601
        %v2667 = vadd.f32 %v2666, 1e-05
        %v2668 = vrsqrt.pop %v2667
        %v2669 = vmul.f32 %v2661, %v2668
        %v2670 = vlaneseq
        %v2671 = vshrl.u32 %v2670, 7
        %v2672 = vsub.s32 2, %v2671
        %v2673 = vrot.slane %v1767, %v2672
        %v2674 = vmul.f32 %v2669, %v2673
        %v2675 = vlaneseq
        %v2676 = vshrl.u32 %v2675, 7
        %v2677 = vsub.s32 3, %v2676
        %v2678 = vrot.slane %v1767, %v2677
        %v2679 = vadd.f32 %v2674, %v2678
        %s2680 = scalar_lea.vmem %s7, 128
        %v2681 = vld [vmem:[%s2680] sm:$0xff]
        %v2682 = vld [vmem:[%s2680 + $0x8] sm:$0xff]
        %v2683 = vld [vmem:[%s2680 + $0x10] sm:$0xff]
        %v2684 = vld [vmem:[%s2680 + $0x18] sm:$0xff]
        %v2685 = vld [vmem:[%s2680 + $0x20] sm:$0xff]
        %v2686 = vld [vmem:[%s2680 + $0x28] sm:$0xff]
        %v2687 = vld [vmem:[%s2680 + $0x30] sm:$0xff]
        %v2688 = vld [vmem:[%s2680 + $0x38] sm:$0xff]
        %v2689 = vld [vmem:[%s2680 + $0x40] sm:$0xff]
        %v2690 = vld [vmem:[%s2680 + $0x48] sm:$0xff]
        %v2691 = vld [vmem:[%s2680 + $0x50] sm:$0xff]
        %v2692 = vld [vmem:[%s2680 + $0x58] sm:$0xff]
        %v2693 = vld [vmem:[%s2680 + $0x60] sm:$0xff]
        %v2694 = vld [vmem:[%s2680 + $0x68] sm:$0xff]
        %v2695 = vld [vmem:[%s2680 + $0x70] sm:$0xff]
        %v2696 = vld [vmem:[%s2680 + $0x78] sm:$0xff]
        %v2698 = vlaneseq
        %v2699 = vshrl.u32 %v2698, 7
        %v2700 = vsub.s32 0, %v2699
        %v2701 = vrot.slane %v1771, %v2700
        %v2702 = vlaneseq
        %v2703 = vshrl.u32 %v2702, 7
        %v2704 = vsub.s32 1, %v2703
        %v2705 = vrot.slane %v1771, %v2704
        %v2709 = vsel %vm523, %v2679, 0
        %2711 = vmatprep.subr.mxu0 0.0
        %2712 = vmatpush1.msra.mxu0 0.0
        %2713 = vmatprep.subr.mxu0 0.0
        %2714 = vmatpush1.msra.mxu0 0.0
        %2715 = vmatprep.subr.mxu0 0.0
        %2716 = vmatpush1.msra.mxu0 0.0
        %2717 = vmatprep.subr.mxu0 0.0
        %2718 = vmatpush1.msra.mxu0 0.0
        %2719 = vmatprep.subr.mxu0 0.0
        %2720 = vmatpush1.msra.mxu0 0.0
        %2721 = vmatprep.subr.mxu0 0.0
        %2722 = vmatpush1.msra.mxu0 0.0
        %2723 = vmatprep.subr.mxu0 0.0
        %2724 = vmatpush1.msra.mxu0 0.0
        %2725 = vmatprep.subr.mxu0 0.0
        %2726 = vmatpush1.msra.mxu0 0.0
        %2727 = vmatprep.subr.mxu0 %v2696
        %2728 = vmatpush1.msra.mxu0 %v2695
        %2729 = vmatprep.subr.mxu0 %v2694
        %2730 = vmatpush1.msra.mxu0 %v2693
        %2731 = vmatprep.subr.mxu0 %v2692
        %2732 = vmatpush1.msra.mxu0 %v2691
        %2733 = vmatprep.subr.mxu0 %v2690
        %2734 = vmatpush1.msra.mxu0 %v2689
        %2735 = vmatprep.subr.mxu0 %v2688
        %2736 = vmatpush1.msra.mxu0 %v2687
        %2737 = vmatprep.subr.mxu0 %v2686
        %2738 = vmatpush1.msra.mxu0 %v2685
        %2739 = vmatprep.subr.mxu0 %v2684
        %2740 = vmatpush1.msra.mxu0 %v2683
        %2741 = vmatprep.subr.mxu0 %v2682
        %2742 = vmatpush1.msra.mxu0 %v2681
        %2743 = vmatprep.subr.mxu0 0.0
        %2744 = vmatpush2.msra.mxu0 0.0
        %2745 = vmatprep.subr.mxu0 0.0
        %2746 = vmatpush2.msra.mxu0 0.0
        %2747 = vmatprep.subr.mxu0 0.0
        %2748 = vmatpush2.msra.mxu0 0.0
        %2749 = vmatprep.subr.mxu0 0.0
        %2750 = vmatpush2.msra.mxu0 0.0
        %2751 = vmatprep.subr.mxu0 0.0
        %2752 = vmatpush2.msra.mxu0 0.0
        %2753 = vmatprep.subr.mxu0 0.0
        %2754 = vmatpush2.msra.mxu0 0.0
        %2755 = vmatprep.subr.mxu0 0.0
        %2756 = vmatpush2.msra.mxu0 0.0
        %2757 = vmatprep.subr.mxu0 0.0
        %2758 = vmatpush2.msra.mxu0 0.0
        %2759 = vmatprep.subr.mxu0 0.0
        %2760 = vmatpush2.msra.mxu0 0.0
        %2761 = vmatprep.subr.mxu0 0.0
        %2762 = vmatpush2.msra.mxu0 0.0
        %2763 = vmatprep.subr.mxu0 0.0
        %2764 = vmatpush2.msra.mxu0 0.0
        %2765 = vmatprep.subr.mxu0 0.0
        %2766 = vmatpush2.msra.mxu0 0.0
        %2767 = vmatprep.subr.mxu0 0.0
        %2768 = vmatpush2.msra.mxu0 0.0
        %2769 = vmatprep.subr.mxu0 0.0
        %2770 = vmatpush2.msra.mxu0 0.0
        %2771 = vmatprep.subr.mxu0 0.0
        %2772 = vmatpush2.msra.mxu0 0.0
        %2773 = vmatprep.subr.mxu0 0.0
        %2774 = vmatpush2.msra.mxu0 0.0
        %2775 = vmatprep.mubr.f32.mxu0 0.0
        %2776 = vmatmul.mubr.f32.gmra.mxu0 %v2709
        %v2777 = vpop.f32.mrf.mxu0
        %v2778 = vadd.f32 %v2701, %v2777
        %v2779 = vpop.f32.mrf.mxu0
        %v2780 = vadd.f32 %v2705, %v2779
        %2781 = vdwg.mxu0
        %v2782 = vmul.f32 %v2778, %v2778
        %v2783 = vmul.f32 %v2780, %v2780
        %v2784 = vmul.f32 %v2778, %v2782
        %v2785 = vmul.f32 %v2780, %v2783
        %v2786 = vmul.f32 %v2784, 0.044715
        %v2787 = vmul.f32 %v2785, 0.044715
        %v2788 = vadd.f32 %v2778, %v2786
        %v2789 = vadd.f32 %v2780, %v2787
        %v2790 = vmul.f32 %v2788, 0.7978846
        %v2791 = vmul.f32 %v2789, 0.7978846
        %v2792 = vtanh.pop %v2790
        %v2793 = vtanh.pop %v2791
        %v2794 = vadd.f32 %v2792, 1.0
        %v2795 = vadd.f32 %v2793, 1.0
        %v2796 = vmul.f32 %v2794, 0.5
        %v2797 = vmul.f32 %v2795, 0.5
        %v2798 = vmul.f32 %v2778, %v2796
        %v2799 = vmul.f32 %v2780, %v2797
        %s2800 = scalar_lea.vmem %s9, 256
        %v2801 = vld [vmem:[%s2800] sm:$0xff]
        %v2802 = vld [vmem:[%s2800 + $0x8] sm:$0xff]
        %v2803 = vld [vmem:[%s2800 + $0x10] sm:$0xff]
        %v2804 = vld [vmem:[%s2800 + $0x18] sm:$0xff]
        %v2805 = vld [vmem:[%s2800 + $0x20] sm:$0xff]
        %v2806 = vld [vmem:[%s2800 + $0x28] sm:$0xff]
        %v2807 = vld [vmem:[%s2800 + $0x30] sm:$0xff]
        %v2808 = vld [vmem:[%s2800 + $0x38] sm:$0xff]
        %v2809 = vld [vmem:[%s2800 + $0x40] sm:$0xff]
        %v2810 = vld [vmem:[%s2800 + $0x48] sm:$0xff]
        %v2811 = vld [vmem:[%s2800 + $0x50] sm:$0xff]
        %v2812 = vld [vmem:[%s2800 + $0x58] sm:$0xff]
        %v2813 = vld [vmem:[%s2800 + $0x60] sm:$0xff]
        %v2814 = vld [vmem:[%s2800 + $0x68] sm:$0xff]
        %v2815 = vld [vmem:[%s2800 + $0x70] sm:$0xff]
        %v2816 = vld [vmem:[%s2800 + $0x78] sm:$0xff]
        %v2817 = vld [vmem:[%s2800 + $0x80] sm:$0xff]
        %v2818 = vld [vmem:[%s2800 + $0x88] sm:$0xff]
        %v2819 = vld [vmem:[%s2800 + $0x90] sm:$0xff]
        %v2820 = vld [vmem:[%s2800 + $0x98] sm:$0xff]
        %v2821 = vld [vmem:[%s2800 + $0xa0] sm:$0xff]
        %v2822 = vld [vmem:[%s2800 + $0xa8] sm:$0xff]
        %v2823 = vld [vmem:[%s2800 + $0xb0] sm:$0xff]
        %v2824 = vld [vmem:[%s2800 + $0xb8] sm:$0xff]
        %v2825 = vld [vmem:[%s2800 + $0xc0] sm:$0xff]
        %v2826 = vld [vmem:[%s2800 + $0xc8] sm:$0xff]
        %v2827 = vld [vmem:[%s2800 + $0xd0] sm:$0xff]
        %v2828 = vld [vmem:[%s2800 + $0xd8] sm:$0xff]
        %v2829 = vld [vmem:[%s2800 + $0xe0] sm:$0xff]
        %v2830 = vld [vmem:[%s2800 + $0xe8] sm:$0xff]
        %v2831 = vld [vmem:[%s2800 + $0xf0] sm:$0xff]
        %v2832 = vld [vmem:[%s2800 + $0xf8] sm:$0xff]
        %2833 = vmatprep.subr.mxu0 0.0
        %2834 = vmatpush1.msra.mxu0 %v2816
        %2835 = vmatprep.subr.mxu0 0.0
        %2836 = vmatpush1.msra.mxu0 %v2815
        %2837 = vmatprep.subr.mxu0 0.0
        %2838 = vmatpush1.msra.mxu0 %v2814
        %2839 = vmatprep.subr.mxu0 0.0
        %2840 = vmatpush1.msra.mxu0 %v2813
        %2841 = vmatprep.subr.mxu0 0.0
        %2842 = vmatpush1.msra.mxu0 %v2812
        %2843 = vmatprep.subr.mxu0 0.0
        %2844 = vmatpush1.msra.mxu0 %v2811
        %2845 = vmatprep.subr.mxu0 0.0
        %2846 = vmatpush1.msra.mxu0 %v2810
        %2847 = vmatprep.subr.mxu0 0.0
        %2848 = vmatpush1.msra.mxu0 %v2809
        %2849 = vmatprep.subr.mxu0 0.0
        %2850 = vmatpush1.msra.mxu0 %v2808
        %2851 = vmatprep.subr.mxu0 0.0
        %2852 = vmatpush1.msra.mxu0 %v2807
        %2853 = vmatprep.subr.mxu0 0.0
        %2854 = vmatpush1.msra.mxu0 %v2806
        %2855 = vmatprep.subr.mxu0 0.0
        %2856 = vmatpush1.msra.mxu0 %v2805
        %2857 = vmatprep.subr.mxu0 0.0
        %2858 = vmatpush1.msra.mxu0 %v2804
        %2859 = vmatprep.subr.mxu0 0.0
        %2860 = vmatpush1.msra.mxu0 %v2803
        %2861 = vmatprep.subr.mxu0 0.0
        %2862 = vmatpush1.msra.mxu0 %v2802
        %2863 = vmatprep.subr.mxu0 0.0
        %2864 = vmatpush1.msra.mxu0 %v2801
        %2865 = vmatprep.subr.mxu0 0.0
        %2866 = vmatpush2.msra.mxu0 %v2832
        %2867 = vmatprep.subr.mxu0 0.0
        %2868 = vmatpush2.msra.mxu0 %v2831
        %2869 = vmatprep.subr.mxu0 0.0
        %2870 = vmatpush2.msra.mxu0 %v2830
        %2871 = vmatprep.subr.mxu0 0.0
        %2872 = vmatpush2.msra.mxu0 %v2829
        %2873 = vmatprep.subr.mxu0 0.0
        %2874 = vmatpush2.msra.mxu0 %v2828
        %2875 = vmatprep.subr.mxu0 0.0
        %2876 = vmatpush2.msra.mxu0 %v2827
        %2877 = vmatprep.subr.mxu0 0.0
        %2878 = vmatpush2.msra.mxu0 %v2826
        %2879 = vmatprep.subr.mxu0 0.0
        %2880 = vmatpush2.msra.mxu0 %v2825
        %2881 = vmatprep.subr.mxu0 0.0
        %2882 = vmatpush2.msra.mxu0 %v2824
        %2883 = vmatprep.subr.mxu0 0.0
        %2884 = vmatpush2.msra.mxu0 %v2823
        %2885 = vmatprep.subr.mxu0 0.0
        %2886 = vmatpush2.msra.mxu0 %v2822
        %2887 = vmatprep.subr.mxu0 0.0
        %2888 = vmatpush2.msra.mxu0 %v2821
        %2889 = vmatprep.subr.mxu0 0.0
        %2890 = vmatpush2.msra.mxu0 %v2820
        %2891 = vmatprep.subr.mxu0 0.0
        %2892 = vmatpush2.msra.mxu0 %v2819
        %2893 = vmatprep.subr.mxu0 0.0
        %2894 = vmatpush2.msra.mxu0 %v2818
        %2895 = vmatprep.subr.mxu0 0.0
        %2896 = vmatpush2.msra.mxu0 %v2817
        %2897 = vmatprep.mubr.f32.mxu0 %v2799
        %2898 = vmatmul.mubr.f32.gmra.mxu0 %v2798
        %v2899 = vpop.f32.mrf.mxu0
        %v2900 = vadd.f32 0.0, %v2899
        %v2901 = vpop.f32.mrf.mxu0
        %2902 = vdwg.mxu0
        %v2903 = vadd.f32 %v2656, %v2900
        %v2904 = vlaneseq
        %v2905 = vshrl.u32 %v2904, 7
        %v2906 = vsub.s32 5, %v2905
        %v2907 = vrot.slane %v1767, %v2906
        %v2908 = vadd.f32 %v2903, %v2907
        %v2909 = vsel %vm523, %v2908, 0.0
        %2910 = vadd.xlane.f32.xlu0 %v2909
        %v2911 = vpop.xlane.xlu0 %2910
        %v2912 = vmul.f32 %v2911, %v601
        %v2913 = vsub.f32 %v2908, %v2912
        %v2914 = vmul.f32 %v2913, %v2913
        %v2915 = vsel %vm523, %v2914, 0.0
        %2916 = vadd.xlane.f32.xlu0 %v2915
        %v2917 = vpop.xlane.xlu0 %2916
        %v2918 = vmul.f32 %v2917, %v601
        %v2919 = vadd.f32 %v2918, 1e-05
        %v2920 = vrsqrt.pop %v2919
        %v2921 = vmul.f32 %v2913, %v2920
        %v2922 = vlaneseq
        %v2923 = vshrl.u32 %v2922, 7
        %v2924 = vsub.s32 2, %v2923
        %v2925 = vrot.slane %v597, %v2924
        %v2926 = vmul.f32 %v2921, %v2925
        %v2927 = vlaneseq
        %v2928 = vshrl.u32 %v2927, 7
        %v2929 = vsub.s32 3, %v2928
        %v2930 = vrot.slane %v597, %v2929
        %v2931 = vadd.f32 %v2926, %v2930
        %v2932 = vld [vmem:[%s10] sm:$0xff]
        %v2933 = vld [vmem:[%s10 + $0x8] sm:$0xff]
        %v2934 = vld [vmem:[%s10 + $0x10] sm:$0xff]
        %v2935 = vld [vmem:[%s10 + $0x18] sm:$0xff]
        %v2936 = vld [vmem:[%s10 + $0x20] sm:$0xff]
        %v2937 = vld [vmem:[%s10 + $0x28] sm:$0xff]
        %v2938 = vld [vmem:[%s10 + $0x30] sm:$0xff]
        %v2939 = vld [vmem:[%s10 + $0x38] sm:$0xff]
        %v2941 = vsel %vm523, %v2931, 0
        %2943 = vmatprep.subr.mxu0 0.0
        %2944 = vmatpush1.msra.mxu0 0.0
        %2945 = vmatprep.subr.mxu0 0.0
        %2946 = vmatpush1.msra.mxu0 0.0
        %2947 = vmatprep.subr.mxu0 0.0
        %2948 = vmatpush1.msra.mxu0 0.0
        %2949 = vmatprep.subr.mxu0 0.0
        %2950 = vmatpush1.msra.mxu0 0.0
        %2951 = vmatprep.subr.mxu0 0.0
        %2952 = vmatpush1.msra.mxu0 0.0
        %2953 = vmatprep.subr.mxu0 0.0
        %2954 = vmatpush1.msra.mxu0 0.0
        %2955 = vmatprep.subr.mxu0 0.0
        %2956 = vmatpush1.msra.mxu0 0.0
        %2957 = vmatprep.subr.mxu0 0.0
        %2958 = vmatpush1.msra.mxu0 0.0
        %2959 = vmatprep.subr.mxu0 0.0
        %2960 = vmatpush1.msra.mxu0 %v2939
        %2961 = vmatprep.subr.mxu0 0.0
        %2962 = vmatpush1.msra.mxu0 %v2938
        %2963 = vmatprep.subr.mxu0 0.0
        %2964 = vmatpush1.msra.mxu0 %v2937
        %2965 = vmatprep.subr.mxu0 0.0
        %2966 = vmatpush1.msra.mxu0 %v2936
        %2967 = vmatprep.subr.mxu0 0.0
        %2968 = vmatpush1.msra.mxu0 %v2935
        %2969 = vmatprep.subr.mxu0 0.0
        %2970 = vmatpush1.msra.mxu0 %v2934
        %2971 = vmatprep.subr.mxu0 0.0
        %2972 = vmatpush1.msra.mxu0 %v2933
        %2973 = vmatprep.subr.mxu0 0.0
        %2974 = vmatpush1.msra.mxu0 %v2932
        %2975 = vmatprep.subr.mxu0 0.0
        %2976 = vmatpush2.msra.mxu0 0.0
        %2977 = vmatprep.subr.mxu0 0.0
        %2978 = vmatpush2.msra.mxu0 0.0
        %2979 = vmatprep.subr.mxu0 0.0
        %2980 = vmatpush2.msra.mxu0 0.0
        %2981 = vmatprep.subr.mxu0 0.0
        %2982 = vmatpush2.msra.mxu0 0.0
        %2983 = vmatprep.subr.mxu0 0.0
        %2984 = vmatpush2.msra.mxu0 0.0
        %2985 = vmatprep.subr.mxu0 0.0
        %2986 = vmatpush2.msra.mxu0 0.0
        %2987 = vmatprep.subr.mxu0 0.0
        %2988 = vmatpush2.msra.mxu0 0.0
        %2989 = vmatprep.subr.mxu0 0.0
        %2990 = vmatpush2.msra.mxu0 0.0
        %2991 = vmatprep.subr.mxu0 0.0
        %2992 = vmatpush2.msra.mxu0 0.0
        %2993 = vmatprep.subr.mxu0 0.0
        %2994 = vmatpush2.msra.mxu0 0.0
        %2995 = vmatprep.subr.mxu0 0.0
        %2996 = vmatpush2.msra.mxu0 0.0
        %2997 = vmatprep.subr.mxu0 0.0
        %2998 = vmatpush2.msra.mxu0 0.0
        %2999 = vmatprep.subr.mxu0 0.0
        %3000 = vmatpush2.msra.mxu0 0.0
        %3001 = vmatprep.subr.mxu0 0.0
        %3002 = vmatpush2.msra.mxu0 0.0
        %3003 = vmatprep.subr.mxu0 0.0
        %3004 = vmatpush2.msra.mxu0 0.0
        %3005 = vmatprep.subr.mxu0 0.0
        %3006 = vmatpush2.msra.mxu0 0.0
        %3007 = vmatprep.mubr.f32.mxu0 0.0
        %3008 = vmatmul.mubr.f32.gmra.mxu0 %v2941
        %v3009 = vpop.f32.mrf.mxu0
        %v3010 = vadd.f32 0.0, %v3009
        %v3011 = vpop.f32.mrf.mxu0
        %3012 = vdwg.mxu0
        %vm3013 = vcmask 253952
        %3014 = vst.msk [vmem:[%s431] sm:$0x1] %vm3013, %v3010
        %s3015 = sand.u32 %s297, 1
        %s3016 = scalar_lea.sflag [#allocation8], %s3015
        %s3017 = sand.u32 %s297, 1
        %s3018 = scalar_lea.vmem [#allocation7], %s3017
        // Predicated region
        $region69: #{vision_transformer_forward.2} parent=67 // pred_check
          %p3019 = pneg %p307
        $region70: #{vision_transformer_forward.2} parent=67 // pred_check_branch
          %3021 = sbr.rel (%p3019) target = $region72
        $region71: #{vision_transformer_forward.2} parent=67 // pred_region
          %s3023 = ssub.s32 16, 16
          %3024 = vsyncadd %s3016, %s3023
          %s3025 = smul.addr %s28, 16
          %s3026 = scalar_lea.hbm %s13, %s3025
          %s3028 = sshll.u32 %s3018, 4
          %s3029 = int_to_ptr.vmem [resolvable:$true] %s3028
          %3031 = dma.vmem_to_hbm [thread:$0]  %s3029, 16, %s3026, %s3016
        $region72: #{vision_transformer_forward.2} parent=67 // pred_fallthru
          _
      $region68: #{vision_transformer_forward.2} parent=5 // pred_fallthru
        _
      %p3032 = scmp.le.s32.totalorder 2, %s23
      // Predicated region
      $region73: #{vision_transformer_forward.2} parent=5 // pred_check
        %p3033 = pneg %p3032
      $region74: #{vision_transformer_forward.2} parent=5 // pred_check_branch
        %3035 = sbr.rel (%p3033) target = $region76
      $region75: #{vision_transformer_forward.2} parent=5 // pred_region
        %s3036 = ssub.s32 %s23, 2
        // Predicated region
        $region77: #{vision_transformer_forward.2} parent=75 // pred_check
          %p3037 = pneg %p313
        $region78: #{vision_transformer_forward.2} parent=75 // pred_check_branch
          %3039 = sbr.rel (%p3037) target = $region80
        $region79: #{vision_transformer_forward.2} parent=75 // pred_region
          %s3040 = sand.u32 %s298, 1
          %s3041 = scalar_lea.sflag [#allocation8], %s3040
          %s3042 = sand.u32 %s298, 1
          %s3043 = scalar_lea.vmem [#allocation7], %s3042
          %3044 = dma.done %s3041, 16
        $region80: #{vision_transformer_forward.2} parent=75 // pred_fallthru
          _
      $region76: #{vision_transformer_forward.2} parent=5 // pred_fallthru
        _
    $region6: #{vision_transformer_forward.2} parent=1 // loop_footer
      %s27 = sadd.s32 1, %s23
    $region7: #{vision_transformer_forward.2} parent=1 // loop_footer_branch
      %22 = sbr.rel target = $region3
    $region8: #{vision_transformer_forward.2} parent=1 // loop_exit
      _
    %3045 = vsyncpa [#allocation8], 1
    %s3046 = scalar_lea.sflag [#allocation8], 1
    %3047 = vsyncpa %s3046, 1

</llo_original>
